<compile_context>
chip_gen: v6e
topology: v6e:2x2x1
jax: 0.10.0
libtpu: 0.0.40
codegen_flags: <defaults>
</compile_context>

<pallas_src>
import math
from functools import partial

import jax
import jax.numpy as jnp
from jax.experimental import pallas as pl
from jax.experimental.pallas import tpu as pltpu


class Config:
    in_channels = 4
    img_size = 16
    patch_size = 4
    dim = 32
    heads = 4
    mlp_dim = 64
    depth = 2


# --------------------------------------------------------------------------
# Fused Pallas kernel: patch-embed -> [LN->MHA->res, LN->MLP->res] x depth -> decoder
# --------------------------------------------------------------------------
def _layernorm(v, w, b, eps=1e-5):
    mu = jnp.mean(v, axis=-1, keepdims=True)
    var = jnp.mean((v - mu) ** 2, axis=-1, keepdims=True)
    return (v - mu) * jax.lax.rsqrt(var + eps) * w + b


def dit_fused_kernel(
    patches_ref, pos_ref, pw_ref, pb_ref,
    ln1w_ref, ln1b_ref, wqkv_ref, bqkv_ref, wo_ref, bo_ref,
    ln2w_ref, ln2b_ref, w1_ref, b1_ref, w2_ref, b2_ref,
    decw_ref, decb_ref, o_ref, *, heads, depth,
):
    f32 = jnp.float32
    bf16 = jnp.bfloat16

    def mm(a, w):  # bf16 MXU operands, f32 accumulation
        return jnp.dot(a.astype(bf16), w.astype(bf16), preferred_element_type=f32)

    # --- patch embedding + positional embedding (current batch element) ---
    x = mm(patches_ref[...], pw_ref[...]) + pb_ref[...] + pos_ref[...]  # (N, D) f32

    N, D = x.shape
    hd = D // heads
    scale = 1.0 / math.sqrt(hd)

    for d in range(depth):  # depth is small & static -> fully unrolled
        # ---- attention branch (pre-norm) ----
        h = _layernorm(x, ln1w_ref[d], ln1b_ref[d])
        qkv = mm(h, wqkv_ref[d]) + bqkv_ref[d]                      # (N, 3D) f32

        head_outs = []
        for hh in range(heads):
            q = qkv[:, hh * hd:(hh + 1) * hd].astype(bf16)
            k = qkv[:, D + hh * hd:D + (hh + 1) * hd].astype(bf16)
            v = qkv[:, 2 * D + hh * hd:2 * D + (hh + 1) * hd].astype(bf16)
            # scores = q @ k^T (contract last dims, no explicit transpose)
            s = jax.lax.dot_general(
                q, k, (((1,), (1,)), ((), ())), preferred_element_type=f32
            ) * scale
            s = s - jnp.max(s, axis=-1, keepdims=True)
            p = jnp.exp(s)
            # divide -> EUP approximate reciprocal (free VLIW slot)
            p = p * pl.reciprocal(jnp.sum(p, axis=-1, keepdims=True), approx=True)
            head_outs.append(jnp.dot(p.astype(bf16), v, preferred_element_type=f32))
        attn = jnp.concatenate(head_outs, axis=-1)                  # (N, D)
        attn = mm(attn, wo_ref[d]) + bo_ref[d]
        x = x + attn

        # ---- MLP branch (pre-norm) ----
        h2 = _layernorm(x, ln2w_ref[d], ln2b_ref[d])
        m = mm(h2, w1_ref[d]) + b1_ref[d]
        # tanh-approx GELU goes to the EUP; small numeric drift vs exact erf GELU.
        m = jax.nn.gelu(m, approximate=True)
        m = mm(m, w2_ref[d]) + b2_ref[d]
        x = x + m

    # --- decoder ---
    out = mm(x, decw_ref[...]) + decb_ref[...]                      # (N, p*p*C)
    o_ref[...] = out.astype(o_ref.dtype)


# --------------------------------------------------------------------------
# DiT forward
# --------------------------------------------------------------------------
def dit_forward(x, t, params, cfg):
    del t  # forward() never uses t (matches the PyTorch module)
    B, C, H, W = x.shape
    p = cfg.patch_size
    nph = H // p
    N = nph * nph
    D = cfg.dim
    PPC = p * p * C
    depth = cfg.depth
    bf16 = jnp.bfloat16

    # Patchify: Conv2d(kernel=stride=p) == im2col + matmul.
    # Patch element order is (c, ph, pw), matching Conv2d weight (D, C, p, p) layout.
    patches = (
        x.reshape(B, C, nph, p, nph, p)
        .transpose(0, 2, 4, 1, 3, 5)
        .reshape(B * N, C * p * p)
    )

    blocks = params["blocks"]

    def stack(name, dtype=jnp.float32):
        return jnp.stack([blk[name] for blk in blocks], axis=0).astype(dtype)

    args = (
        patches,                              # (B*N, C*p*p) f32
        params["pos_emb"].reshape(N, D),      # (N, D) f32
        params["patch_w"].astype(bf16),       # (C*p*p, D)
        params["patch_b"],                    # (1, D)
        stack("ln1_w"), stack("ln1_b"),
        stack("wqkv", bf16), stack("bqkv"),
        stack("wo", bf16), stack("bo"),
        stack("ln2_w"), stack("ln2_b"),
        stack("w1", bf16), stack("b1"),
        stack("w2", bf16), stack("b2"),
        params["dec_w"].astype(bf16),         # (D, p*p*C)
        params["dec_b"],                      # (1, p*p*C)
    )

    def _const_spec(a):
        nd = a.ndim
        return pl.BlockSpec(a.shape, lambda b, _nd=nd: (0,) * _nd)

    in_specs = [pl.BlockSpec((N, C * p * p), lambda b: (b, 0))] + [
        _const_spec(a) for a in args[1:]
    ]

    kernel = partial(dit_fused_kernel, heads=cfg.heads, depth=depth)
    out2d = pl.pallas_call(
        kernel,
        out_shape=jax.ShapeDtypeStruct((B * N, PPC), jnp.float32),
        grid=(B,),
        in_specs=in_specs,
        out_specs=pl.BlockSpec((N, PPC), lambda b: (b, 0)),
        compiler_params=pltpu.CompilerParams(dimension_semantics=("parallel",)),
    )(*args)

    # decoder(x).transpose(1, 2).contiguous().view(B, C, H, W)
    # (real transpose of the small output, done once in XLA outside the kernel)
    out = out2d.reshape(B, N, PPC).transpose(0, 2, 1).reshape(B, C, H, W)
    return out


# --------------------------------------------------------------------------
# Deterministic parameter init (shapes from the module's __init__)
# --------------------------------------------------------------------------
def init_params(key, cfg):
    C, p, D = cfg.in_channels, cfg.patch_size, cfg.dim
    mlp, depth = cfg.mlp_dim, cfg.depth
    N = (cfg.img_size // p) ** 2

    keys = jax.random.split(key, 6)

    def nrm(k, shape, scale=0.02):
        return jax.random.normal(k, shape, jnp.float32) * scale

    params = {
        "patch_w": nrm(keys[0], (C * p * p, D)),  # Conv2d weight, flattened (c,ph,pw)
        "patch_b": nrm(keys[1], (1, D)),
        # TODO(synk): original pos_embedding is (1, img_size // patch_size, dim),
        # which cannot broadcast against the (B, (img//p)^2, dim) patch sequence;
        # using the number of patches instead so the forward pass is well-defined.
        "pos_emb": nrm(keys[2], (1, N, D), 1.0),
        "dec_w": nrm(keys[3], (D, p * p * C)),
        "dec_b": nrm(keys[4], (1, p * p * C)),
        "blocks": [],
    }
    bkeys = jax.random.split(keys[5], depth)
    for d in range(depth):
        ks = jax.random.split(bkeys[d], 8)
        params["blocks"].append(
            {
                "ln1_w": jnp.ones((1, D), jnp.float32),
                "ln1_b": jnp.zeros((1, D), jnp.float32),
                "wqkv": nrm(ks[0], (D, 3 * D)),
                "bqkv": nrm(ks[1], (1, 3 * D)),
                "wo": nrm(ks[2], (D, D)),
                "bo": nrm(ks[3], (1, D)),
                "ln2_w": jnp.ones((1, D), jnp.float32),
                "ln2_b": jnp.zeros((1, D), jnp.float32),
                "w1": nrm(ks[4], (D, mlp)),
                "b1": nrm(ks[5], (1, mlp)),
                "w2": nrm(ks[6], (mlp, D)),
                "b2": nrm(ks[7], (1, D)),
            }
        )
    return params


if __name__ == "__main__":
    cfg = Config()
    key = jax.random.PRNGKey(0)
    kx, kp = jax.random.split(key)

    batch = 2
    x = jax.random.normal(
        kx, (batch, cfg.in_channels, cfg.img_size, cfg.img_size), jnp.float32
    )
    t = jnp.zeros((batch,), jnp.int32)  # unused by forward(), same as PyTorch
    params = init_params(kp, cfg)

    fwd = jax.jit(partial(dit_forward, cfg=cfg))
    out = fwd(x, t, params)
    jax.block_until_ready(out)
    assert out.shape == (batch, cfg.in_channels, cfg.img_size, cfg.img_size)
    assert out.dtype == jnp.float32
    print("KERNEL_OK")
</pallas_src>

<mosaic_0001>
module attributes {stable_mosaic.version = 11 : i64} {
  func.func @dit_fused_kernel(%arg0: i32, %arg1: memref<16x64xf32, #tpu.memory_space<vmem>>, %arg2: memref<16x32xf32, #tpu.memory_space<vmem>>, %arg3: memref<64x32xbf16, #tpu.memory_space<vmem>>, %arg4: memref<1x32xf32, #tpu.memory_space<vmem>>, %arg5: memref<2x1x32xf32, #tpu.memory_space<vmem>>, %arg6: memref<2x1x32xf32, #tpu.memory_space<vmem>>, %arg7: memref<2x32x96xbf16, #tpu.memory_space<vmem>>, %arg8: memref<2x1x96xf32, #tpu.memory_space<vmem>>, %arg9: memref<2x32x32xbf16, #tpu.memory_space<vmem>>, %arg10: memref<2x1x32xf32, #tpu.memory_space<vmem>>, %arg11: memref<2x1x32xf32, #tpu.memory_space<vmem>>, %arg12: memref<2x1x32xf32, #tpu.memory_space<vmem>>, %arg13: memref<2x32x64xbf16, #tpu.memory_space<vmem>>, %arg14: memref<2x1x64xf32, #tpu.memory_space<vmem>>, %arg15: memref<2x64x32xbf16, #tpu.memory_space<vmem>>, %arg16: memref<2x1x32xf32, #tpu.memory_space<vmem>>, %arg17: memref<32x64xbf16, #tpu.memory_space<vmem>>, %arg18: memref<1x64xf32, #tpu.memory_space<vmem>>, %arg19: memref<16x64xf32, #tpu.memory_space<vmem>>) attributes {dimension_semantics = [#tpu.dimension_semantics<parallel>], iteration_bounds = array<i64: 2>, scalar_prefetch = 0 : i64, scratch_operands = 0 : i64, tpu.core_type = #tpu.core_type<tc>, window_params = [{transform_indices = @transform_0, window_bounds = array<i64: 16, 64>}, {pipeline_mode = #tpu.pipeline_mode<synchronous>, transform_indices = @transform_1, window_bounds = array<i64: 16, 32>}, {pipeline_mode = #tpu.pipeline_mode<synchronous>, transform_indices = @transform_2, window_bounds = array<i64: 64, 32>}, {pipeline_mode = #tpu.pipeline_mode<synchronous>, transform_indices = @transform_3, window_bounds = array<i64: 1, 32>}, {pipeline_mode = #tpu.pipeline_mode<synchronous>, transform_indices = @transform_4, window_bounds = array<i64: 2, 1, 32>}, {pipeline_mode = #tpu.pipeline_mode<synchronous>, transform_indices = @transform_5, window_bounds = array<i64: 2, 1, 32>}, {pipeline_mode = #tpu.pipeline_mode<synchronous>, transform_indices = @transform_6, window_bounds = array<i64: 2, 32, 96>}, {pipeline_mode = #tpu.pipeline_mode<synchronous>, transform_indices = @transform_7, window_bounds = array<i64: 2, 1, 96>}, {pipeline_mode = #tpu.pipeline_mode<synchronous>, transform_indices = @transform_8, window_bounds = array<i64: 2, 32, 32>}, {pipeline_mode = #tpu.pipeline_mode<synchronous>, transform_indices = @transform_9, window_bounds = array<i64: 2, 1, 32>}, {pipeline_mode = #tpu.pipeline_mode<synchronous>, transform_indices = @transform_10, window_bounds = array<i64: 2, 1, 32>}, {pipeline_mode = #tpu.pipeline_mode<synchronous>, transform_indices = @transform_11, window_bounds = array<i64: 2, 1, 32>}, {pipeline_mode = #tpu.pipeline_mode<synchronous>, transform_indices = @transform_12, window_bounds = array<i64: 2, 32, 64>}, {pipeline_mode = #tpu.pipeline_mode<synchronous>, transform_indices = @transform_13, window_bounds = array<i64: 2, 1, 64>}, {pipeline_mode = #tpu.pipeline_mode<synchronous>, transform_indices = @transform_14, window_bounds = array<i64: 2, 64, 32>}, {pipeline_mode = #tpu.pipeline_mode<synchronous>, transform_indices = @transform_15, window_bounds = array<i64: 2, 1, 32>}, {pipeline_mode = #tpu.pipeline_mode<synchronous>, transform_indices = @transform_16, window_bounds = array<i64: 32, 64>}, {pipeline_mode = #tpu.pipeline_mode<synchronous>, transform_indices = @transform_17, window_bounds = array<i64: 1, 64>}, {transform_indices = @transform_18, window_bounds = array<i64: 16, 64>}]} {
    %c0 = arith.constant 0 : index
    %c0_0 = arith.constant 0 : index
    %0 = vector.load %arg1[%c0, %c0_0] : memref<16x64xf32, #tpu.memory_space<vmem>>, vector<16x64xf32>
    %c0_1 = arith.constant 0 : index
    %c0_2 = arith.constant 0 : index
    %1 = vector.load %arg3[%c0_1, %c0_2] : memref<64x32xbf16, #tpu.memory_space<vmem>>, vector<64x32xbf16>
    %2 = arith.truncf %0 : vector<16x64xf32> to vector<16x64xbf16>
    %cst = arith.constant dense<0.000000e+00> : vector<16x32xf32>
    %3 = tpu.matmul %2, %1, %cst {dimension_numbers = #tpu.dot_dimension_numbers<[1], [0], [0], [1], [0, 0, 1, 1], [], []>} : vector<16x64xbf16>, vector<64x32xbf16>, vector<16x32xf32> -> vector<16x32xf32>
    %c0_3 = arith.constant 0 : index
    %c0_4 = arith.constant 0 : index
    %4 = vector.load %arg4[%c0_3, %c0_4] : memref<1x32xf32, #tpu.memory_space<vmem>>, vector<1x32xf32>
    %5 = vector.broadcast %4 : vector<1x32xf32> to vector<16x32xf32>
    %6 = arith.addf %3, %5 : vector<16x32xf32>
    %c0_5 = arith.constant 0 : index
    %c0_6 = arith.constant 0 : index
    %7 = vector.load %arg2[%c0_5, %c0_6] : memref<16x32xf32, #tpu.memory_space<vmem>>, vector<16x32xf32>
    %8 = arith.addf %6, %7 : vector<16x32xf32>
    %c0_7 = arith.constant 0 : index
    %c0_8 = arith.constant 0 : index
    %c0_9 = arith.constant 0 : index
    %9 = vector.load %arg5[%c0_7, %c0_8, %c0_9] : memref<2x1x32xf32, #tpu.memory_space<vmem>>, vector<1x1x32xf32>
    %10 = vector.shape_cast %9 : vector<1x1x32xf32> to vector<1x32xf32>
    %c0_10 = arith.constant 0 : index
    %c0_11 = arith.constant 0 : index
    %c0_12 = arith.constant 0 : index
    %11 = vector.load %arg6[%c0_10, %c0_11, %c0_12] : memref<2x1x32xf32, #tpu.memory_space<vmem>>, vector<1x1x32xf32>
    %12 = vector.shape_cast %11 : vector<1x1x32xf32> to vector<1x32xf32>
    %cst_13 = arith.constant dense<0.000000e+00> : vector<16xf32>
    %13 = vector.multi_reduction <add>, %8, %cst_13 [1] : vector<16x32xf32> to vector<16xf32>
    %14 = vector.shape_cast %13 : vector<16xf32> to vector<16x1xf32>
    %cst_14 = arith.constant 3.200000e+01 : f32
    %15 = vector.broadcast %cst_14 : f32 to vector<16x1xf32>
    %16 = arith.divf %14, %15 : vector<16x1xf32>
    %17 = vector.broadcast %16 : vector<16x1xf32> to vector<16x32xf32>
    %18 = arith.subf %8, %17 : vector<16x32xf32>
    %19 = arith.mulf %18, %18 : vector<16x32xf32>
    %cst_15 = arith.constant dense<0.000000e+00> : vector<16xf32>
    %20 = vector.multi_reduction <add>, %19, %cst_15 [1] : vector<16x32xf32> to vector<16xf32>
    %21 = vector.shape_cast %20 : vector<16xf32> to vector<16x1xf32>
    %cst_16 = arith.constant 3.200000e+01 : f32
    %22 = vector.broadcast %cst_16 : f32 to vector<16x1xf32>
    %23 = arith.divf %21, %22 : vector<16x1xf32>
    %24 = vector.broadcast %16 : vector<16x1xf32> to vector<16x32xf32>
    %25 = arith.subf %8, %24 : vector<16x32xf32>
    %cst_17 = arith.constant 9.99999974E-6 : f32
    %26 = vector.broadcast %cst_17 : f32 to vector<16x1xf32>
    %27 = arith.addf %23, %26 : vector<16x1xf32>
    %28 = math.rsqrt %27 : vector<16x1xf32>
    %29 = vector.broadcast %28 : vector<16x1xf32> to vector<16x32xf32>
    %30 = arith.mulf %25, %29 : vector<16x32xf32>
    %31 = vector.broadcast %10 : vector<1x32xf32> to vector<16x32xf32>
    %32 = arith.mulf %30, %31 : vector<16x32xf32>
    %33 = vector.broadcast %12 : vector<1x32xf32> to vector<16x32xf32>
    %34 = arith.addf %32, %33 : vector<16x32xf32>
    %c0_18 = arith.constant 0 : index
    %c0_19 = arith.constant 0 : index
    %c0_20 = arith.constant 0 : index
    %35 = vector.load %arg7[%c0_18, %c0_19, %c0_20] : memref<2x32x96xbf16, #tpu.memory_space<vmem>>, vector<1x32x96xbf16>
    %36 = vector.shape_cast %35 : vector<1x32x96xbf16> to vector<32x96xbf16>
    %37 = arith.truncf %34 : vector<16x32xf32> to vector<16x32xbf16>
    %cst_21 = arith.constant dense<0.000000e+00> : vector<16x96xf32>
    %38 = tpu.matmul %37, %36, %cst_21 {dimension_numbers = #tpu.dot_dimension_numbers<[1], [0], [0], [1], [0, 0, 1, 1], [], []>} : vector<16x32xbf16>, vector<32x96xbf16>, vector<16x96xf32> -> vector<16x96xf32>
    %c0_22 = arith.constant 0 : index
    %c0_23 = arith.constant 0 : index
    %c0_24 = arith.constant 0 : index
    %39 = vector.load %arg8[%c0_22, %c0_23, %c0_24] : memref<2x1x96xf32, #tpu.memory_space<vmem>>, vector<1x1x96xf32>
    %40 = vector.shape_cast %39 : vector<1x1x96xf32> to vector<1x96xf32>
    %41 = vector.broadcast %40 : vector<1x96xf32> to vector<16x96xf32>
    %42 = arith.addf %38, %41 : vector<16x96xf32>
    %43 = vector.extract_strided_slice %42 {offsets = [0, 0], sizes = [16, 8], strides = [1, 1]} : vector<16x96xf32> to vector<16x8xf32>
    %44 = arith.truncf %43 : vector<16x8xf32> to vector<16x8xbf16>
    %45 = vector.extract_strided_slice %42 {offsets = [0, 32], sizes = [16, 8], strides = [1, 1]} : vector<16x96xf32> to vector<16x8xf32>
    %46 = arith.truncf %45 : vector<16x8xf32> to vector<16x8xbf16>
    %47 = vector.extract_strided_slice %42 {offsets = [0, 64], sizes = [16, 8], strides = [1, 1]} : vector<16x96xf32> to vector<16x8xf32>
    %48 = arith.truncf %47 : vector<16x8xf32> to vector<16x8xbf16>
    %cst_25 = arith.constant dense<0.000000e+00> : vector<16x16xf32>
    %49 = tpu.matmul %44, %46, %cst_25 {dimension_numbers = #tpu.dot_dimension_numbers<[1], [1], [0], [0], [0, 0, 1, 0], [], []>} : vector<16x8xbf16>, vector<16x8xbf16>, vector<16x16xf32> -> vector<16x16xf32>
    %cst_26 = arith.constant 0.353553385 : f32
    %50 = vector.broadcast %cst_26 : f32 to vector<16x16xf32>
    %51 = arith.mulf %49, %50 : vector<16x16xf32>
    %cst_27 = arith.constant dense<0xFF800000> : vector<16xf32>
    %52 = vector.multi_reduction <maximumf>, %51, %cst_27 [1] : vector<16x16xf32> to vector<16xf32>
    %53 = vector.shape_cast %52 : vector<16xf32> to vector<16x1xf32>
    %54 = vector.broadcast %53 : vector<16x1xf32> to vector<16x16xf32>
    %55 = arith.subf %51, %54 : vector<16x16xf32>
    %56 = math.exp %55 : vector<16x16xf32>
    %cst_28 = arith.constant dense<0.000000e+00> : vector<16xf32>
    %57 = vector.multi_reduction <add>, %56, %cst_28 [1] : vector<16x16xf32> to vector<16xf32>
    %58 = vector.shape_cast %57 : vector<16xf32> to vector<16x1xf32>
    %59 = tpu.reciprocal %58 {approx = true} : vector<16x1xf32> -> vector<16x1xf32>
    %60 = vector.broadcast %59 : vector<16x1xf32> to vector<16x16xf32>
    %61 = arith.mulf %56, %60 : vector<16x16xf32>
    %62 = arith.truncf %61 : vector<16x16xf32> to vector<16x16xbf16>
    %cst_29 = arith.constant dense<0.000000e+00> : vector<16x8xf32>
    %63 = tpu.matmul %62, %48, %cst_29 {dimension_numbers = #tpu.dot_dimension_numbers<[1], [0], [0], [1], [0, 0, 1, 1], [], []>} : vector<16x16xbf16>, vector<16x8xbf16>, vector<16x8xf32> -> vector<16x8xf32>
    %64 = vector.extract_strided_slice %42 {offsets = [0, 8], sizes = [16, 8], strides = [1, 1]} : vector<16x96xf32> to vector<16x8xf32>
    %65 = arith.truncf %64 : vector<16x8xf32> to vector<16x8xbf16>
    %66 = vector.extract_strided_slice %42 {offsets = [0, 40], sizes = [16, 8], strides = [1, 1]} : vector<16x96xf32> to vector<16x8xf32>
    %67 = arith.truncf %66 : vector<16x8xf32> to vector<16x8xbf16>
    %68 = vector.extract_strided_slice %42 {offsets = [0, 72], sizes = [16, 8], strides = [1, 1]} : vector<16x96xf32> to vector<16x8xf32>
    %69 = arith.truncf %68 : vector<16x8xf32> to vector<16x8xbf16>
    %cst_30 = arith.constant dense<0.000000e+00> : vector<16x16xf32>
    %70 = tpu.matmul %65, %67, %cst_30 {dimension_numbers = #tpu.dot_dimension_numbers<[1], [1], [0], [0], [0, 0, 1, 0], [], []>} : vector<16x8xbf16>, vector<16x8xbf16>, vector<16x16xf32> -> vector<16x16xf32>
    %cst_31 = arith.constant 0.353553385 : f32
    %71 = vector.broadcast %cst_31 : f32 to vector<16x16xf32>
    %72 = arith.mulf %70, %71 : vector<16x16xf32>
    %cst_32 = arith.constant dense<0xFF800000> : vector<16xf32>
    %73 = vector.multi_reduction <maximumf>, %72, %cst_32 [1] : vector<16x16xf32> to vector<16xf32>
    %74 = vector.shape_cast %73 : vector<16xf32> to vector<16x1xf32>
    %75 = vector.broadcast %74 : vector<16x1xf32> to vector<16x16xf32>
    %76 = arith.subf %72, %75 : vector<16x16xf32>
    %77 = math.exp %76 : vector<16x16xf32>
    %cst_33 = arith.constant dense<0.000000e+00> : vector<16xf32>
    %78 = vector.multi_reduction <add>, %77, %cst_33 [1] : vector<16x16xf32> to vector<16xf32>
    %79 = vector.shape_cast %78 : vector<16xf32> to vector<16x1xf32>
    %80 = tpu.reciprocal %79 {approx = true} : vector<16x1xf32> -> vector<16x1xf32>
    %81 = vector.broadcast %80 : vector<16x1xf32> to vector<16x16xf32>
    %82 = arith.mulf %77, %81 : vector<16x16xf32>
    %83 = arith.truncf %82 : vector<16x16xf32> to vector<16x16xbf16>
    %cst_34 = arith.constant dense<0.000000e+00> : vector<16x8xf32>
    %84 = tpu.matmul %83, %69, %cst_34 {dimension_numbers = #tpu.dot_dimension_numbers<[1], [0], [0], [1], [0, 0, 1, 1], [], []>} : vector<16x16xbf16>, vector<16x8xbf16>, vector<16x8xf32> -> vector<16x8xf32>
    %85 = vector.extract_strided_slice %42 {offsets = [0, 16], sizes = [16, 8], strides = [1, 1]} : vector<16x96xf32> to vector<16x8xf32>
    %86 = arith.truncf %85 : vector<16x8xf32> to vector<16x8xbf16>
    %87 = vector.extract_strided_slice %42 {offsets = [0, 48], sizes = [16, 8], strides = [1, 1]} : vector<16x96xf32> to vector<16x8xf32>
    %88 = arith.truncf %87 : vector<16x8xf32> to vector<16x8xbf16>
    %89 = vector.extract_strided_slice %42 {offsets = [0, 80], sizes = [16, 8], strides = [1, 1]} : vector<16x96xf32> to vector<16x8xf32>
    %90 = arith.truncf %89 : vector<16x8xf32> to vector<16x8xbf16>
    %cst_35 = arith.constant dense<0.000000e+00> : vector<16x16xf32>
    %91 = tpu.matmul %86, %88, %cst_35 {dimension_numbers = #tpu.dot_dimension_numbers<[1], [1], [0], [0], [0, 0, 1, 0], [], []>} : vector<16x8xbf16>, vector<16x8xbf16>, vector<16x16xf32> -> vector<16x16xf32>
    %cst_36 = arith.constant 0.353553385 : f32
    %92 = vector.broadcast %cst_36 : f32 to vector<16x16xf32>
    %93 = arith.mulf %91, %92 : vector<16x16xf32>
    %cst_37 = arith.constant dense<0xFF800000> : vector<16xf32>
    %94 = vector.multi_reduction <maximumf>, %93, %cst_37 [1] : vector<16x16xf32> to vector<16xf32>
    %95 = vector.shape_cast %94 : vector<16xf32> to vector<16x1xf32>
    %96 = vector.broadcast %95 : vector<16x1xf32> to vector<16x16xf32>
    %97 = arith.subf %93, %96 : vector<16x16xf32>
    %98 = math.exp %97 : vector<16x16xf32>
    %cst_38 = arith.constant dense<0.000000e+00> : vector<16xf32>
    %99 = vector.multi_reduction <add>, %98, %cst_38 [1] : vector<16x16xf32> to vector<16xf32>
    %100 = vector.shape_cast %99 : vector<16xf32> to vector<16x1xf32>
    %101 = tpu.reciprocal %100 {approx = true} : vector<16x1xf32> -> vector<16x1xf32>
    %102 = vector.broadcast %101 : vector<16x1xf32> to vector<16x16xf32>
    %103 = arith.mulf %98, %102 : vector<16x16xf32>
    %104 = arith.truncf %103 : vector<16x16xf32> to vector<16x16xbf16>
    %cst_39 = arith.constant dense<0.000000e+00> : vector<16x8xf32>
    %105 = tpu.matmul %104, %90, %cst_39 {dimension_numbers = #tpu.dot_dimension_numbers<[1], [0], [0], [1], [0, 0, 1, 1], [], []>} : vector<16x16xbf16>, vector<16x8xbf16>, vector<16x8xf32> -> vector<16x8xf32>
    %106 = vector.extract_strided_slice %42 {offsets = [0, 24], sizes = [16, 8], strides = [1, 1]} : vector<16x96xf32> to vector<16x8xf32>
    %107 = arith.truncf %106 : vector<16x8xf32> to vector<16x8xbf16>
    %108 = vector.extract_strided_slice %42 {offsets = [0, 56], sizes = [16, 8], strides = [1, 1]} : vector<16x96xf32> to vector<16x8xf32>
    %109 = arith.truncf %108 : vector<16x8xf32> to vector<16x8xbf16>
    %110 = vector.extract_strided_slice %42 {offsets = [0, 88], sizes = [16, 8], strides = [1, 1]} : vector<16x96xf32> to vector<16x8xf32>
    %111 = arith.truncf %110 : vector<16x8xf32> to vector<16x8xbf16>
    %cst_40 = arith.constant dense<0.000000e+00> : vector<16x16xf32>
    %112 = tpu.matmul %107, %109, %cst_40 {dimension_numbers = #tpu.dot_dimension_numbers<[1], [1], [0], [0], [0, 0, 1, 0], [], []>} : vector<16x8xbf16>, vector<16x8xbf16>, vector<16x16xf32> -> vector<16x16xf32>
    %cst_41 = arith.constant 0.353553385 : f32
    %113 = vector.broadcast %cst_41 : f32 to vector<16x16xf32>
    %114 = arith.mulf %112, %113 : vector<16x16xf32>
    %cst_42 = arith.constant dense<0xFF800000> : vector<16xf32>
    %115 = vector.multi_reduction <maximumf>, %114, %cst_42 [1] : vector<16x16xf32> to vector<16xf32>
    %116 = vector.shape_cast %115 : vector<16xf32> to vector<16x1xf32>
    %117 = vector.broadcast %116 : vector<16x1xf32> to vector<16x16xf32>
    %118 = arith.subf %114, %117 : vector<16x16xf32>
    %119 = math.exp %118 : vector<16x16xf32>
    %cst_43 = arith.constant dense<0.000000e+00> : vector<16xf32>
    %120 = vector.multi_reduction <add>, %119, %cst_43 [1] : vector<16x16xf32> to vector<16xf32>
    %121 = vector.shape_cast %120 : vector<16xf32> to vector<16x1xf32>
    %122 = tpu.reciprocal %121 {approx = true} : vector<16x1xf32> -> vector<16x1xf32>
    %123 = vector.broadcast %122 : vector<16x1xf32> to vector<16x16xf32>
    %124 = arith.mulf %119, %123 : vector<16x16xf32>
    %125 = arith.truncf %124 : vector<16x16xf32> to vector<16x16xbf16>
    %cst_44 = arith.constant dense<0.000000e+00> : vector<16x8xf32>
    %126 = tpu.matmul %125, %111, %cst_44 {dimension_numbers = #tpu.dot_dimension_numbers<[1], [0], [0], [1], [0, 0, 1, 1], [], []>} : vector<16x16xbf16>, vector<16x8xbf16>, vector<16x8xf32> -> vector<16x8xf32>
    %127 = tpu.concatenate %63, %84, %105, %126 in 1 : vector<16x8xf32>, vector<16x8xf32>, vector<16x8xf32>, vector<16x8xf32> -> vector<16x32xf32>
    %c0_45 = arith.constant 0 : index
    %c0_46 = arith.constant 0 : index
    %c0_47 = arith.constant 0 : index
    %128 = vector.load %arg9[%c0_45, %c0_46, %c0_47] : memref<2x32x32xbf16, #tpu.memory_space<vmem>>, vector<1x32x32xbf16>
    %129 = vector.shape_cast %128 : vector<1x32x32xbf16> to vector<32x32xbf16>
    %130 = arith.truncf %127 : vector<16x32xf32> to vector<16x32xbf16>
    %cst_48 = arith.constant dense<0.000000e+00> : vector<16x32xf32>
    %131 = tpu.matmul %130, %129, %cst_48 {dimension_numbers = #tpu.dot_dimension_numbers<[1], [0], [0], [1], [0, 0, 1, 1], [], []>} : vector<16x32xbf16>, vector<32x32xbf16>, vector<16x32xf32> -> vector<16x32xf32>
    %c0_49 = arith.constant 0 : index
    %c0_50 = arith.constant 0 : index
    %c0_51 = arith.constant 0 : index
    %132 = vector.load %arg10[%c0_49, %c0_50, %c0_51] : memref<2x1x32xf32, #tpu.memory_space<vmem>>, vector<1x1x32xf32>
    %133 = vector.shape_cast %132 : vector<1x1x32xf32> to vector<1x32xf32>
    %134 = vector.broadcast %133 : vector<1x32xf32> to vector<16x32xf32>
    %135 = arith.addf %131, %134 : vector<16x32xf32>
    %136 = arith.addf %8, %135 : vector<16x32xf32>
    %c0_52 = arith.constant 0 : index
    %c0_53 = arith.constant 0 : index
    %c0_54 = arith.constant 0 : index
    %137 = vector.load %arg11[%c0_52, %c0_53, %c0_54] : memref<2x1x32xf32, #tpu.memory_space<vmem>>, vector<1x1x32xf32>
    %138 = vector.shape_cast %137 : vector<1x1x32xf32> to vector<1x32xf32>
    %c0_55 = arith.constant 0 : index
    %c0_56 = arith.constant 0 : index
    %c0_57 = arith.constant 0 : index
    %139 = vector.load %arg12[%c0_55, %c0_56, %c0_57] : memref<2x1x32xf32, #tpu.memory_space<vmem>>, vector<1x1x32xf32>
    %140 = vector.shape_cast %139 : vector<1x1x32xf32> to vector<1x32xf32>
    %cst_58 = arith.constant dense<0.000000e+00> : vector<16xf32>
    %141 = vector.multi_reduction <add>, %136, %cst_58 [1] : vector<16x32xf32> to vector<16xf32>
    %142 = vector.shape_cast %141 : vector<16xf32> to vector<16x1xf32>
    %cst_59 = arith.constant 3.200000e+01 : f32
    %143 = vector.broadcast %cst_59 : f32 to vector<16x1xf32>
    %144 = arith.divf %142, %143 : vector<16x1xf32>
    %145 = vector.broadcast %144 : vector<16x1xf32> to vector<16x32xf32>
    %146 = arith.subf %136, %145 : vector<16x32xf32>
    %147 = arith.mulf %146, %146 : vector<16x32xf32>
    %cst_60 = arith.constant dense<0.000000e+00> : vector<16xf32>
    %148 = vector.multi_reduction <add>, %147, %cst_60 [1] : vector<16x32xf32> to vector<16xf32>
    %149 = vector.shape_cast %148 : vector<16xf32> to vector<16x1xf32>
    %cst_61 = arith.constant 3.200000e+01 : f32
    %150 = vector.broadcast %cst_61 : f32 to vector<16x1xf32>
    %151 = arith.divf %149, %150 : vector<16x1xf32>
    %152 = vector.broadcast %144 : vector<16x1xf32> to vector<16x32xf32>
    %153 = arith.subf %136, %152 : vector<16x32xf32>
    %cst_62 = arith.constant 9.99999974E-6 : f32
    %154 = vector.broadcast %cst_62 : f32 to vector<16x1xf32>
    %155 = arith.addf %151, %154 : vector<16x1xf32>
    %156 = math.rsqrt %155 : vector<16x1xf32>
    %157 = vector.broadcast %156 : vector<16x1xf32> to vector<16x32xf32>
    %158 = arith.mulf %153, %157 : vector<16x32xf32>
    %159 = vector.broadcast %138 : vector<1x32xf32> to vector<16x32xf32>
    %160 = arith.mulf %158, %159 : vector<16x32xf32>
    %161 = vector.broadcast %140 : vector<1x32xf32> to vector<16x32xf32>
    %162 = arith.addf %160, %161 : vector<16x32xf32>
    %c0_63 = arith.constant 0 : index
    %c0_64 = arith.constant 0 : index
    %c0_65 = arith.constant 0 : index
    %163 = vector.load %arg13[%c0_63, %c0_64, %c0_65] : memref<2x32x64xbf16, #tpu.memory_space<vmem>>, vector<1x32x64xbf16>
    %164 = vector.shape_cast %163 : vector<1x32x64xbf16> to vector<32x64xbf16>
    %165 = arith.truncf %162 : vector<16x32xf32> to vector<16x32xbf16>
    %cst_66 = arith.constant dense<0.000000e+00> : vector<16x64xf32>
    %166 = tpu.matmul %165, %164, %cst_66 {dimension_numbers = #tpu.dot_dimension_numbers<[1], [0], [0], [1], [0, 0, 1, 1], [], []>} : vector<16x32xbf16>, vector<32x64xbf16>, vector<16x64xf32> -> vector<16x64xf32>
    %c0_67 = arith.constant 0 : index
    %c0_68 = arith.constant 0 : index
    %c0_69 = arith.constant 0 : index
    %167 = vector.load %arg14[%c0_67, %c0_68, %c0_69] : memref<2x1x64xf32, #tpu.memory_space<vmem>>, vector<1x1x64xf32>
    %168 = vector.shape_cast %167 : vector<1x1x64xf32> to vector<1x64xf32>
    %169 = vector.broadcast %168 : vector<1x64xf32> to vector<16x64xf32>
    %170 = arith.addf %166, %169 : vector<16x64xf32>
    %171 = arith.mulf %170, %170 : vector<16x64xf32>
    %172 = arith.mulf %170, %171 : vector<16x64xf32>
    %cst_70 = arith.constant 4.471500e-02 : f32
    %173 = vector.broadcast %cst_70 : f32 to vector<16x64xf32>
    %174 = arith.mulf %173, %172 : vector<16x64xf32>
    %175 = arith.addf %170, %174 : vector<16x64xf32>
    %cst_71 = arith.constant 0.797884583 : f32
    %176 = vector.broadcast %cst_71 : f32 to vector<16x64xf32>
    %177 = arith.mulf %176, %175 : vector<16x64xf32>
    %178 = math.tanh %177 : vector<16x64xf32>
    %cst_72 = arith.constant 1.000000e+00 : f32
    %179 = vector.broadcast %cst_72 : f32 to vector<16x64xf32>
    %180 = arith.addf %179, %178 : vector<16x64xf32>
    %cst_73 = arith.constant 5.000000e-01 : f32
    %181 = vector.broadcast %cst_73 : f32 to vector<16x64xf32>
    %182 = arith.mulf %181, %180 : vector<16x64xf32>
    %183 = arith.mulf %170, %182 : vector<16x64xf32>
    %c0_74 = arith.constant 0 : index
    %c0_75 = arith.constant 0 : index
    %c0_76 = arith.constant 0 : index
    %184 = vector.load %arg15[%c0_74, %c0_75, %c0_76] : memref<2x64x32xbf16, #tpu.memory_space<vmem>>, vector<1x64x32xbf16>
    %185 = vector.shape_cast %184 : vector<1x64x32xbf16> to vector<64x32xbf16>
    %186 = arith.truncf %183 : vector<16x64xf32> to vector<16x64xbf16>
    %cst_77 = arith.constant dense<0.000000e+00> : vector<16x32xf32>
    %187 = tpu.matmul %186, %185, %cst_77 {dimension_numbers = #tpu.dot_dimension_numbers<[1], [0], [0], [1], [0, 0, 1, 1], [], []>} : vector<16x64xbf16>, vector<64x32xbf16>, vector<16x32xf32> -> vector<16x32xf32>
    %c0_78 = arith.constant 0 : index
    %c0_79 = arith.constant 0 : index
    %c0_80 = arith.constant 0 : index
    %188 = vector.load %arg16[%c0_78, %c0_79, %c0_80] : memref<2x1x32xf32, #tpu.memory_space<vmem>>, vector<1x1x32xf32>
    %189 = vector.shape_cast %188 : vector<1x1x32xf32> to vector<1x32xf32>
    %190 = vector.broadcast %189 : vector<1x32xf32> to vector<16x32xf32>
    %191 = arith.addf %187, %190 : vector<16x32xf32>
    %192 = arith.addf %136, %191 : vector<16x32xf32>
    %c1 = arith.constant 1 : index
    %c0_81 = arith.constant 0 : index
    %c0_82 = arith.constant 0 : index
    %193 = vector.load %arg5[%c1, %c0_81, %c0_82] : memref<2x1x32xf32, #tpu.memory_space<vmem>>, vector<1x1x32xf32>
    %194 = vector.shape_cast %193 : vector<1x1x32xf32> to vector<1x32xf32>
    %c1_83 = arith.constant 1 : index
    %c0_84 = arith.constant 0 : index
    %c0_85 = arith.constant 0 : index
    %195 = vector.load %arg6[%c1_83, %c0_84, %c0_85] : memref<2x1x32xf32, #tpu.memory_space<vmem>>, vector<1x1x32xf32>
    %196 = vector.shape_cast %195 : vector<1x1x32xf32> to vector<1x32xf32>
    %cst_86 = arith.constant dense<0.000000e+00> : vector<16xf32>
    %197 = vector.multi_reduction <add>, %192, %cst_86 [1] : vector<16x32xf32> to vector<16xf32>
    %198 = vector.shape_cast %197 : vector<16xf32> to vector<16x1xf32>
    %cst_87 = arith.constant 3.200000e+01 : f32
    %199 = vector.broadcast %cst_87 : f32 to vector<16x1xf32>
    %200 = arith.divf %198, %199 : vector<16x1xf32>
    %201 = vector.broadcast %200 : vector<16x1xf32> to vector<16x32xf32>
    %202 = arith.subf %192, %201 : vector<16x32xf32>
    %203 = arith.mulf %202, %202 : vector<16x32xf32>
    %cst_88 = arith.constant dense<0.000000e+00> : vector<16xf32>
    %204 = vector.multi_reduction <add>, %203, %cst_88 [1] : vector<16x32xf32> to vector<16xf32>
    %205 = vector.shape_cast %204 : vector<16xf32> to vector<16x1xf32>
    %cst_89 = arith.constant 3.200000e+01 : f32
    %206 = vector.broadcast %cst_89 : f32 to vector<16x1xf32>
    %207 = arith.divf %205, %206 : vector<16x1xf32>
    %208 = vector.broadcast %200 : vector<16x1xf32> to vector<16x32xf32>
    %209 = arith.subf %192, %208 : vector<16x32xf32>
    %cst_90 = arith.constant 9.99999974E-6 : f32
    %210 = vector.broadcast %cst_90 : f32 to vector<16x1xf32>
    %211 = arith.addf %207, %210 : vector<16x1xf32>
    %212 = math.rsqrt %211 : vector<16x1xf32>
    %213 = vector.broadcast %212 : vector<16x1xf32> to vector<16x32xf32>
    %214 = arith.mulf %209, %213 : vector<16x32xf32>
    %215 = vector.broadcast %194 : vector<1x32xf32> to vector<16x32xf32>
    %216 = arith.mulf %214, %215 : vector<16x32xf32>
    %217 = vector.broadcast %196 : vector<1x32xf32> to vector<16x32xf32>
    %218 = arith.addf %216, %217 : vector<16x32xf32>
    %c1_91 = arith.constant 1 : index
    %c0_92 = arith.constant 0 : index
    %c0_93 = arith.constant 0 : index
    %219 = vector.load %arg7[%c1_91, %c0_92, %c0_93] : memref<2x32x96xbf16, #tpu.memory_space<vmem>>, vector<1x32x96xbf16>
    %220 = vector.shape_cast %219 : vector<1x32x96xbf16> to vector<32x96xbf16>
    %221 = arith.truncf %218 : vector<16x32xf32> to vector<16x32xbf16>
    %cst_94 = arith.constant dense<0.000000e+00> : vector<16x96xf32>
    %222 = tpu.matmul %221, %220, %cst_94 {dimension_numbers = #tpu.dot_dimension_numbers<[1], [0], [0], [1], [0, 0, 1, 1], [], []>} : vector<16x32xbf16>, vector<32x96xbf16>, vector<16x96xf32> -> vector<16x96xf32>
    %c1_95 = arith.constant 1 : index
    %c0_96 = arith.constant 0 : index
    %c0_97 = arith.constant 0 : index
    %223 = vector.load %arg8[%c1_95, %c0_96, %c0_97] : memref<2x1x96xf32, #tpu.memory_space<vmem>>, vector<1x1x96xf32>
    %224 = vector.shape_cast %223 : vector<1x1x96xf32> to vector<1x96xf32>
    %225 = vector.broadcast %224 : vector<1x96xf32> to vector<16x96xf32>
    %226 = arith.addf %222, %225 : vector<16x96xf32>
    %227 = vector.extract_strided_slice %226 {offsets = [0, 0], sizes = [16, 8], strides = [1, 1]} : vector<16x96xf32> to vector<16x8xf32>
    %228 = arith.truncf %227 : vector<16x8xf32> to vector<16x8xbf16>
    %229 = vector.extract_strided_slice %226 {offsets = [0, 32], sizes = [16, 8], strides = [1, 1]} : vector<16x96xf32> to vector<16x8xf32>
    %230 = arith.truncf %229 : vector<16x8xf32> to vector<16x8xbf16>
    %231 = vector.extract_strided_slice %226 {offsets = [0, 64], sizes = [16, 8], strides = [1, 1]} : vector<16x96xf32> to vector<16x8xf32>
    %232 = arith.truncf %231 : vector<16x8xf32> to vector<16x8xbf16>
    %cst_98 = arith.constant dense<0.000000e+00> : vector<16x16xf32>
    %233 = tpu.matmul %228, %230, %cst_98 {dimension_numbers = #tpu.dot_dimension_numbers<[1], [1], [0], [0], [0, 0, 1, 0], [], []>} : vector<16x8xbf16>, vector<16x8xbf16>, vector<16x16xf32> -> vector<16x16xf32>
    %cst_99 = arith.constant 0.353553385 : f32
    %234 = vector.broadcast %cst_99 : f32 to vector<16x16xf32>
    %235 = arith.mulf %233, %234 : vector<16x16xf32>
    %cst_100 = arith.constant dense<0xFF800000> : vector<16xf32>
    %236 = vector.multi_reduction <maximumf>, %235, %cst_100 [1] : vector<16x16xf32> to vector<16xf32>
    %237 = vector.shape_cast %236 : vector<16xf32> to vector<16x1xf32>
    %238 = vector.broadcast %237 : vector<16x1xf32> to vector<16x16xf32>
    %239 = arith.subf %235, %238 : vector<16x16xf32>
    %240 = math.exp %239 : vector<16x16xf32>
    %cst_101 = arith.constant dense<0.000000e+00> : vector<16xf32>
    %241 = vector.multi_reduction <add>, %240, %cst_101 [1] : vector<16x16xf32> to vector<16xf32>
    %242 = vector.shape_cast %241 : vector<16xf32> to vector<16x1xf32>
    %243 = tpu.reciprocal %242 {approx = true} : vector<16x1xf32> -> vector<16x1xf32>
    %244 = vector.broadcast %243 : vector<16x1xf32> to vector<16x16xf32>
    %245 = arith.mulf %240, %244 : vector<16x16xf32>
    %246 = arith.truncf %245 : vector<16x16xf32> to vector<16x16xbf16>
    %cst_102 = arith.constant dense<0.000000e+00> : vector<16x8xf32>
    %247 = tpu.matmul %246, %232, %cst_102 {dimension_numbers = #tpu.dot_dimension_numbers<[1], [0], [0], [1], [0, 0, 1, 1], [], []>} : vector<16x16xbf16>, vector<16x8xbf16>, vector<16x8xf32> -> vector<16x8xf32>
    %248 = vector.extract_strided_slice %226 {offsets = [0, 8], sizes = [16, 8], strides = [1, 1]} : vector<16x96xf32> to vector<16x8xf32>
    %249 = arith.truncf %248 : vector<16x8xf32> to vector<16x8xbf16>
    %250 = vector.extract_strided_slice %226 {offsets = [0, 40], sizes = [16, 8], strides = [1, 1]} : vector<16x96xf32> to vector<16x8xf32>
    %251 = arith.truncf %250 : vector<16x8xf32> to vector<16x8xbf16>
    %252 = vector.extract_strided_slice %226 {offsets = [0, 72], sizes = [16, 8], strides = [1, 1]} : vector<16x96xf32> to vector<16x8xf32>
    %253 = arith.truncf %252 : vector<16x8xf32> to vector<16x8xbf16>
    %cst_103 = arith.constant dense<0.000000e+00> : vector<16x16xf32>
    %254 = tpu.matmul %249, %251, %cst_103 {dimension_numbers = #tpu.dot_dimension_numbers<[1], [1], [0], [0], [0, 0, 1, 0], [], []>} : vector<16x8xbf16>, vector<16x8xbf16>, vector<16x16xf32> -> vector<16x16xf32>
    %cst_104 = arith.constant 0.353553385 : f32
    %255 = vector.broadcast %cst_104 : f32 to vector<16x16xf32>
    %256 = arith.mulf %254, %255 : vector<16x16xf32>
    %cst_105 = arith.constant dense<0xFF800000> : vector<16xf32>
    %257 = vector.multi_reduction <maximumf>, %256, %cst_105 [1] : vector<16x16xf32> to vector<16xf32>
    %258 = vector.shape_cast %257 : vector<16xf32> to vector<16x1xf32>
    %259 = vector.broadcast %258 : vector<16x1xf32> to vector<16x16xf32>
    %260 = arith.subf %256, %259 : vector<16x16xf32>
    %261 = math.exp %260 : vector<16x16xf32>
    %cst_106 = arith.constant dense<0.000000e+00> : vector<16xf32>
    %262 = vector.multi_reduction <add>, %261, %cst_106 [1] : vector<16x16xf32> to vector<16xf32>
    %263 = vector.shape_cast %262 : vector<16xf32> to vector<16x1xf32>
    %264 = tpu.reciprocal %263 {approx = true} : vector<16x1xf32> -> vector<16x1xf32>
    %265 = vector.broadcast %264 : vector<16x1xf32> to vector<16x16xf32>
    %266 = arith.mulf %261, %265 : vector<16x16xf32>
    %267 = arith.truncf %266 : vector<16x16xf32> to vector<16x16xbf16>
    %cst_107 = arith.constant dense<0.000000e+00> : vector<16x8xf32>
    %268 = tpu.matmul %267, %253, %cst_107 {dimension_numbers = #tpu.dot_dimension_numbers<[1], [0], [0], [1], [0, 0, 1, 1], [], []>} : vector<16x16xbf16>, vector<16x8xbf16>, vector<16x8xf32> -> vector<16x8xf32>
    %269 = vector.extract_strided_slice %226 {offsets = [0, 16], sizes = [16, 8], strides = [1, 1]} : vector<16x96xf32> to vector<16x8xf32>
    %270 = arith.truncf %269 : vector<16x8xf32> to vector<16x8xbf16>
    %271 = vector.extract_strided_slice %226 {offsets = [0, 48], sizes = [16, 8], strides = [1, 1]} : vector<16x96xf32> to vector<16x8xf32>
    %272 = arith.truncf %271 : vector<16x8xf32> to vector<16x8xbf16>
    %273 = vector.extract_strided_slice %226 {offsets = [0, 80], sizes = [16, 8], strides = [1, 1]} : vector<16x96xf32> to vector<16x8xf32>
    %274 = arith.truncf %273 : vector<16x8xf32> to vector<16x8xbf16>
    %cst_108 = arith.constant dense<0.000000e+00> : vector<16x16xf32>
    %275 = tpu.matmul %270, %272, %cst_108 {dimension_numbers = #tpu.dot_dimension_numbers<[1], [1], [0], [0], [0, 0, 1, 0], [], []>} : vector<16x8xbf16>, vector<16x8xbf16>, vector<16x16xf32> -> vector<16x16xf32>
    %cst_109 = arith.constant 0.353553385 : f32
    %276 = vector.broadcast %cst_109 : f32 to vector<16x16xf32>
    %277 = arith.mulf %275, %276 : vector<16x16xf32>
    %cst_110 = arith.constant dense<0xFF800000> : vector<16xf32>
    %278 = vector.multi_reduction <maximumf>, %277, %cst_110 [1] : vector<16x16xf32> to vector<16xf32>
    %279 = vector.shape_cast %278 : vector<16xf32> to vector<16x1xf32>
    %280 = vector.broadcast %279 : vector<16x1xf32> to vector<16x16xf32>
    %281 = arith.subf %277, %280 : vector<16x16xf32>
    %282 = math.exp %281 : vector<16x16xf32>
    %cst_111 = arith.constant dense<0.000000e+00> : vector<16xf32>
    %283 = vector.multi_reduction <add>, %282, %cst_111 [1] : vector<16x16xf32> to vector<16xf32>
    %284 = vector.shape_cast %283 : vector<16xf32> to vector<16x1xf32>
    %285 = tpu.reciprocal %284 {approx = true} : vector<16x1xf32> -> vector<16x1xf32>
    %286 = vector.broadcast %285 : vector<16x1xf32> to vector<16x16xf32>
    %287 = arith.mulf %282, %286 : vector<16x16xf32>
    %288 = arith.truncf %287 : vector<16x16xf32> to vector<16x16xbf16>
    %cst_112 = arith.constant dense<0.000000e+00> : vector<16x8xf32>
    %289 = tpu.matmul %288, %274, %cst_112 {dimension_numbers = #tpu.dot_dimension_numbers<[1], [0], [0], [1], [0, 0, 1, 1], [], []>} : vector<16x16xbf16>, vector<16x8xbf16>, vector<16x8xf32> -> vector<16x8xf32>
    %290 = vector.extract_strided_slice %226 {offsets = [0, 24], sizes = [16, 8], strides = [1, 1]} : vector<16x96xf32> to vector<16x8xf32>
    %291 = arith.truncf %290 : vector<16x8xf32> to vector<16x8xbf16>
    %292 = vector.extract_strided_slice %226 {offsets = [0, 56], sizes = [16, 8], strides = [1, 1]} : vector<16x96xf32> to vector<16x8xf32>
    %293 = arith.truncf %292 : vector<16x8xf32> to vector<16x8xbf16>
    %294 = vector.extract_strided_slice %226 {offsets = [0, 88], sizes = [16, 8], strides = [1, 1]} : vector<16x96xf32> to vector<16x8xf32>
    %295 = arith.truncf %294 : vector<16x8xf32> to vector<16x8xbf16>
    %cst_113 = arith.constant dense<0.000000e+00> : vector<16x16xf32>
    %296 = tpu.matmul %291, %293, %cst_113 {dimension_numbers = #tpu.dot_dimension_numbers<[1], [1], [0], [0], [0, 0, 1, 0], [], []>} : vector<16x8xbf16>, vector<16x8xbf16>, vector<16x16xf32> -> vector<16x16xf32>
    %cst_114 = arith.constant 0.353553385 : f32
    %297 = vector.broadcast %cst_114 : f32 to vector<16x16xf32>
    %298 = arith.mulf %296, %297 : vector<16x16xf32>
    %cst_115 = arith.constant dense<0xFF800000> : vector<16xf32>
    %299 = vector.multi_reduction <maximumf>, %298, %cst_115 [1] : vector<16x16xf32> to vector<16xf32>
    %300 = vector.shape_cast %299 : vector<16xf32> to vector<16x1xf32>
    %301 = vector.broadcast %300 : vector<16x1xf32> to vector<16x16xf32>
    %302 = arith.subf %298, %301 : vector<16x16xf32>
    %303 = math.exp %302 : vector<16x16xf32>
    %cst_116 = arith.constant dense<0.000000e+00> : vector<16xf32>
    %304 = vector.multi_reduction <add>, %303, %cst_116 [1] : vector<16x16xf32> to vector<16xf32>
    %305 = vector.shape_cast %304 : vector<16xf32> to vector<16x1xf32>
    %306 = tpu.reciprocal %305 {approx = true} : vector<16x1xf32> -> vector<16x1xf32>
    %307 = vector.broadcast %306 : vector<16x1xf32> to vector<16x16xf32>
    %308 = arith.mulf %303, %307 : vector<16x16xf32>
    %309 = arith.truncf %308 : vector<16x16xf32> to vector<16x16xbf16>
    %cst_117 = arith.constant dense<0.000000e+00> : vector<16x8xf32>
    %310 = tpu.matmul %309, %295, %cst_117 {dimension_numbers = #tpu.dot_dimension_numbers<[1], [0], [0], [1], [0, 0, 1, 1], [], []>} : vector<16x16xbf16>, vector<16x8xbf16>, vector<16x8xf32> -> vector<16x8xf32>
    %311 = tpu.concatenate %247, %268, %289, %310 in 1 : vector<16x8xf32>, vector<16x8xf32>, vector<16x8xf32>, vector<16x8xf32> -> vector<16x32xf32>
    %c1_118 = arith.constant 1 : index
    %c0_119 = arith.constant 0 : index
    %c0_120 = arith.constant 0 : index
    %312 = vector.load %arg9[%c1_118, %c0_119, %c0_120] : memref<2x32x32xbf16, #tpu.memory_space<vmem>>, vector<1x32x32xbf16>
    %313 = vector.shape_cast %312 : vector<1x32x32xbf16> to vector<32x32xbf16>
    %314 = arith.truncf %311 : vector<16x32xf32> to vector<16x32xbf16>
    %cst_121 = arith.constant dense<0.000000e+00> : vector<16x32xf32>
    %315 = tpu.matmul %314, %313, %cst_121 {dimension_numbers = #tpu.dot_dimension_numbers<[1], [0], [0], [1], [0, 0, 1, 1], [], []>} : vector<16x32xbf16>, vector<32x32xbf16>, vector<16x32xf32> -> vector<16x32xf32>
    %c1_122 = arith.constant 1 : index
    %c0_123 = arith.constant 0 : index
    %c0_124 = arith.constant 0 : index
    %316 = vector.load %arg10[%c1_122, %c0_123, %c0_124] : memref<2x1x32xf32, #tpu.memory_space<vmem>>, vector<1x1x32xf32>
    %317 = vector.shape_cast %316 : vector<1x1x32xf32> to vector<1x32xf32>
    %318 = vector.broadcast %317 : vector<1x32xf32> to vector<16x32xf32>
    %319 = arith.addf %315, %318 : vector<16x32xf32>
    %320 = arith.addf %192, %319 : vector<16x32xf32>
    %c1_125 = arith.constant 1 : index
    %c0_126 = arith.constant 0 : index
    %c0_127 = arith.constant 0 : index
    %321 = vector.load %arg11[%c1_125, %c0_126, %c0_127] : memref<2x1x32xf32, #tpu.memory_space<vmem>>, vector<1x1x32xf32>
    %322 = vector.shape_cast %321 : vector<1x1x32xf32> to vector<1x32xf32>
    %c1_128 = arith.constant 1 : index
    %c0_129 = arith.constant 0 : index
    %c0_130 = arith.constant 0 : index
    %323 = vector.load %arg12[%c1_128, %c0_129, %c0_130] : memref<2x1x32xf32, #tpu.memory_space<vmem>>, vector<1x1x32xf32>
    %324 = vector.shape_cast %323 : vector<1x1x32xf32> to vector<1x32xf32>
    %cst_131 = arith.constant dense<0.000000e+00> : vector<16xf32>
    %325 = vector.multi_reduction <add>, %320, %cst_131 [1] : vector<16x32xf32> to vector<16xf32>
    %326 = vector.shape_cast %325 : vector<16xf32> to vector<16x1xf32>
    %cst_132 = arith.constant 3.200000e+01 : f32
    %327 = vector.broadcast %cst_132 : f32 to vector<16x1xf32>
    %328 = arith.divf %326, %327 : vector<16x1xf32>
    %329 = vector.broadcast %328 : vector<16x1xf32> to vector<16x32xf32>
    %330 = arith.subf %320, %329 : vector<16x32xf32>
    %331 = arith.mulf %330, %330 : vector<16x32xf32>
    %cst_133 = arith.constant dense<0.000000e+00> : vector<16xf32>
    %332 = vector.multi_reduction <add>, %331, %cst_133 [1] : vector<16x32xf32> to vector<16xf32>
    %333 = vector.shape_cast %332 : vector<16xf32> to vector<16x1xf32>
    %cst_134 = arith.constant 3.200000e+01 : f32
    %334 = vector.broadcast %cst_134 : f32 to vector<16x1xf32>
    %335 = arith.divf %333, %334 : vector<16x1xf32>
    %336 = vector.broadcast %328 : vector<16x1xf32> to vector<16x32xf32>
    %337 = arith.subf %320, %336 : vector<16x32xf32>
    %cst_135 = arith.constant 9.99999974E-6 : f32
    %338 = vector.broadcast %cst_135 : f32 to vector<16x1xf32>
    %339 = arith.addf %335, %338 : vector<16x1xf32>
    %340 = math.rsqrt %339 : vector<16x1xf32>
    %341 = vector.broadcast %340 : vector<16x1xf32> to vector<16x32xf32>
    %342 = arith.mulf %337, %341 : vector<16x32xf32>
    %343 = vector.broadcast %322 : vector<1x32xf32> to vector<16x32xf32>
    %344 = arith.mulf %342, %343 : vector<16x32xf32>
    %345 = vector.broadcast %324 : vector<1x32xf32> to vector<16x32xf32>
    %346 = arith.addf %344, %345 : vector<16x32xf32>
    %c1_136 = arith.constant 1 : index
    %c0_137 = arith.constant 0 : index
    %c0_138 = arith.constant 0 : index
    %347 = vector.load %arg13[%c1_136, %c0_137, %c0_138] : memref<2x32x64xbf16, #tpu.memory_space<vmem>>, vector<1x32x64xbf16>
    %348 = vector.shape_cast %347 : vector<1x32x64xbf16> to vector<32x64xbf16>
    %349 = arith.truncf %346 : vector<16x32xf32> to vector<16x32xbf16>
    %cst_139 = arith.constant dense<0.000000e+00> : vector<16x64xf32>
    %350 = tpu.matmul %349, %348, %cst_139 {dimension_numbers = #tpu.dot_dimension_numbers<[1], [0], [0], [1], [0, 0, 1, 1], [], []>} : vector<16x32xbf16>, vector<32x64xbf16>, vector<16x64xf32> -> vector<16x64xf32>
    %c1_140 = arith.constant 1 : index
    %c0_141 = arith.constant 0 : index
    %c0_142 = arith.constant 0 : index
    %351 = vector.load %arg14[%c1_140, %c0_141, %c0_142] : memref<2x1x64xf32, #tpu.memory_space<vmem>>, vector<1x1x64xf32>
    %352 = vector.shape_cast %351 : vector<1x1x64xf32> to vector<1x64xf32>
    %353 = vector.broadcast %352 : vector<1x64xf32> to vector<16x64xf32>
    %354 = arith.addf %350, %353 : vector<16x64xf32>
    %355 = arith.mulf %354, %354 : vector<16x64xf32>
    %356 = arith.mulf %354, %355 : vector<16x64xf32>
    %cst_143 = arith.constant 4.471500e-02 : f32
    %357 = vector.broadcast %cst_143 : f32 to vector<16x64xf32>
    %358 = arith.mulf %357, %356 : vector<16x64xf32>
    %359 = arith.addf %354, %358 : vector<16x64xf32>
    %cst_144 = arith.constant 0.797884583 : f32
    %360 = vector.broadcast %cst_144 : f32 to vector<16x64xf32>
    %361 = arith.mulf %360, %359 : vector<16x64xf32>
    %362 = math.tanh %361 : vector<16x64xf32>
    %cst_145 = arith.constant 1.000000e+00 : f32
    %363 = vector.broadcast %cst_145 : f32 to vector<16x64xf32>
    %364 = arith.addf %363, %362 : vector<16x64xf32>
    %cst_146 = arith.constant 5.000000e-01 : f32
    %365 = vector.broadcast %cst_146 : f32 to vector<16x64xf32>
    %366 = arith.mulf %365, %364 : vector<16x64xf32>
    %367 = arith.mulf %354, %366 : vector<16x64xf32>
    %c1_147 = arith.constant 1 : index
    %c0_148 = arith.constant 0 : index
    %c0_149 = arith.constant 0 : index
    %368 = vector.load %arg15[%c1_147, %c0_148, %c0_149] : memref<2x64x32xbf16, #tpu.memory_space<vmem>>, vector<1x64x32xbf16>
    %369 = vector.shape_cast %368 : vector<1x64x32xbf16> to vector<64x32xbf16>
    %370 = arith.truncf %367 : vector<16x64xf32> to vector<16x64xbf16>
    %cst_150 = arith.constant dense<0.000000e+00> : vector<16x32xf32>
    %371 = tpu.matmul %370, %369, %cst_150 {dimension_numbers = #tpu.dot_dimension_numbers<[1], [0], [0], [1], [0, 0, 1, 1], [], []>} : vector<16x64xbf16>, vector<64x32xbf16>, vector<16x32xf32> -> vector<16x32xf32>
    %c1_151 = arith.constant 1 : index
    %c0_152 = arith.constant 0 : index
    %c0_153 = arith.constant 0 : index
    %372 = vector.load %arg16[%c1_151, %c0_152, %c0_153] : memref<2x1x32xf32, #tpu.memory_space<vmem>>, vector<1x1x32xf32>
    %373 = vector.shape_cast %372 : vector<1x1x32xf32> to vector<1x32xf32>
    %374 = vector.broadcast %373 : vector<1x32xf32> to vector<16x32xf32>
    %375 = arith.addf %371, %374 : vector<16x32xf32>
    %376 = arith.addf %320, %375 : vector<16x32xf32>
    %c0_154 = arith.constant 0 : index
    %c0_155 = arith.constant 0 : index
    %377 = vector.load %arg17[%c0_154, %c0_155] : memref<32x64xbf16, #tpu.memory_space<vmem>>, vector<32x64xbf16>
    %378 = arith.truncf %376 : vector<16x32xf32> to vector<16x32xbf16>
    %cst_156 = arith.constant dense<0.000000e+00> : vector<16x64xf32>
    %379 = tpu.matmul %378, %377, %cst_156 {dimension_numbers = #tpu.dot_dimension_numbers<[1], [0], [0], [1], [0, 0, 1, 1], [], []>} : vector<16x32xbf16>, vector<32x64xbf16>, vector<16x64xf32> -> vector<16x64xf32>
    %c0_157 = arith.constant 0 : index
    %c0_158 = arith.constant 0 : index
    %380 = vector.load %arg18[%c0_157, %c0_158] : memref<1x64xf32, #tpu.memory_space<vmem>>, vector<1x64xf32>
    %381 = vector.broadcast %380 : vector<1x64xf32> to vector<16x64xf32>
    %382 = arith.addf %379, %381 : vector<16x64xf32>
    %c0_159 = arith.constant 0 : index
    %c0_160 = arith.constant 0 : index
    %383 = vector.load %arg19[%c0_159, %c0_160] : memref<16x64xf32, #tpu.memory_space<vmem>>, vector<16x64xf32>
    tpu.vector_store %arg19[%c0_159, %c0_160], %382 {strides = array<i32>} : memref<16x64xf32, #tpu.memory_space<vmem>>, vector<16x64xf32>,
    return
  }
  func.func @transform_0(%arg0: i32) -> (i32, i32) {
    %c0_i32 = arith.constant 0 : i32
    %c0_i32_0 = arith.constant 0 : i32
    return %arg0, %c0_i32 : i32, i32
  }
  func.func @transform_1(%arg0: i32) -> (i32, i32) {
    %c0_i32 = arith.constant 0 : i32
    %c0_i32_0 = arith.constant 0 : i32
    %c0_i32_1 = arith.constant 0 : i32
    return %c0_i32, %c0_i32_0 : i32, i32
  }
  func.func @transform_2(%arg0: i32) -> (i32, i32) {
    %c0_i32 = arith.constant 0 : i32
    %c0_i32_0 = arith.constant 0 : i32
    %c0_i32_1 = arith.constant 0 : i32
    return %c0_i32, %c0_i32_0 : i32, i32
  }
  func.func @transform_3(%arg0: i32) -> (i32, i32) {
    %c0_i32 = arith.constant 0 : i32
    %c0_i32_0 = arith.constant 0 : i32
    %c0_i32_1 = arith.constant 0 : i32
    return %c0_i32, %c0_i32_0 : i32, i32
  }
  func.func @transform_4(%arg0: i32) -> (i32, i32, i32) {
    %c0_i32 = arith.constant 0 : i32
    %c0_i32_0 = arith.constant 0 : i32
    %c0_i32_1 = arith.constant 0 : i32
    %c0_i32_2 = arith.constant 0 : i32
    return %c0_i32, %c0_i32_0, %c0_i32_1 : i32, i32, i32
  }
  func.func @transform_5(%arg0: i32) -> (i32, i32, i32) {
    %c0_i32 = arith.constant 0 : i32
    %c0_i32_0 = arith.constant 0 : i32
    %c0_i32_1 = arith.constant 0 : i32
    %c0_i32_2 = arith.constant 0 : i32
    return %c0_i32, %c0_i32_0, %c0_i32_1 : i32, i32, i32
  }
  func.func @transform_6(%arg0: i32) -> (i32, i32, i32) {
    %c0_i32 = arith.constant 0 : i32
    %c0_i32_0 = arith.constant 0 : i32
    %c0_i32_1 = arith.constant 0 : i32
    %c0_i32_2 = arith.constant 0 : i32
    return %c0_i32, %c0_i32_0, %c0_i32_1 : i32, i32, i32
  }
  func.func @transform_7(%arg0: i32) -> (i32, i32, i32) {
    %c0_i32 = arith.constant 0 : i32
    %c0_i32_0 = arith.constant 0 : i32
    %c0_i32_1 = arith.constant 0 : i32
    %c0_i32_2 = arith.constant 0 : i32
    return %c0_i32, %c0_i32_0, %c0_i32_1 : i32, i32, i32
  }
  func.func @transform_8(%arg0: i32) -> (i32, i32, i32) {
    %c0_i32 = arith.constant 0 : i32
    %c0_i32_0 = arith.constant 0 : i32
    %c0_i32_1 = arith.constant 0 : i32
    %c0_i32_2 = arith.constant 0 : i32
    return %c0_i32, %c0_i32_0, %c0_i32_1 : i32, i32, i32
  }
  func.func @transform_9(%arg0: i32) -> (i32, i32, i32) {
    %c0_i32 = arith.constant 0 : i32
    %c0_i32_0 = arith.constant 0 : i32
    %c0_i32_1 = arith.constant 0 : i32
    %c0_i32_2 = arith.constant 0 : i32
    return %c0_i32, %c0_i32_0, %c0_i32_1 : i32, i32, i32
  }
  func.func @transform_10(%arg0: i32) -> (i32, i32, i32) {
    %c0_i32 = arith.constant 0 : i32
    %c0_i32_0 = arith.constant 0 : i32
    %c0_i32_1 = arith.constant 0 : i32
    %c0_i32_2 = arith.constant 0 : i32
    return %c0_i32, %c0_i32_0, %c0_i32_1 : i32, i32, i32
  }
  func.func @transform_11(%arg0: i32) -> (i32, i32, i32) {
    %c0_i32 = arith.constant 0 : i32
    %c0_i32_0 = arith.constant 0 : i32
    %c0_i32_1 = arith.constant 0 : i32
    %c0_i32_2 = arith.constant 0 : i32
    return %c0_i32, %c0_i32_0, %c0_i32_1 : i32, i32, i32
  }
  func.func @transform_12(%arg0: i32) -> (i32, i32, i32) {
    %c0_i32 = arith.constant 0 : i32
    %c0_i32_0 = arith.constant 0 : i32
    %c0_i32_1 = arith.constant 0 : i32
    %c0_i32_2 = arith.constant 0 : i32
    return %c0_i32, %c0_i32_0, %c0_i32_1 : i32, i32, i32
  }
  func.func @transform_13(%arg0: i32) -> (i32, i32, i32) {
    %c0_i32 = arith.constant 0 : i32
    %c0_i32_0 = arith.constant 0 : i32
    %c0_i32_1 = arith.constant 0 : i32
    %c0_i32_2 = arith.constant 0 : i32
    return %c0_i32, %c0_i32_0, %c0_i32_1 : i32, i32, i32
  }
  func.func @transform_14(%arg0: i32) -> (i32, i32, i32) {
    %c0_i32 = arith.constant 0 : i32
    %c0_i32_0 = arith.constant 0 : i32
    %c0_i32_1 = arith.constant 0 : i32
    %c0_i32_2 = arith.constant 0 : i32
    return %c0_i32, %c0_i32_0, %c0_i32_1 : i32, i32, i32
  }
  func.func @transform_15(%arg0: i32) -> (i32, i32, i32) {
    %c0_i32 = arith.constant 0 : i32
    %c0_i32_0 = arith.constant 0 : i32
    %c0_i32_1 = arith.constant 0 : i32
    %c0_i32_2 = arith.constant 0 : i32
    return %c0_i32, %c0_i32_0, %c0_i32_1 : i32, i32, i32
  }
  func.func @transform_16(%arg0: i32) -> (i32, i32) {
    %c0_i32 = arith.constant 0 : i32
    %c0_i32_0 = arith.constant 0 : i32
    %c0_i32_1 = arith.constant 0 : i32
    return %c0_i32, %c0_i32_0 : i32, i32
  }
  func.func @transform_17(%arg0: i32) -> (i32, i32) {
    %c0_i32 = arith.constant 0 : i32
    %c0_i32_0 = arith.constant 0 : i32
    %c0_i32_1 = arith.constant 0 : i32
    return %c0_i32, %c0_i32_0 : i32, i32
  }
  func.func @transform_18(%arg0: i32) -> (i32, i32) {
    %c0_i32 = arith.constant 0 : i32
    %c0_i32_0 = arith.constant 0 : i32
    return %arg0, %c0_i32 : i32, i32
  }
}

</mosaic_0001>

<llo_original>
// kernel: dit_forward.1
$region0: #{dit_forward.1}
  #allocation0 [shape = 'u32[]', space=smem, size = 0x4, offset = 0x4, fixed_abs, tag = 'smem constant byte address 0x4 - core index']
  #allocation1 [shape = 'u32[144,128]{1,0:T(1,128)}', space=vmem, size = 0x12000, scoped, tag = 'internal scratch']
  %s0 = inlined_call_operand.vmem [shape: f32[32,64], index: 0, kind: input, shape index: {}]
  %s1 = inlined_call_operand.vmem [shape: f32[16,32], index: 1, kind: input, shape index: {}]
  %s2 = inlined_call_operand.vmem [shape: bf16[64,32], index: 2, kind: input, shape index: {}]
  %s3 = inlined_call_operand.vmem [shape: f32[1,32], index: 3, kind: input, shape index: {}]
  %s4 = inlined_call_operand.vmem [shape: f32[2,1,32], index: 4, kind: input, shape index: {}]
  %s5 = inlined_call_operand.vmem [shape: f32[2,1,32], index: 5, kind: input, shape index: {}]
  %s6 = inlined_call_operand.vmem [shape: bf16[2,32,96], index: 6, kind: input, shape index: {}]
  %s7 = inlined_call_operand.vmem [shape: f32[2,1,96], index: 7, kind: input, shape index: {}]
  %s8 = inlined_call_operand.vmem [shape: bf16[2,32,32], index: 8, kind: input, shape index: {}]
  %s9 = inlined_call_operand.vmem [shape: f32[2,1,32], index: 9, kind: input, shape index: {}]
  %s10 = inlined_call_operand.vmem [shape: f32[2,1,32], index: 10, kind: input, shape index: {}]
  %s11 = inlined_call_operand.vmem [shape: f32[2,1,32], index: 11, kind: input, shape index: {}]
  %s12 = inlined_call_operand.vmem [shape: bf16[2,32,64], index: 12, kind: input, shape index: {}]
  %s13 = inlined_call_operand.vmem [shape: f32[2,1,64], index: 13, kind: input, shape index: {}]
  %s14 = inlined_call_operand.vmem [shape: bf16[2,64,32], index: 14, kind: input, shape index: {}]
  %s15 = inlined_call_operand.vmem [shape: f32[2,1,32], index: 15, kind: input, shape index: {}]
  %s16 = inlined_call_operand.vmem [shape: bf16[32,64], index: 16, kind: input, shape index: {}]
  %s17 = inlined_call_operand.vmem [shape: f32[1,64], index: 17, kind: input, shape index: {}]
  %s18 = inlined_call_operand.vmem [shape: f32[32,64], index: 18, kind: output, shape index: {}]
  %s19 = sld [smem:[#allocation0]]
  $region105: #{dit_forward.1} parent=0
    _
  %s21 = ssub.s32 1, %s19
  %s22 = scalar_select 0, %s21, %s19
  loop: start=0, step=1, limit=4
  $region2: #{dit_forward.1} parent=0 // loop_pre_header
    _
  $region3: #{dit_forward.1} parent=0 // loop_header
    %s24 = sphi 0, %s28
    %p25 = scmp.ge.s32.totalorder %s24, 4
    %s34 = sphi 0, %s36
    %s37 = sphi 0, %s34
    %s38 = sphi 0, %s37
    %s54 = sphi 0, %s38
    %s58 = sphi 0, %s58
    %s60 = sphi 0, %s58
    %s61 = sphi 0, %s60
    %s75 = sphi 0, %s61
    %s79 = sphi 0, %s79
    %s81 = sphi 0, %s79
    %s82 = sphi 0, %s81
    %s96 = sphi 0, %s82
    %s100 = sphi 0, %s100
    %s102 = sphi 0, %s100
    %s103 = sphi 0, %s102
    %s117 = sphi 0, %s103
    %s121 = sphi 0, %s121
    %s123 = sphi 0, %s121
    %s124 = sphi 0, %s123
    %s138 = sphi 0, %s124
    %s142 = sphi 0, %s142
    %s144 = sphi 0, %s142
    %s145 = sphi 0, %s144
    %s159 = sphi 0, %s145
    %s163 = sphi 0, %s163
    %s165 = sphi 0, %s163
    %s166 = sphi 0, %s165
    %s180 = sphi 0, %s166
    %s184 = sphi 0, %s184
    %s186 = sphi 0, %s184
    %s187 = sphi 0, %s186
    %s201 = sphi 0, %s187
    %s205 = sphi 0, %s205
    %s207 = sphi 0, %s205
    %s208 = sphi 0, %s207
    %s222 = sphi 0, %s208
    %s226 = sphi 0, %s226
    %s228 = sphi 0, %s226
    %s229 = sphi 0, %s228
    %s243 = sphi 0, %s229
    %s247 = sphi 0, %s247
    %s249 = sphi 0, %s247
    %s250 = sphi 0, %s249
    %s264 = sphi 0, %s250
    %s268 = sphi 0, %s268
    %s270 = sphi 0, %s268
    %s271 = sphi 0, %s270
    %s285 = sphi 0, %s271
    %s289 = sphi 0, %s289
    %s291 = sphi 0, %s289
    %s292 = sphi 0, %s291
    %s306 = sphi 0, %s292
    %s310 = sphi 0, %s310
    %s312 = sphi 0, %s310
    %s313 = sphi 0, %s312
    %s327 = sphi 0, %s313
    %s331 = sphi 0, %s331
    %s333 = sphi 0, %s331
    %s334 = sphi 0, %s333
    %s348 = sphi 0, %s334
    %s352 = sphi 0, %s352
    %s354 = sphi 0, %s352
    %s355 = sphi 0, %s354
    %s369 = sphi 0, %s355
    %s373 = sphi 0, %s373
    %s375 = sphi 0, %s373
    %s376 = sphi 0, %s375
    %s390 = sphi 0, %s376
    %s394 = sphi 0, %s394
    %s396 = sphi 0, %s394
    %s397 = sphi 0, %s396
    %s411 = sphi 0, %s397
    %s417 = sphi 0, %s419
    %s420 = sphi 0, %s417
    %s421 = sphi 0, %s420
    %s437 = sphi 0, %s421
  $region4: #{dit_forward.1} parent=0 // loop_header_branch
    %27 = sbr.rel (%p25) target = $region8
  $region5: #{dit_forward.1} parent=0 // loop_body
    %s29 = ssub.s32 %s24, 1
    %s30 = ssub.s32 %s24, 2
    %s31 = sadd.s32 %s24, 1
    %s32 = ssub.s32 %s24, %s31
    %p33 = scmp.eq.s32.totalorder %s32, 0
    %s35 = sadd.s32 %s34, 1
    %s36 = scalar_select %p33, %s34, %s35
    %p39 = pneg %p33
    %p40 = scmp.eq.s32.totalorder %s24, 1
    %p41 = por %p39, %p40
    %p42 = scmp.ne.s32.totalorder %s34, %s37
    %p43 = scmp.eq.s32.totalorder %s24, 0
    %p44 = por %p42, %p43
    %p45 = scmp.ne.s32.totalorder %s34, %s37
    %p46 = scmp.eq.s32.totalorder %s29, 1
    %p47 = por %p45, %p46
    %p48 = scmp.ne.s32.totalorder %s37, %s38
    %p49 = scmp.eq.s32.totalorder %s29, 0
    %p50 = por %p48, %p49
    %p51 = scmp.ne.s32.totalorder %s37, %s38
    %p52 = scmp.eq.s32.totalorder %s30, 1
    %p53 = por %p51, %p52
    %p55 = scmp.ne.s32.totalorder %s38, %s54
    %p56 = scmp.eq.s32.totalorder %s30, 0
    %p57 = por %p55, %p56
    %s59 = sadd.s32 %s58, 1
    %p62 = scmp.eq.s32.totalorder %s24, 1
    %p63 = scmp.ne.s32.totalorder %s58, %s60
    %p64 = scmp.eq.s32.totalorder %s24, 0
    %p65 = por %p63, %p64
    %p66 = scmp.ne.s32.totalorder %s58, %s60
    %p67 = scmp.eq.s32.totalorder %s29, 1
    %p68 = por %p66, %p67
    %p69 = scmp.ne.s32.totalorder %s60, %s61
    %p70 = scmp.eq.s32.totalorder %s29, 0
    %p71 = por %p69, %p70
    %p72 = scmp.ne.s32.totalorder %s60, %s61
    %p73 = scmp.eq.s32.totalorder %s30, 1
    %p74 = por %p72, %p73
    %p76 = scmp.ne.s32.totalorder %s61, %s75
    %p77 = scmp.eq.s32.totalorder %s30, 0
    %p78 = por %p76, %p77
    %s80 = sadd.s32 %s79, 1
    %p83 = scmp.eq.s32.totalorder %s24, 1
    %p84 = scmp.ne.s32.totalorder %s79, %s81
    %p85 = scmp.eq.s32.totalorder %s24, 0
    %p86 = por %p84, %p85
    %p87 = scmp.ne.s32.totalorder %s79, %s81
    %p88 = scmp.eq.s32.totalorder %s29, 1
    %p89 = por %p87, %p88
    %p90 = scmp.ne.s32.totalorder %s81, %s82
    %p91 = scmp.eq.s32.totalorder %s29, 0
    %p92 = por %p90, %p91
    %p93 = scmp.ne.s32.totalorder %s81, %s82
    %p94 = scmp.eq.s32.totalorder %s30, 1
    %p95 = por %p93, %p94
    %p97 = scmp.ne.s32.totalorder %s82, %s96
    %p98 = scmp.eq.s32.totalorder %s30, 0
    %p99 = por %p97, %p98
    %s101 = sadd.s32 %s100, 1
    %p104 = scmp.eq.s32.totalorder %s24, 1
    %p105 = scmp.ne.s32.totalorder %s100, %s102
    %p106 = scmp.eq.s32.totalorder %s24, 0
    %p107 = por %p105, %p106
    %p108 = scmp.ne.s32.totalorder %s100, %s102
    %p109 = scmp.eq.s32.totalorder %s29, 1
    %p110 = por %p108, %p109
    %p111 = scmp.ne.s32.totalorder %s102, %s103
    %p112 = scmp.eq.s32.totalorder %s29, 0
    %p113 = por %p111, %p112
    %p114 = scmp.ne.s32.totalorder %s102, %s103
    %p115 = scmp.eq.s32.totalorder %s30, 1
    %p116 = por %p114, %p115
    %p118 = scmp.ne.s32.totalorder %s103, %s117
    %p119 = scmp.eq.s32.totalorder %s30, 0
    %p120 = por %p118, %p119
    %s122 = sadd.s32 %s121, 1
    %p125 = scmp.eq.s32.totalorder %s24, 1
    %p126 = scmp.ne.s32.totalorder %s121, %s123
    %p127 = scmp.eq.s32.totalorder %s24, 0
    %p128 = por %p126, %p127
    %p129 = scmp.ne.s32.totalorder %s121, %s123
    %p130 = scmp.eq.s32.totalorder %s29, 1
    %p131 = por %p129, %p130
    %p132 = scmp.ne.s32.totalorder %s123, %s124
    %p133 = scmp.eq.s32.totalorder %s29, 0
    %p134 = por %p132, %p133
    %p135 = scmp.ne.s32.totalorder %s123, %s124
    %p136 = scmp.eq.s32.totalorder %s30, 1
    %p137 = por %p135, %p136
    %p139 = scmp.ne.s32.totalorder %s124, %s138
    %p140 = scmp.eq.s32.totalorder %s30, 0
    %p141 = por %p139, %p140
    %s143 = sadd.s32 %s142, 1
    %p146 = scmp.eq.s32.totalorder %s24, 1
    %p147 = scmp.ne.s32.totalorder %s142, %s144
    %p148 = scmp.eq.s32.totalorder %s24, 0
    %p149 = por %p147, %p148
    %p150 = scmp.ne.s32.totalorder %s142, %s144
    %p151 = scmp.eq.s32.totalorder %s29, 1
    %p152 = por %p150, %p151
    %p153 = scmp.ne.s32.totalorder %s144, %s145
    %p154 = scmp.eq.s32.totalorder %s29, 0
    %p155 = por %p153, %p154
    %p156 = scmp.ne.s32.totalorder %s144, %s145
    %p157 = scmp.eq.s32.totalorder %s30, 1
    %p158 = por %p156, %p157
    %p160 = scmp.ne.s32.totalorder %s145, %s159
    %p161 = scmp.eq.s32.totalorder %s30, 0
    %p162 = por %p160, %p161
    %s164 = sadd.s32 %s163, 1
    %p167 = scmp.eq.s32.totalorder %s24, 1
    %p168 = scmp.ne.s32.totalorder %s163, %s165
    %p169 = scmp.eq.s32.totalorder %s24, 0
    %p170 = por %p168, %p169
    %p171 = scmp.ne.s32.totalorder %s163, %s165
    %p172 = scmp.eq.s32.totalorder %s29, 1
    %p173 = por %p171, %p172
    %p174 = scmp.ne.s32.totalorder %s165, %s166
    %p175 = scmp.eq.s32.totalorder %s29, 0
    %p176 = por %p174, %p175
    %p177 = scmp.ne.s32.totalorder %s165, %s166
    %p178 = scmp.eq.s32.totalorder %s30, 1
    %p179 = por %p177, %p178
    %p181 = scmp.ne.s32.totalorder %s166, %s180
    %p182 = scmp.eq.s32.totalorder %s30, 0
    %p183 = por %p181, %p182
    %s185 = sadd.s32 %s184, 1
    %p188 = scmp.eq.s32.totalorder %s24, 1
    %p189 = scmp.ne.s32.totalorder %s184, %s186
    %p190 = scmp.eq.s32.totalorder %s24, 0
    %p191 = por %p189, %p190
    %p192 = scmp.ne.s32.totalorder %s184, %s186
    %p193 = scmp.eq.s32.totalorder %s29, 1
    %p194 = por %p192, %p193
    %p195 = scmp.ne.s32.totalorder %s186, %s187
    %p196 = scmp.eq.s32.totalorder %s29, 0
    %p197 = por %p195, %p196
    %p198 = scmp.ne.s32.totalorder %s186, %s187
    %p199 = scmp.eq.s32.totalorder %s30, 1
    %p200 = por %p198, %p199
    %p202 = scmp.ne.s32.totalorder %s187, %s201
    %p203 = scmp.eq.s32.totalorder %s30, 0
    %p204 = por %p202, %p203
    %s206 = sadd.s32 %s205, 1
    %p209 = scmp.eq.s32.totalorder %s24, 1
    %p210 = scmp.ne.s32.totalorder %s205, %s207
    %p211 = scmp.eq.s32.totalorder %s24, 0
    %p212 = por %p210, %p211
    %p213 = scmp.ne.s32.totalorder %s205, %s207
    %p214 = scmp.eq.s32.totalorder %s29, 1
    %p215 = por %p213, %p214
    %p216 = scmp.ne.s32.totalorder %s207, %s208
    %p217 = scmp.eq.s32.totalorder %s29, 0
    %p218 = por %p216, %p217
    %p219 = scmp.ne.s32.totalorder %s207, %s208
    %p220 = scmp.eq.s32.totalorder %s30, 1
    %p221 = por %p219, %p220
    %p223 = scmp.ne.s32.totalorder %s208, %s222
    %p224 = scmp.eq.s32.totalorder %s30, 0
    %p225 = por %p223, %p224
    %s227 = sadd.s32 %s226, 1
    %p230 = scmp.eq.s32.totalorder %s24, 1
    %p231 = scmp.ne.s32.totalorder %s226, %s228
    %p232 = scmp.eq.s32.totalorder %s24, 0
    %p233 = por %p231, %p232
    %p234 = scmp.ne.s32.totalorder %s226, %s228
    %p235 = scmp.eq.s32.totalorder %s29, 1
    %p236 = por %p234, %p235
    %p237 = scmp.ne.s32.totalorder %s228, %s229
    %p238 = scmp.eq.s32.totalorder %s29, 0
    %p239 = por %p237, %p238
    %p240 = scmp.ne.s32.totalorder %s228, %s229
    %p241 = scmp.eq.s32.totalorder %s30, 1
    %p242 = por %p240, %p241
    %p244 = scmp.ne.s32.totalorder %s229, %s243
    %p245 = scmp.eq.s32.totalorder %s30, 0
    %p246 = por %p244, %p245
    %s248 = sadd.s32 %s247, 1
    %p251 = scmp.eq.s32.totalorder %s24, 1
    %p252 = scmp.ne.s32.totalorder %s247, %s249
    %p253 = scmp.eq.s32.totalorder %s24, 0
    %p254 = por %p252, %p253
    %p255 = scmp.ne.s32.totalorder %s247, %s249
    %p256 = scmp.eq.s32.totalorder %s29, 1
    %p257 = por %p255, %p256
    %p258 = scmp.ne.s32.totalorder %s249, %s250
    %p259 = scmp.eq.s32.totalorder %s29, 0
    %p260 = por %p258, %p259
    %p261 = scmp.ne.s32.totalorder %s249, %s250
    %p262 = scmp.eq.s32.totalorder %s30, 1
    %p263 = por %p261, %p262
    %p265 = scmp.ne.s32.totalorder %s250, %s264
    %p266 = scmp.eq.s32.totalorder %s30, 0
    %p267 = por %p265, %p266
    %s269 = sadd.s32 %s268, 1
    %p272 = scmp.eq.s32.totalorder %s24, 1
    %p273 = scmp.ne.s32.totalorder %s268, %s270
    %p274 = scmp.eq.s32.totalorder %s24, 0
    %p275 = por %p273, %p274
    %p276 = scmp.ne.s32.totalorder %s268, %s270
    %p277 = scmp.eq.s32.totalorder %s29, 1
    %p278 = por %p276, %p277
    %p279 = scmp.ne.s32.totalorder %s270, %s271
    %p280 = scmp.eq.s32.totalorder %s29, 0
    %p281 = por %p279, %p280
    %p282 = scmp.ne.s32.totalorder %s270, %s271
    %p283 = scmp.eq.s32.totalorder %s30, 1
    %p284 = por %p282, %p283
    %p286 = scmp.ne.s32.totalorder %s271, %s285
    %p287 = scmp.eq.s32.totalorder %s30, 0
    %p288 = por %p286, %p287
    %s290 = sadd.s32 %s289, 1
    %p293 = scmp.eq.s32.totalorder %s24, 1
    %p294 = scmp.ne.s32.totalorder %s289, %s291
    %p295 = scmp.eq.s32.totalorder %s24, 0
    %p296 = por %p294, %p295
    %p297 = scmp.ne.s32.totalorder %s289, %s291
    %p298 = scmp.eq.s32.totalorder %s29, 1
    %p299 = por %p297, %p298
    %p300 = scmp.ne.s32.totalorder %s291, %s292
    %p301 = scmp.eq.s32.totalorder %s29, 0
    %p302 = por %p300, %p301
    %p303 = scmp.ne.s32.totalorder %s291, %s292
    %p304 = scmp.eq.s32.totalorder %s30, 1
    %p305 = por %p303, %p304
    %p307 = scmp.ne.s32.totalorder %s292, %s306
    %p308 = scmp.eq.s32.totalorder %s30, 0
    %p309 = por %p307, %p308
    %s311 = sadd.s32 %s310, 1
    %p314 = scmp.eq.s32.totalorder %s24, 1
    %p315 = scmp.ne.s32.totalorder %s310, %s312
    %p316 = scmp.eq.s32.totalorder %s24, 0
    %p317 = por %p315, %p316
    %p318 = scmp.ne.s32.totalorder %s310, %s312
    %p319 = scmp.eq.s32.totalorder %s29, 1
    %p320 = por %p318, %p319
    %p321 = scmp.ne.s32.totalorder %s312, %s313
    %p322 = scmp.eq.s32.totalorder %s29, 0
    %p323 = por %p321, %p322
    %p324 = scmp.ne.s32.totalorder %s312, %s313
    %p325 = scmp.eq.s32.totalorder %s30, 1
    %p326 = por %p324, %p325
    %p328 = scmp.ne.s32.totalorder %s313, %s327
    %p329 = scmp.eq.s32.totalorder %s30, 0
    %p330 = por %p328, %p329
    %s332 = sadd.s32 %s331, 1
    %p335 = scmp.eq.s32.totalorder %s24, 1
    %p336 = scmp.ne.s32.totalorder %s331, %s333
    %p337 = scmp.eq.s32.totalorder %s24, 0
    %p338 = por %p336, %p337
    %p339 = scmp.ne.s32.totalorder %s331, %s333
    %p340 = scmp.eq.s32.totalorder %s29, 1
    %p341 = por %p339, %p340
    %p342 = scmp.ne.s32.totalorder %s333, %s334
    %p343 = scmp.eq.s32.totalorder %s29, 0
    %p344 = por %p342, %p343
    %p345 = scmp.ne.s32.totalorder %s333, %s334
    %p346 = scmp.eq.s32.totalorder %s30, 1
    %p347 = por %p345, %p346
    %p349 = scmp.ne.s32.totalorder %s334, %s348
    %p350 = scmp.eq.s32.totalorder %s30, 0
    %p351 = por %p349, %p350
    %s353 = sadd.s32 %s352, 1
    %p356 = scmp.eq.s32.totalorder %s24, 1
    %p357 = scmp.ne.s32.totalorder %s352, %s354
    %p358 = scmp.eq.s32.totalorder %s24, 0
    %p359 = por %p357, %p358
    %p360 = scmp.ne.s32.totalorder %s352, %s354
    %p361 = scmp.eq.s32.totalorder %s29, 1
    %p362 = por %p360, %p361
    %p363 = scmp.ne.s32.totalorder %s354, %s355
    %p364 = scmp.eq.s32.totalorder %s29, 0
    %p365 = por %p363, %p364
    %p366 = scmp.ne.s32.totalorder %s354, %s355
    %p367 = scmp.eq.s32.totalorder %s30, 1
    %p368 = por %p366, %p367
    %p370 = scmp.ne.s32.totalorder %s355, %s369
    %p371 = scmp.eq.s32.totalorder %s30, 0
    %p372 = por %p370, %p371
    %s374 = sadd.s32 %s373, 1
    %p377 = scmp.eq.s32.totalorder %s24, 1
    %p378 = scmp.ne.s32.totalorder %s373, %s375
    %p379 = scmp.eq.s32.totalorder %s24, 0
    %p380 = por %p378, %p379
    %p381 = scmp.ne.s32.totalorder %s373, %s375
    %p382 = scmp.eq.s32.totalorder %s29, 1
    %p383 = por %p381, %p382
    %p384 = scmp.ne.s32.totalorder %s375, %s376
    %p385 = scmp.eq.s32.totalorder %s29, 0
    %p386 = por %p384, %p385
    %p387 = scmp.ne.s32.totalorder %s375, %s376
    %p388 = scmp.eq.s32.totalorder %s30, 1
    %p389 = por %p387, %p388
    %p391 = scmp.ne.s32.totalorder %s376, %s390
    %p392 = scmp.eq.s32.totalorder %s30, 0
    %p393 = por %p391, %p392
    %s395 = sadd.s32 %s394, 1
    %p398 = scmp.eq.s32.totalorder %s24, 1
    %p399 = scmp.ne.s32.totalorder %s394, %s396
    %p400 = scmp.eq.s32.totalorder %s24, 0
    %p401 = por %p399, %p400
    %p402 = scmp.ne.s32.totalorder %s394, %s396
    %p403 = scmp.eq.s32.totalorder %s29, 1
    %p404 = por %p402, %p403
    %p405 = scmp.ne.s32.totalorder %s396, %s397
    %p406 = scmp.eq.s32.totalorder %s29, 0
    %p407 = por %p405, %p406
    %p408 = scmp.ne.s32.totalorder %s396, %s397
    %p409 = scmp.eq.s32.totalorder %s30, 1
    %p410 = por %p408, %p409
    %p412 = scmp.ne.s32.totalorder %s397, %s411
    %p413 = scmp.eq.s32.totalorder %s30, 0
    %p414 = por %p412, %p413
    %s415 = ssub.s32 %s24, %s31
    %p416 = scmp.eq.s32.totalorder %s415, 0
    %s418 = sadd.s32 %s417, 1
    %s419 = scalar_select %p416, %s417, %s418
    %p422 = pneg %p416
    %p423 = scmp.eq.s32.totalorder %s24, 1
    %p424 = por %p422, %p423
    %p425 = scmp.ne.s32.totalorder %s417, %s420
    %p426 = scmp.eq.s32.totalorder %s24, 0
    %p427 = por %p425, %p426
    %p428 = scmp.ne.s32.totalorder %s417, %s420
    %p429 = scmp.eq.s32.totalorder %s29, 1
    %p430 = por %p428, %p429
    %p431 = scmp.ne.s32.totalorder %s420, %s421
    %p432 = scmp.eq.s32.totalorder %s29, 0
    %p433 = por %p431, %p432
    %p434 = scmp.ne.s32.totalorder %s420, %s421
    %p435 = scmp.eq.s32.totalorder %s30, 1
    %p436 = por %p434, %p435
    %p438 = scmp.ne.s32.totalorder %s421, %s437
    %p439 = scmp.eq.s32.totalorder %s30, 0
    %p440 = por %p438, %p439
    %p441 = scmp.le.s32.totalorder 1, %s24
    %p442 = scmp.lt.s32.totalorder %s24, 3
    %p443 = pnand %p441, %p442
    %p444 = pneg %p443
    // Predicated region
    $region9: #{dit_forward.1} parent=5 // pred_check
      _
    $region10: #{dit_forward.1} parent=5 // pred_check_branch
      %446 = sbr.rel (%p443) target = $region12
    $region11: #{dit_forward.1} parent=5 // pred_region
      %s447 = ssub.s32 %s24, 1
      // Predicated region
      $region13: #{dit_forward.1} parent=11 // pred_check
        %p448 = pneg %p71
      $region14: #{dit_forward.1} parent=11 // pred_check_branch
        %450 = sbr.rel (%p448) target = $region16
      $region15: #{dit_forward.1} parent=11 // pred_region
        _
      $region16: #{dit_forward.1} parent=11 // pred_fallthru
        _
      // Predicated region
      $region17: #{dit_forward.1} parent=11 // pred_check
        %p451 = pneg %p92
      $region18: #{dit_forward.1} parent=11 // pred_check_branch
        %453 = sbr.rel (%p451) target = $region20
      $region19: #{dit_forward.1} parent=11 // pred_region
        _
      $region20: #{dit_forward.1} parent=11 // pred_fallthru
        _
      // Predicated region
      $region21: #{dit_forward.1} parent=11 // pred_check
        %p454 = pneg %p113
      $region22: #{dit_forward.1} parent=11 // pred_check_branch
        %456 = sbr.rel (%p454) target = $region24
      $region23: #{dit_forward.1} parent=11 // pred_region
        _
      $region24: #{dit_forward.1} parent=11 // pred_fallthru
        _
      // Predicated region
      $region25: #{dit_forward.1} parent=11 // pred_check
        %p457 = pneg %p134
      $region26: #{dit_forward.1} parent=11 // pred_check_branch
        %459 = sbr.rel (%p457) target = $region28
      $region27: #{dit_forward.1} parent=11 // pred_region
        _
      $region28: #{dit_forward.1} parent=11 // pred_fallthru
        _
      // Predicated region
      $region29: #{dit_forward.1} parent=11 // pred_check
        %p460 = pneg %p155
      $region30: #{dit_forward.1} parent=11 // pred_check_branch
        %462 = sbr.rel (%p460) target = $region32
      $region31: #{dit_forward.1} parent=11 // pred_region
        _
      $region32: #{dit_forward.1} parent=11 // pred_fallthru
        _
      // Predicated region
      $region33: #{dit_forward.1} parent=11 // pred_check
        %p463 = pneg %p176
      $region34: #{dit_forward.1} parent=11 // pred_check_branch
        %465 = sbr.rel (%p463) target = $region36
      $region35: #{dit_forward.1} parent=11 // pred_region
        _
      $region36: #{dit_forward.1} parent=11 // pred_fallthru
        _
      // Predicated region
      $region37: #{dit_forward.1} parent=11 // pred_check
        %p466 = pneg %p197
      $region38: #{dit_forward.1} parent=11 // pred_check_branch
        %468 = sbr.rel (%p466) target = $region40
      $region39: #{dit_forward.1} parent=11 // pred_region
        _
      $region40: #{dit_forward.1} parent=11 // pred_fallthru
        _
      // Predicated region
      $region41: #{dit_forward.1} parent=11 // pred_check
        %p469 = pneg %p218
      $region42: #{dit_forward.1} parent=11 // pred_check_branch
        %471 = sbr.rel (%p469) target = $region44
      $region43: #{dit_forward.1} parent=11 // pred_region
        _
      $region44: #{dit_forward.1} parent=11 // pred_fallthru
        _
      // Predicated region
      $region45: #{dit_forward.1} parent=11 // pred_check
        %p472 = pneg %p239
      $region46: #{dit_forward.1} parent=11 // pred_check_branch
        %474 = sbr.rel (%p472) target = $region48
      $region47: #{dit_forward.1} parent=11 // pred_region
        _
      $region48: #{dit_forward.1} parent=11 // pred_fallthru
        _
      // Predicated region
      $region49: #{dit_forward.1} parent=11 // pred_check
        %p475 = pneg %p260
      $region50: #{dit_forward.1} parent=11 // pred_check_branch
        %477 = sbr.rel (%p475) target = $region52
      $region51: #{dit_forward.1} parent=11 // pred_region
        _
      $region52: #{dit_forward.1} parent=11 // pred_fallthru
        _
      // Predicated region
      $region53: #{dit_forward.1} parent=11 // pred_check
        %p478 = pneg %p281
      $region54: #{dit_forward.1} parent=11 // pred_check_branch
        %480 = sbr.rel (%p478) target = $region56
      $region55: #{dit_forward.1} parent=11 // pred_region
        _
      $region56: #{dit_forward.1} parent=11 // pred_fallthru
        _
      // Predicated region
      $region57: #{dit_forward.1} parent=11 // pred_check
        %p481 = pneg %p302
      $region58: #{dit_forward.1} parent=11 // pred_check_branch
        %483 = sbr.rel (%p481) target = $region60
      $region59: #{dit_forward.1} parent=11 // pred_region
        _
      $region60: #{dit_forward.1} parent=11 // pred_fallthru
        _
      // Predicated region
      $region61: #{dit_forward.1} parent=11 // pred_check
        %p484 = pneg %p323
      $region62: #{dit_forward.1} parent=11 // pred_check_branch
        %486 = sbr.rel (%p484) target = $region64
      $region63: #{dit_forward.1} parent=11 // pred_region
        _
      $region64: #{dit_forward.1} parent=11 // pred_fallthru
        _
      // Predicated region
      $region65: #{dit_forward.1} parent=11 // pred_check
        %p487 = pneg %p344
      $region66: #{dit_forward.1} parent=11 // pred_check_branch
        %489 = sbr.rel (%p487) target = $region68
      $region67: #{dit_forward.1} parent=11 // pred_region
        _
      $region68: #{dit_forward.1} parent=11 // pred_fallthru
        _
      // Predicated region
      $region69: #{dit_forward.1} parent=11 // pred_check
        %p490 = pneg %p365
      $region70: #{dit_forward.1} parent=11 // pred_check_branch
        %492 = sbr.rel (%p490) target = $region72
      $region71: #{dit_forward.1} parent=11 // pred_region
        _
      $region72: #{dit_forward.1} parent=11 // pred_fallthru
        _
      // Predicated region
      $region73: #{dit_forward.1} parent=11 // pred_check
        %p493 = pneg %p386
      $region74: #{dit_forward.1} parent=11 // pred_check_branch
        %495 = sbr.rel (%p493) target = $region76
      $region75: #{dit_forward.1} parent=11 // pred_region
        _
      $region76: #{dit_forward.1} parent=11 // pred_fallthru
        _
      // Predicated region
      $region77: #{dit_forward.1} parent=11 // pred_check
        %p496 = pneg %p407
      $region78: #{dit_forward.1} parent=11 // pred_check_branch
        %498 = sbr.rel (%p496) target = $region80
      $region79: #{dit_forward.1} parent=11 // pred_region
        _
      $region80: #{dit_forward.1} parent=11 // pred_fallthru
        _
    $region12: #{dit_forward.1} parent=5 // pred_fallthru
      _
    %p499 = scmp.lt.s32.totalorder %s24, 2
    // Predicated region
    $region81: #{dit_forward.1} parent=5 // pred_check
      %p500 = pneg %p499
    $region82: #{dit_forward.1} parent=5 // pred_check_branch
      %502 = sbr.rel (%p500) target = $region84
    $region83: #{dit_forward.1} parent=5 // pred_region
      // Predicated region
      $region85: #{dit_forward.1} parent=83 // pred_check
        %p503 = pneg %p44
      $region86: #{dit_forward.1} parent=83 // pred_check_branch
        %505 = sbr.rel (%p503) target = $region88
      $region87: #{dit_forward.1} parent=83 // pred_region
        %s506 = smul.u32 2, %s24
        %p507 = scmp.lt.s32.totalorder %s506, 3
        %s508 = scalar_select %p507, %s506, 3
        %s509 = smul.addr %s508, 8
        %s510 = scalar_lea.vmem %s0, %s509
        %s511 = smul.u32 2, %s24
      $region88: #{dit_forward.1} parent=83 // pred_fallthru
        _
    $region84: #{dit_forward.1} parent=5 // pred_fallthru
      _
    %p512 = scmp.le.s32.totalorder 1, %s24
    %p513 = scmp.lt.s32.totalorder %s24, 3
    %p514 = pnand %p512, %p513
    %p515 = pneg %p514
    // Predicated region
    $region89: #{dit_forward.1} parent=5 // pred_check
      _
    $region90: #{dit_forward.1} parent=5 // pred_check_branch
      %517 = sbr.rel (%p514) target = $region92
    $region91: #{dit_forward.1} parent=5 // pred_region
      %s518 = ssub.s32 %s24, 1
      %s519 = smul.u32 2, %s29
      %p520 = scmp.lt.s32.totalorder %s519, 3
      %s521 = scalar_select %p520, %s519, 3
      %s522 = smul.addr %s521, 8
      %s523 = scalar_lea.vmem %s0, %s522
      %p524 = pneg %p50
      %p525 = pneg %p47
      %p526 = pneg %p71
      %p527 = pneg %p68
      %p528 = pneg %p92
      %p529 = pneg %p89
      %p530 = pneg %p113
      %p531 = pneg %p110
      %p532 = pneg %p134
      %p533 = pneg %p131
      %p534 = pneg %p155
      %p535 = pneg %p152
      %p536 = pneg %p176
      %p537 = pneg %p173
      %p538 = pneg %p197
      %p539 = pneg %p194
      %p540 = pneg %p218
      %p541 = pneg %p215
      %p542 = pneg %p239
      %p543 = pneg %p236
      %p544 = pneg %p260
      %p545 = pneg %p257
      %p546 = pneg %p281
      %p547 = pneg %p278
      %p548 = pneg %p302
      %p549 = pneg %p299
      %p550 = pneg %p323
      %p551 = pneg %p320
      %p552 = pneg %p344
      %p553 = pneg %p341
      %p554 = pneg %p365
      %p555 = pneg %p362
      %p556 = pneg %p386
      %p557 = pneg %p383
      %p558 = pneg %p407
      %p559 = pneg %p404
      %p560 = pneg %p433
      %p561 = pneg %p430
      %s562 = smul.u32 2, %s29
      %p563 = scmp.lt.s32.totalorder %s562, 3
      %s564 = scalar_select %p563, %s562, 3
      %s565 = smul.addr %s564, 8
      %s566 = scalar_lea.vmem %s18, %s565
      %s567 = smul.u32 2, %s29
      %p568 = scmp.lt.s32.totalorder %s567, 3
      %s569 = scalar_select %p568, %s567, 3
      %s570 = smul.addr %s569, 8
      %s571 = scalar_lea.vmem %s0, %s570
      %s572 = smul.u32 2, %s29
      %s573 = smul.u32 2, %s29
      %p574 = scmp.lt.s32.totalorder %s573, 3
      %s575 = scalar_select %p574, %s573, 3
      %s576 = smul.addr %s575, 8
      %s577 = scalar_lea.vmem %s18, %s576
      %s578 = smul.u32 2, %s29
      %v580 = vld [vmem:[%s571] sm:$0xff]
      %v581 = vld [vmem:[%s571 + $0x8] sm:$0xff]
      %v582 = vld [vmem:[%s2] sm:$0xf]
      %v583 = vld [vmem:[%s2 + $0x4] sm:$0xf]
      %v584 = vld [vmem:[%s2 + $0x8] sm:$0xf]
      %v585 = vld [vmem:[%s2 + $0xc] sm:$0xf]
      %v586 = vld [vmem:[%s2 + $0x10] sm:$0xf]
      %v587 = vld [vmem:[%s2 + $0x14] sm:$0xf]
      %v588 = vld [vmem:[%s2 + $0x18] sm:$0xf]
      %v589 = vld [vmem:[%s2 + $0x1c] sm:$0xf]
      %v590 = vpack.c.bf16 %v581, %v580
      %v591 = vld [vmem:[%s3] sm:$0x1]
      %v593 = vlaneseq
      %v594 = vshrl.u32 %v593, 7
      %v595 = vsub.s32 0, %v594
      %v596 = vrot.slane %v591, %v595
      %v606 = vunpack.c.l.b16 %v582
      %v607 = vunpack.c.l.b16 %v583
      %v608 = vunpack.c.l.b16 %v584
      %v609 = vunpack.c.l.b16 %v585
      %v610 = vunpack.c.l.b16 %v586
      %v611 = vunpack.c.l.b16 %v587
      %v612 = vunpack.c.l.b16 %v588
      %v613 = vunpack.c.l.b16 %v589
      %v614 = vpack.c.b16 %v607, %v606
      %v615 = vpack.c.b16 %v609, %v608
      %v616 = vpack.c.b16 %v611, %v610
      %v617 = vpack.c.b16 %v613, %v612
      %vm622 = vcmask 523264
      %v624 = vsel %vm622, %v590, 0
      %626 = vmatprep.subr.bf16.mxu0 0
      %627 = vmatpush1.bf16.msra.mxu0 0
      %628 = vmatprep.subr.bf16.mxu0 0
      %629 = vmatpush1.bf16.msra.mxu0 0
      %630 = vmatprep.subr.bf16.mxu0 0
      %631 = vmatpush1.bf16.msra.mxu0 0
      %632 = vmatprep.subr.bf16.mxu0 0
      %633 = vmatpush1.bf16.msra.mxu0 0
      %634 = vmatprep.subr.bf16.mxu0 0
      %635 = vmatpush1.bf16.msra.mxu0 %v617
      %636 = vmatprep.subr.bf16.mxu0 0
      %637 = vmatpush1.bf16.msra.mxu0 %v616
      %638 = vmatprep.subr.bf16.mxu0 0
      %639 = vmatpush1.bf16.msra.mxu0 %v615
      %640 = vmatprep.subr.bf16.mxu0 0
      %641 = vmatpush1.bf16.msra.mxu0 %v614
      %642 = vmatprep.subr.bf16.mxu0 0
      %643 = vmatpush2.bf16.msra.mxu0 0
      %644 = vmatprep.subr.bf16.mxu0 0
      %645 = vmatpush2.bf16.msra.mxu0 0
      %646 = vmatprep.subr.bf16.mxu0 0
      %647 = vmatpush2.bf16.msra.mxu0 0
      %648 = vmatprep.subr.bf16.mxu0 0
      %649 = vmatpush2.bf16.msra.mxu0 0
      %650 = vmatprep.subr.bf16.mxu0 0
      %651 = vmatpush2.bf16.msra.mxu0 0
      %652 = vmatprep.subr.bf16.mxu0 0
      %653 = vmatpush2.bf16.msra.mxu0 0
      %654 = vmatprep.subr.bf16.mxu0 0
      %655 = vmatpush2.bf16.msra.mxu0 0
      %656 = vmatprep.subr.bf16.mxu0 0
      %657 = vmatpush2.bf16.msra.mxu0 0
      %658 = vmatprep.mubr.bf16.mxu0 0
      %659 = vmatmul.mubr.bf16.gmra.mxu0 %v624
      %v660 = vpop.f32.mrf.mxu0
      %v661 = vadd.f32 %v596, %v660
      %v662 = vpop.f32.mrf.mxu0
      %v663 = vpop.f32.mrf.mxu0
      %v664 = vadd.f32 %v596, %v663
      %v665 = vpop.f32.mrf.mxu0
      %666 = vdwg.mxu0
      %v667 = vld [vmem:[%s1] sm:$0xff]
      %v668 = vld [vmem:[%s1 + $0x8] sm:$0xff]
      %v669 = vadd.f32 %v661, %v667
      %v670 = vadd.f32 %v664, %v668
      %v671 = vld [vmem:[%s4] sm:$0x1]
      %v672 = vld [vmem:[%s5] sm:$0x1]
      %vm673 = vcmask 261120
      %v674 = vsel %vm673, %v669, 0.0
      %675 = vadd.xlane.f32.xlu0 %v674
      %v676 = vpop.xlane.xlu0 %675
      %v677 = vsel %vm673, %v670, 0.0
      %678 = vadd.xlane.f32.xlu0 %v677
      %v679 = vpop.xlane.xlu0 %678
      %v680 = vrcp.pop 32.0
      %v681 = vmul.f32 %v676, %v680
      %v682 = vmul.f32 %v679, %v680
      %v683 = vsub.f32 %v669, %v681
      %v684 = vsub.f32 %v670, %v682
      %v685 = vmul.f32 %v683, %v683
      %v686 = vmul.f32 %v684, %v684
      %v687 = vsel %vm673, %v685, 0.0
      %688 = vadd.xlane.f32.xlu0 %v687
      %v689 = vpop.xlane.xlu0 %688
      %v690 = vsel %vm673, %v686, 0.0
      %691 = vadd.xlane.f32.xlu0 %v690
      %v692 = vpop.xlane.xlu0 %691
      %v693 = vmul.f32 %v689, %v680
      %v694 = vmul.f32 %v692, %v680
      %v695 = vadd.f32 %v693, 1e-05
      %v696 = vadd.f32 %v694, 1e-05
      %v697 = vrsqrt.pop %v695
      %v698 = vrsqrt.pop %v696
      %v699 = vmul.f32 %v683, %v697
      %v700 = vmul.f32 %v684, %v698
      %v702 = vlaneseq
      %v703 = vshrl.u32 %v702, 7
      %v704 = vsub.s32 0, %v703
      %v705 = vrot.slane %v671, %v704
      %v707 = vmul.f32 %v699, %v705
      %v708 = vmul.f32 %v700, %v705
      %v710 = vlaneseq
      %v711 = vshrl.u32 %v710, 7
      %v712 = vsub.s32 0, %v711
      %v713 = vrot.slane %v672, %v712
      %v715 = vadd.f32 %v707, %v713
      %v716 = vadd.f32 %v708, %v713
      %v717 = vld [vmem:[%s6] sm:$0xf]
      %v718 = vld [vmem:[%s6 + $0x4] sm:$0xf]
      %v719 = vld [vmem:[%s6 + $0x8] sm:$0xf]
      %v720 = vld [vmem:[%s6 + $0xc] sm:$0xf]
      %v721 = vpack.c.bf16 %v716, %v715
      %v722 = vld [vmem:[%s7] sm:$0x1]
      %v724 = vlaneseq
      %v725 = vshrl.u32 %v724, 7
      %v726 = vsub.s32 0, %v725
      %v727 = vrot.slane %v722, %v726
      %v733 = vunpack.c.l.b16 %v717
      %v734 = vunpack.c.l.b16 %v718
      %v735 = vunpack.c.l.b16 %v719
      %v736 = vunpack.c.l.b16 %v720
      %v737 = vpack.c.b16 %v734, %v733
      %v738 = vpack.c.b16 %v736, %v735
      %v742 = vsel %vm673, %v721, 0
      %744 = vmatprep.subr.bf16.mxu0 0
      %745 = vmatpush1.bf16.msra.mxu0 0
      %746 = vmatprep.subr.bf16.mxu0 0
      %747 = vmatpush1.bf16.msra.mxu0 0
      %748 = vmatprep.subr.bf16.mxu0 0
      %749 = vmatpush1.bf16.msra.mxu0 0
      %750 = vmatprep.subr.bf16.mxu0 0
      %751 = vmatpush1.bf16.msra.mxu0 0
      %752 = vmatprep.subr.bf16.mxu0 0
      %753 = vmatpush1.bf16.msra.mxu0 0
      %754 = vmatprep.subr.bf16.mxu0 0
      %755 = vmatpush1.bf16.msra.mxu0 0
      %756 = vmatprep.subr.bf16.mxu0 0
      %757 = vmatpush1.bf16.msra.mxu0 %v738
      %758 = vmatprep.subr.bf16.mxu0 0
      %759 = vmatpush1.bf16.msra.mxu0 %v737
      %760 = vmatprep.subr.bf16.mxu0 0
      %761 = vmatpush2.bf16.msra.mxu0 0
      %762 = vmatprep.subr.bf16.mxu0 0
      %763 = vmatpush2.bf16.msra.mxu0 0
      %764 = vmatprep.subr.bf16.mxu0 0
      %765 = vmatpush2.bf16.msra.mxu0 0
      %766 = vmatprep.subr.bf16.mxu0 0
      %767 = vmatpush2.bf16.msra.mxu0 0
      %768 = vmatprep.subr.bf16.mxu0 0
      %769 = vmatpush2.bf16.msra.mxu0 0
      %770 = vmatprep.subr.bf16.mxu0 0
      %771 = vmatpush2.bf16.msra.mxu0 0
      %772 = vmatprep.subr.bf16.mxu0 0
      %773 = vmatpush2.bf16.msra.mxu0 0
      %774 = vmatprep.subr.bf16.mxu0 0
      %775 = vmatpush2.bf16.msra.mxu0 0
      %776 = vmatprep.mubr.bf16.mxu0 0
      %777 = vmatmul.mubr.bf16.gmra.mxu0 %v742
      %v778 = vpop.f32.mrf.mxu0
      %v779 = vadd.f32 %v727, %v778
      %v780 = vpop.f32.mrf.mxu0
      %v781 = vpop.f32.mrf.mxu0
      %v782 = vadd.f32 %v727, %v781
      %v783 = vpop.f32.mrf.mxu0
      %784 = vdwg.mxu0
      %v785 = vpack.c.bf16 %v782, %v779
      %787 = vrot.lane.b32.xlu0 %v785, 96
      %v788 = vpop.permute.xlu0 %787
      %vm789 = vcmask 64512
      %v791 = vsel %vm789, %v785, 0
      %v794 = vsel %vm789, %v788, 0
      %796 = vmatprep.subr.bf16.mxu0 0
      %797 = vmatpush1.bf16.xpose.msra.mxu0 0
      %798 = vmatprep.subr.bf16.mxu0 0
      %799 = vmatpush1.bf16.xpose.msra.mxu0 0
      %800 = vmatprep.subr.bf16.mxu0 0
      %801 = vmatpush1.bf16.xpose.msra.mxu0 0
      %802 = vmatprep.subr.bf16.mxu0 0
      %803 = vmatpush1.bf16.xpose.msra.mxu0 0
      %804 = vmatprep.subr.bf16.mxu0 0
      %805 = vmatpush1.bf16.xpose.msra.mxu0 0
      %806 = vmatprep.subr.bf16.mxu0 0
      %807 = vmatpush1.bf16.xpose.msra.mxu0 0
      %808 = vmatprep.subr.bf16.mxu0 0
      %809 = vmatpush1.bf16.xpose.msra.mxu0 0
      %810 = vmatprep.subr.bf16.mxu0 0
      %811 = vmatpush1.bf16.xpose.msra.mxu0 %v794
      %812 = vmatprep.subr.bf16.mxu0 0
      %813 = vmatpush2.bf16.xpose.msra.mxu0 0
      %814 = vmatprep.subr.bf16.mxu0 0
      %815 = vmatpush2.bf16.xpose.msra.mxu0 0
      %816 = vmatprep.subr.bf16.mxu0 0
      %817 = vmatpush2.bf16.xpose.msra.mxu0 0
      %818 = vmatprep.subr.bf16.mxu0 0
      %819 = vmatpush2.bf16.xpose.msra.mxu0 0
      %820 = vmatprep.subr.bf16.mxu0 0
      %821 = vmatpush2.bf16.xpose.msra.mxu0 0
      %822 = vmatprep.subr.bf16.mxu0 0
      %823 = vmatpush2.bf16.xpose.msra.mxu0 0
      %824 = vmatprep.subr.bf16.mxu0 0
      %825 = vmatpush2.bf16.xpose.msra.mxu0 0
      %826 = vmatprep.subr.bf16.mxu0 0
      %827 = vmatpush2.bf16.xpose.msra.mxu0 0
      %828 = vmatprep.mubr.bf16.mxu0 0
      %829 = vmatmul.mubr.bf16.gmra.mxu0 %v791
      %v830 = vpop.f32.mrf.mxu0
      %v831 = vadd.f32 0.0, %v830
      %v832 = vpop.f32.mrf.mxu0
      %v833 = vpop.f32.mrf.mxu0
      %v834 = vadd.f32 0.0, %v833
      %v835 = vpop.f32.mrf.mxu0
      %836 = vdwg.mxu0
      %v837 = vmul.f32 %v831, 0.35355338
      %v838 = vmul.f32 %v834, 0.35355338
      %vm839 = vcmask 130048
      %v840 = vsel %vm839, %v837, -inf
      %841 = vmax.xlane.f32.xlu0 %v840
      %v842 = vpop.xlane.xlu0 %841
      %v843 = vsel %vm839, %v838, -inf
      %844 = vmax.xlane.f32.xlu0 %v843
      %v845 = vpop.xlane.xlu0 %844
      %v846 = vsub.f32 %v837, %v842
      %v847 = vsub.f32 %v838, %v845
      %v848 = vmul.f32 %v846, 1.442695
      %v849 = vpow.pop %v848
      %v850 = vmul.f32 %v847, 1.442695
      %v851 = vpow.pop %v850
      %v852 = vsel %vm839, %v849, 0.0
      %853 = vadd.xlane.f32.xlu0 %v852
      %v854 = vpop.xlane.xlu0 %853
      %v855 = vsel %vm839, %v851, 0.0
      %856 = vadd.xlane.f32.xlu0 %v855
      %v857 = vpop.xlane.xlu0 %856
      %v858 = vrcp.pop %v854
      %v859 = vrcp.pop %v857
      %v860 = vmul.f32 %v849, %v858
      %v861 = vmul.f32 %v851, %v859
      %v862 = vpack.c.bf16 %v861, %v860
      %863 = vrot.lane.b32.xlu0 %v785, 64
      %v864 = vpop.permute.xlu0 %863
      %v867 = vsel %vm839, %v862, 0
      %869 = vmatprep.subr.bf16.mxu0 0
      %870 = vmatpush1.bf16.msra.mxu0 0
      %871 = vmatprep.subr.bf16.mxu0 0
      %872 = vmatpush1.bf16.msra.mxu0 0
      %873 = vmatprep.subr.bf16.mxu0 0
      %874 = vmatpush1.bf16.msra.mxu0 0
      %875 = vmatprep.subr.bf16.mxu0 0
      %876 = vmatpush1.bf16.msra.mxu0 0
      %877 = vmatprep.subr.bf16.mxu0 0
      %878 = vmatpush1.bf16.msra.mxu0 0
      %879 = vmatprep.subr.bf16.mxu0 0
      %880 = vmatpush1.bf16.msra.mxu0 0
      %881 = vmatprep.subr.bf16.mxu0 0
      %882 = vmatpush1.bf16.msra.mxu0 0
      %883 = vmatprep.subr.bf16.mxu0 0
      %884 = vmatpush1.bf16.msra.mxu0 %v864
      %885 = vmatprep.subr.bf16.mxu0 0
      %886 = vmatpush2.bf16.msra.mxu0 0
      %887 = vmatprep.subr.bf16.mxu0 0
      %888 = vmatpush2.bf16.msra.mxu0 0
      %889 = vmatprep.subr.bf16.mxu0 0
      %890 = vmatpush2.bf16.msra.mxu0 0
      %891 = vmatprep.subr.bf16.mxu0 0
      %892 = vmatpush2.bf16.msra.mxu0 0
      %893 = vmatprep.subr.bf16.mxu0 0
      %894 = vmatpush2.bf16.msra.mxu0 0
      %895 = vmatprep.subr.bf16.mxu0 0
      %896 = vmatpush2.bf16.msra.mxu0 0
      %897 = vmatprep.subr.bf16.mxu0 0
      %898 = vmatpush2.bf16.msra.mxu0 0
      %899 = vmatprep.subr.bf16.mxu0 0
      %900 = vmatpush2.bf16.msra.mxu0 0
      %901 = vmatprep.mubr.bf16.mxu0 0
      %902 = vmatmul.mubr.bf16.gmra.mxu0 %v867
      %v903 = vpop.f32.mrf.mxu0
      %v904 = vadd.f32 0.0, %v903
      %v905 = vpop.f32.mrf.mxu0
      %v906 = vpop.f32.mrf.mxu0
      %v907 = vadd.f32 0.0, %v906
      %v908 = vpop.f32.mrf.mxu0
      %909 = vdwg.mxu0
      %910 = vrot.lane.b32.xlu0 %v785, 120
      %v911 = vpop.permute.xlu0 %910
      %912 = vrot.lane.b32.xlu0 %v785, 88
      %v913 = vpop.permute.xlu0 %912
      %v915 = vsel %vm789, %v911, 0
      %v918 = vsel %vm789, %v913, 0
      %920 = vmatprep.subr.bf16.mxu0 0
      %921 = vmatpush1.bf16.xpose.msra.mxu0 0
      %922 = vmatprep.subr.bf16.mxu0 0
      %923 = vmatpush1.bf16.xpose.msra.mxu0 0
      %924 = vmatprep.subr.bf16.mxu0 0
      %925 = vmatpush1.bf16.xpose.msra.mxu0 0
      %926 = vmatprep.subr.bf16.mxu0 0
      %927 = vmatpush1.bf16.xpose.msra.mxu0 0
      %928 = vmatprep.subr.bf16.mxu0 0
      %929 = vmatpush1.bf16.xpose.msra.mxu0 0
      %930 = vmatprep.subr.bf16.mxu0 0
      %931 = vmatpush1.bf16.xpose.msra.mxu0 0
      %932 = vmatprep.subr.bf16.mxu0 0
      %933 = vmatpush1.bf16.xpose.msra.mxu0 0
      %934 = vmatprep.subr.bf16.mxu0 0
      %935 = vmatpush1.bf16.xpose.msra.mxu0 %v918
      %936 = vmatprep.subr.bf16.mxu0 0
      %937 = vmatpush2.bf16.xpose.msra.mxu0 0
      %938 = vmatprep.subr.bf16.mxu0 0
      %939 = vmatpush2.bf16.xpose.msra.mxu0 0
      %940 = vmatprep.subr.bf16.mxu0 0
      %941 = vmatpush2.bf16.xpose.msra.mxu0 0
      %942 = vmatprep.subr.bf16.mxu0 0
      %943 = vmatpush2.bf16.xpose.msra.mxu0 0
      %944 = vmatprep.subr.bf16.mxu0 0
      %945 = vmatpush2.bf16.xpose.msra.mxu0 0
      %946 = vmatprep.subr.bf16.mxu0 0
      %947 = vmatpush2.bf16.xpose.msra.mxu0 0
      %948 = vmatprep.subr.bf16.mxu0 0
      %949 = vmatpush2.bf16.xpose.msra.mxu0 0
      %950 = vmatprep.subr.bf16.mxu0 0
      %951 = vmatpush2.bf16.xpose.msra.mxu0 0
      %952 = vmatprep.mubr.bf16.mxu0 0
      %953 = vmatmul.mubr.bf16.gmra.mxu0 %v915
      %v954 = vpop.f32.mrf.mxu0
      %v955 = vadd.f32 0.0, %v954
      %v956 = vpop.f32.mrf.mxu0
      %v957 = vpop.f32.mrf.mxu0
      %v958 = vadd.f32 0.0, %v957
      %v959 = vpop.f32.mrf.mxu0
      %960 = vdwg.mxu0
      %v961 = vmul.f32 %v955, 0.35355338
      %v962 = vmul.f32 %v958, 0.35355338
      %v963 = vsel %vm839, %v961, -inf
      %964 = vmax.xlane.f32.xlu0 %v963
      %v965 = vpop.xlane.xlu0 %964
      %v966 = vsel %vm839, %v962, -inf
      %967 = vmax.xlane.f32.xlu0 %v966
      %v968 = vpop.xlane.xlu0 %967
      %v969 = vsub.f32 %v961, %v965
      %v970 = vsub.f32 %v962, %v968
      %v971 = vmul.f32 %v969, 1.442695
      %v972 = vpow.pop %v971
      %v973 = vmul.f32 %v970, 1.442695
      %v974 = vpow.pop %v973
      %v975 = vsel %vm839, %v972, 0.0
      %976 = vadd.xlane.f32.xlu0 %v975
      %v977 = vpop.xlane.xlu0 %976
      %v978 = vsel %vm839, %v974, 0.0
      %979 = vadd.xlane.f32.xlu0 %v978
      %v980 = vpop.xlane.xlu0 %979
      %v981 = vrcp.pop %v977
      %v982 = vrcp.pop %v980
      %v983 = vmul.f32 %v972, %v981
      %v984 = vmul.f32 %v974, %v982
      %v985 = vpack.c.bf16 %v984, %v983
      %986 = vrot.lane.b32.xlu0 %v785, 56
      %v987 = vpop.permute.xlu0 %986
      %v990 = vsel %vm839, %v985, 0
      %992 = vmatprep.subr.bf16.mxu0 0
      %993 = vmatpush1.bf16.msra.mxu0 0
      %994 = vmatprep.subr.bf16.mxu0 0
      %995 = vmatpush1.bf16.msra.mxu0 0
      %996 = vmatprep.subr.bf16.mxu0 0
      %997 = vmatpush1.bf16.msra.mxu0 0
      %998 = vmatprep.subr.bf16.mxu0 0
      %999 = vmatpush1.bf16.msra.mxu0 0
      %1000 = vmatprep.subr.bf16.mxu0 0
      %1001 = vmatpush1.bf16.msra.mxu0 0
      %1002 = vmatprep.subr.bf16.mxu0 0
      %1003 = vmatpush1.bf16.msra.mxu0 0
      %1004 = vmatprep.subr.bf16.mxu0 0
      %1005 = vmatpush1.bf16.msra.mxu0 0
      %1006 = vmatprep.subr.bf16.mxu0 0
      %1007 = vmatpush1.bf16.msra.mxu0 %v987
      %1008 = vmatprep.subr.bf16.mxu0 0
      %1009 = vmatpush2.bf16.msra.mxu0 0
      %1010 = vmatprep.subr.bf16.mxu0 0
      %1011 = vmatpush2.bf16.msra.mxu0 0
      %1012 = vmatprep.subr.bf16.mxu0 0
      %1013 = vmatpush2.bf16.msra.mxu0 0
      %1014 = vmatprep.subr.bf16.mxu0 0
      %1015 = vmatpush2.bf16.msra.mxu0 0
      %1016 = vmatprep.subr.bf16.mxu0 0
      %1017 = vmatpush2.bf16.msra.mxu0 0
      %1018 = vmatprep.subr.bf16.mxu0 0
      %1019 = vmatpush2.bf16.msra.mxu0 0
      %1020 = vmatprep.subr.bf16.mxu0 0
      %1021 = vmatpush2.bf16.msra.mxu0 0
      %1022 = vmatprep.subr.bf16.mxu0 0
      %1023 = vmatpush2.bf16.msra.mxu0 0
      %1024 = vmatprep.mubr.bf16.mxu0 0
      %1025 = vmatmul.mubr.bf16.gmra.mxu0 %v990
      %v1026 = vpop.f32.mrf.mxu0
      %v1027 = vadd.f32 0.0, %v1026
      %v1028 = vpop.f32.mrf.mxu0
      %v1029 = vpop.f32.mrf.mxu0
      %v1030 = vadd.f32 0.0, %v1029
      %v1031 = vpop.f32.mrf.mxu0
      %1032 = vdwg.mxu0
      %1033 = vrot.lane.b32.xlu0 %v785, 112
      %v1034 = vpop.permute.xlu0 %1033
      %1035 = vrot.lane.b32.xlu0 %v785, 80
      %v1036 = vpop.permute.xlu0 %1035
      %v1038 = vsel %vm789, %v1034, 0
      %v1041 = vsel %vm789, %v1036, 0
      %1043 = vmatprep.subr.bf16.mxu0 0
      %1044 = vmatpush1.bf16.xpose.msra.mxu0 0
      %1045 = vmatprep.subr.bf16.mxu0 0
      %1046 = vmatpush1.bf16.xpose.msra.mxu0 0
      %1047 = vmatprep.subr.bf16.mxu0 0
      %1048 = vmatpush1.bf16.xpose.msra.mxu0 0
      %1049 = vmatprep.subr.bf16.mxu0 0
      %1050 = vmatpush1.bf16.xpose.msra.mxu0 0
      %1051 = vmatprep.subr.bf16.mxu0 0
      %1052 = vmatpush1.bf16.xpose.msra.mxu0 0
      %1053 = vmatprep.subr.bf16.mxu0 0
      %1054 = vmatpush1.bf16.xpose.msra.mxu0 0
      %1055 = vmatprep.subr.bf16.mxu0 0
      %1056 = vmatpush1.bf16.xpose.msra.mxu0 0
      %1057 = vmatprep.subr.bf16.mxu0 0
      %1058 = vmatpush1.bf16.xpose.msra.mxu0 %v1041
      %1059 = vmatprep.subr.bf16.mxu0 0
      %1060 = vmatpush2.bf16.xpose.msra.mxu0 0
      %1061 = vmatprep.subr.bf16.mxu0 0
      %1062 = vmatpush2.bf16.xpose.msra.mxu0 0
      %1063 = vmatprep.subr.bf16.mxu0 0
      %1064 = vmatpush2.bf16.xpose.msra.mxu0 0
      %1065 = vmatprep.subr.bf16.mxu0 0
      %1066 = vmatpush2.bf16.xpose.msra.mxu0 0
      %1067 = vmatprep.subr.bf16.mxu0 0
      %1068 = vmatpush2.bf16.xpose.msra.mxu0 0
      %1069 = vmatprep.subr.bf16.mxu0 0
      %1070 = vmatpush2.bf16.xpose.msra.mxu0 0
      %1071 = vmatprep.subr.bf16.mxu0 0
      %1072 = vmatpush2.bf16.xpose.msra.mxu0 0
      %1073 = vmatprep.subr.bf16.mxu0 0
      %1074 = vmatpush2.bf16.xpose.msra.mxu0 0
      %1075 = vmatprep.mubr.bf16.mxu0 0
      %1076 = vmatmul.mubr.bf16.gmra.mxu0 %v1038
      %v1077 = vpop.f32.mrf.mxu0
      %v1078 = vadd.f32 0.0, %v1077
      %v1079 = vpop.f32.mrf.mxu0
      %v1080 = vpop.f32.mrf.mxu0
      %v1081 = vadd.f32 0.0, %v1080
      %v1082 = vpop.f32.mrf.mxu0
      %1083 = vdwg.mxu0
      %v1084 = vmul.f32 %v1078, 0.35355338
      %v1085 = vmul.f32 %v1081, 0.35355338
      %v1086 = vsel %vm839, %v1084, -inf
      %1087 = vmax.xlane.f32.xlu0 %v1086
      %v1088 = vpop.xlane.xlu0 %1087
      %v1089 = vsel %vm839, %v1085, -inf
      %1090 = vmax.xlane.f32.xlu0 %v1089
      %v1091 = vpop.xlane.xlu0 %1090
      %v1092 = vsub.f32 %v1084, %v1088
      %v1093 = vsub.f32 %v1085, %v1091
      %v1094 = vmul.f32 %v1092, 1.442695
      %v1095 = vpow.pop %v1094
      %v1096 = vmul.f32 %v1093, 1.442695
      %v1097 = vpow.pop %v1096
      %v1098 = vsel %vm839, %v1095, 0.0
      %1099 = vadd.xlane.f32.xlu0 %v1098
      %v1100 = vpop.xlane.xlu0 %1099
      %v1101 = vsel %vm839, %v1097, 0.0
      %1102 = vadd.xlane.f32.xlu0 %v1101
      %v1103 = vpop.xlane.xlu0 %1102
      %v1104 = vrcp.pop %v1100
      %v1105 = vrcp.pop %v1103
      %v1106 = vmul.f32 %v1095, %v1104
      %v1107 = vmul.f32 %v1097, %v1105
      %v1108 = vpack.c.bf16 %v1107, %v1106
      %1109 = vrot.lane.b32.xlu0 %v785, 48
      %v1110 = vpop.permute.xlu0 %1109
      %v1113 = vsel %vm839, %v1108, 0
      %1115 = vmatprep.subr.bf16.mxu0 0
      %1116 = vmatpush1.bf16.msra.mxu0 0
      %1117 = vmatprep.subr.bf16.mxu0 0
      %1118 = vmatpush1.bf16.msra.mxu0 0
      %1119 = vmatprep.subr.bf16.mxu0 0
      %1120 = vmatpush1.bf16.msra.mxu0 0
      %1121 = vmatprep.subr.bf16.mxu0 0
      %1122 = vmatpush1.bf16.msra.mxu0 0
      %1123 = vmatprep.subr.bf16.mxu0 0
      %1124 = vmatpush1.bf16.msra.mxu0 0
      %1125 = vmatprep.subr.bf16.mxu0 0
      %1126 = vmatpush1.bf16.msra.mxu0 0
      %1127 = vmatprep.subr.bf16.mxu0 0
      %1128 = vmatpush1.bf16.msra.mxu0 0
      %1129 = vmatprep.subr.bf16.mxu0 0
      %1130 = vmatpush1.bf16.msra.mxu0 %v1110
      %1131 = vmatprep.subr.bf16.mxu0 0
      %1132 = vmatpush2.bf16.msra.mxu0 0
      %1133 = vmatprep.subr.bf16.mxu0 0
      %1134 = vmatpush2.bf16.msra.mxu0 0
      %1135 = vmatprep.subr.bf16.mxu0 0
      %1136 = vmatpush2.bf16.msra.mxu0 0
      %1137 = vmatprep.subr.bf16.mxu0 0
      %1138 = vmatpush2.bf16.msra.mxu0 0
      %1139 = vmatprep.subr.bf16.mxu0 0
      %1140 = vmatpush2.bf16.msra.mxu0 0
      %1141 = vmatprep.subr.bf16.mxu0 0
      %1142 = vmatpush2.bf16.msra.mxu0 0
      %1143 = vmatprep.subr.bf16.mxu0 0
      %1144 = vmatpush2.bf16.msra.mxu0 0
      %1145 = vmatprep.subr.bf16.mxu0 0
      %1146 = vmatpush2.bf16.msra.mxu0 0
      %1147 = vmatprep.mubr.bf16.mxu0 0
      %1148 = vmatmul.mubr.bf16.gmra.mxu0 %v1113
      %v1149 = vpop.f32.mrf.mxu0
      %v1150 = vadd.f32 0.0, %v1149
      %v1151 = vpop.f32.mrf.mxu0
      %v1152 = vpop.f32.mrf.mxu0
      %v1153 = vadd.f32 0.0, %v1152
      %v1154 = vpop.f32.mrf.mxu0
      %1155 = vdwg.mxu0
      %1156 = vrot.lane.b32.xlu0 %v785, 104
      %v1157 = vpop.permute.xlu0 %1156
      %1158 = vrot.lane.b32.xlu0 %v785, 72
      %v1159 = vpop.permute.xlu0 %1158
      %v1161 = vsel %vm789, %v1157, 0
      %v1164 = vsel %vm789, %v1159, 0
      %1166 = vmatprep.subr.bf16.mxu0 0
      %1167 = vmatpush1.bf16.xpose.msra.mxu0 0
      %1168 = vmatprep.subr.bf16.mxu0 0
      %1169 = vmatpush1.bf16.xpose.msra.mxu0 0
      %1170 = vmatprep.subr.bf16.mxu0 0
      %1171 = vmatpush1.bf16.xpose.msra.mxu0 0
      %1172 = vmatprep.subr.bf16.mxu0 0
      %1173 = vmatpush1.bf16.xpose.msra.mxu0 0
      %1174 = vmatprep.subr.bf16.mxu0 0
      %1175 = vmatpush1.bf16.xpose.msra.mxu0 0
      %1176 = vmatprep.subr.bf16.mxu0 0
      %1177 = vmatpush1.bf16.xpose.msra.mxu0 0
      %1178 = vmatprep.subr.bf16.mxu0 0
      %1179 = vmatpush1.bf16.xpose.msra.mxu0 0
      %1180 = vmatprep.subr.bf16.mxu0 0
      %1181 = vmatpush1.bf16.xpose.msra.mxu0 %v1164
      %1182 = vmatprep.subr.bf16.mxu0 0
      %1183 = vmatpush2.bf16.xpose.msra.mxu0 0
      %1184 = vmatprep.subr.bf16.mxu0 0
      %1185 = vmatpush2.bf16.xpose.msra.mxu0 0
      %1186 = vmatprep.subr.bf16.mxu0 0
      %1187 = vmatpush2.bf16.xpose.msra.mxu0 0
      %1188 = vmatprep.subr.bf16.mxu0 0
      %1189 = vmatpush2.bf16.xpose.msra.mxu0 0
      %1190 = vmatprep.subr.bf16.mxu0 0
      %1191 = vmatpush2.bf16.xpose.msra.mxu0 0
      %1192 = vmatprep.subr.bf16.mxu0 0
      %1193 = vmatpush2.bf16.xpose.msra.mxu0 0
      %1194 = vmatprep.subr.bf16.mxu0 0
      %1195 = vmatpush2.bf16.xpose.msra.mxu0 0
      %1196 = vmatprep.subr.bf16.mxu0 0
      %1197 = vmatpush2.bf16.xpose.msra.mxu0 0
      %1198 = vmatprep.mubr.bf16.mxu0 0
      %1199 = vmatmul.mubr.bf16.gmra.mxu0 %v1161
      %v1200 = vpop.f32.mrf.mxu0
      %v1201 = vadd.f32 0.0, %v1200
      %v1202 = vpop.f32.mrf.mxu0
      %v1203 = vpop.f32.mrf.mxu0
      %v1204 = vadd.f32 0.0, %v1203
      %v1205 = vpop.f32.mrf.mxu0
      %1206 = vdwg.mxu0
      %v1207 = vmul.f32 %v1201, 0.35355338
      %v1208 = vmul.f32 %v1204, 0.35355338
      %v1209 = vsel %vm839, %v1207, -inf
      %1210 = vmax.xlane.f32.xlu0 %v1209
      %v1211 = vpop.xlane.xlu0 %1210
      %v1212 = vsel %vm839, %v1208, -inf
      %1213 = vmax.xlane.f32.xlu0 %v1212
      %v1214 = vpop.xlane.xlu0 %1213
      %v1215 = vsub.f32 %v1207, %v1211
      %v1216 = vsub.f32 %v1208, %v1214
      %v1217 = vmul.f32 %v1215, 1.442695
      %v1218 = vpow.pop %v1217
      %v1219 = vmul.f32 %v1216, 1.442695
      %v1220 = vpow.pop %v1219
      %v1221 = vsel %vm839, %v1218, 0.0
      %1222 = vadd.xlane.f32.xlu0 %v1221
      %v1223 = vpop.xlane.xlu0 %1222
      %v1224 = vsel %vm839, %v1220, 0.0
      %1225 = vadd.xlane.f32.xlu0 %v1224
      %v1226 = vpop.xlane.xlu0 %1225
      %v1227 = vrcp.pop %v1223
      %v1228 = vrcp.pop %v1226
      %v1229 = vmul.f32 %v1218, %v1227
      %v1230 = vmul.f32 %v1220, %v1228
      %v1231 = vpack.c.bf16 %v1230, %v1229
      %1232 = vrot.lane.b32.xlu0 %v785, 40
      %v1233 = vpop.permute.xlu0 %1232
      %v1236 = vsel %vm839, %v1231, 0
      %1238 = vmatprep.subr.bf16.mxu0 0
      %1239 = vmatpush1.bf16.msra.mxu0 0
      %1240 = vmatprep.subr.bf16.mxu0 0
      %1241 = vmatpush1.bf16.msra.mxu0 0
      %1242 = vmatprep.subr.bf16.mxu0 0
      %1243 = vmatpush1.bf16.msra.mxu0 0
      %1244 = vmatprep.subr.bf16.mxu0 0
      %1245 = vmatpush1.bf16.msra.mxu0 0
      %1246 = vmatprep.subr.bf16.mxu0 0
      %1247 = vmatpush1.bf16.msra.mxu0 0
      %1248 = vmatprep.subr.bf16.mxu0 0
      %1249 = vmatpush1.bf16.msra.mxu0 0
      %1250 = vmatprep.subr.bf16.mxu0 0
      %1251 = vmatpush1.bf16.msra.mxu0 0
      %1252 = vmatprep.subr.bf16.mxu0 0
      %1253 = vmatpush1.bf16.msra.mxu0 %v1233
      %1254 = vmatprep.subr.bf16.mxu0 0
      %1255 = vmatpush2.bf16.msra.mxu0 0
      %1256 = vmatprep.subr.bf16.mxu0 0
      %1257 = vmatpush2.bf16.msra.mxu0 0
      %1258 = vmatprep.subr.bf16.mxu0 0
      %1259 = vmatpush2.bf16.msra.mxu0 0
      %1260 = vmatprep.subr.bf16.mxu0 0
      %1261 = vmatpush2.bf16.msra.mxu0 0
      %1262 = vmatprep.subr.bf16.mxu0 0
      %1263 = vmatpush2.bf16.msra.mxu0 0
      %1264 = vmatprep.subr.bf16.mxu0 0
      %1265 = vmatpush2.bf16.msra.mxu0 0
      %1266 = vmatprep.subr.bf16.mxu0 0
      %1267 = vmatpush2.bf16.msra.mxu0 0
      %1268 = vmatprep.subr.bf16.mxu0 0
      %1269 = vmatpush2.bf16.msra.mxu0 0
      %1270 = vmatprep.mubr.bf16.mxu0 0
      %1271 = vmatmul.mubr.bf16.gmra.mxu0 %v1236
      %v1272 = vpop.f32.mrf.mxu0
      %v1273 = vadd.f32 0.0, %v1272
      %v1274 = vpop.f32.mrf.mxu0
      %v1275 = vpop.f32.mrf.mxu0
      %v1276 = vadd.f32 0.0, %v1275
      %v1277 = vpop.f32.mrf.mxu0
      %1278 = vdwg.mxu0
      %1281 = vrot.lane.b32.xlu0 %v1027, 8
      %v1282 = vpop.permute.xlu0 %1281
      %1283 = vrot.lane.b32.xlu0 %v1030, 8
      %v1284 = vpop.permute.xlu0 %1283
      %1289 = vrot.lane.b32.xlu0 %v1150, 16
      %v1290 = vpop.permute.xlu0 %1289
      %1291 = vrot.lane.b32.xlu0 %v1153, 16
      %v1292 = vpop.permute.xlu0 %1291
      %1297 = vrot.lane.b32.xlu0 %v1273, 24
      %v1298 = vpop.permute.xlu0 %1297
      %1299 = vrot.lane.b32.xlu0 %v1276, 24
      %v1300 = vpop.permute.xlu0 %1299
      %v1303 = vsel %vm789, %v904, %v1282
      %v1304 = vsel %vm789, %v907, %v1284
      %v1305 = vsel %vm839, %v1303, %v1290
      %v1306 = vsel %vm839, %v1304, %v1292
      %vm1307 = vcmask 195584
      %v1308 = vsel %vm1307, %v1305, %v1298
      %v1309 = vsel %vm1307, %v1306, %v1300
      %v1310 = vld [vmem:[%s8] sm:$0xf]
      %v1311 = vld [vmem:[%s8 + $0x4] sm:$0xf]
      %v1312 = vld [vmem:[%s8 + $0x8] sm:$0xf]
      %v1313 = vld [vmem:[%s8 + $0xc] sm:$0xf]
      %v1314 = vpack.c.bf16 %v1309, %v1308
      %v1315 = vld [vmem:[%s9] sm:$0x1]
      %v1317 = vlaneseq
      %v1318 = vshrl.u32 %v1317, 7
      %v1319 = vsub.s32 0, %v1318
      %v1320 = vrot.slane %v1315, %v1319
      %v1326 = vunpack.c.l.b16 %v1310
      %v1327 = vunpack.c.l.b16 %v1311
      %v1328 = vunpack.c.l.b16 %v1312
      %v1329 = vunpack.c.l.b16 %v1313
      %v1330 = vpack.c.b16 %v1327, %v1326
      %v1331 = vpack.c.b16 %v1329, %v1328
      %v1335 = vsel %vm673, %v1314, 0
      %1337 = vmatprep.subr.bf16.mxu0 0
      %1338 = vmatpush1.bf16.msra.mxu0 0
      %1339 = vmatprep.subr.bf16.mxu0 0
      %1340 = vmatpush1.bf16.msra.mxu0 0
      %1341 = vmatprep.subr.bf16.mxu0 0
      %1342 = vmatpush1.bf16.msra.mxu0 0
      %1343 = vmatprep.subr.bf16.mxu0 0
      %1344 = vmatpush1.bf16.msra.mxu0 0
      %1345 = vmatprep.subr.bf16.mxu0 0
      %1346 = vmatpush1.bf16.msra.mxu0 0
      %1347 = vmatprep.subr.bf16.mxu0 0
      %1348 = vmatpush1.bf16.msra.mxu0 0
      %1349 = vmatprep.subr.bf16.mxu0 0
      %1350 = vmatpush1.bf16.msra.mxu0 %v1331
      %1351 = vmatprep.subr.bf16.mxu0 0
      %1352 = vmatpush1.bf16.msra.mxu0 %v1330
      %1353 = vmatprep.subr.bf16.mxu0 0
      %1354 = vmatpush2.bf16.msra.mxu0 0
      %1355 = vmatprep.subr.bf16.mxu0 0
      %1356 = vmatpush2.bf16.msra.mxu0 0
      %1357 = vmatprep.subr.bf16.mxu0 0
      %1358 = vmatpush2.bf16.msra.mxu0 0
      %1359 = vmatprep.subr.bf16.mxu0 0
      %1360 = vmatpush2.bf16.msra.mxu0 0
      %1361 = vmatprep.subr.bf16.mxu0 0
      %1362 = vmatpush2.bf16.msra.mxu0 0
      %1363 = vmatprep.subr.bf16.mxu0 0
      %1364 = vmatpush2.bf16.msra.mxu0 0
      %1365 = vmatprep.subr.bf16.mxu0 0
      %1366 = vmatpush2.bf16.msra.mxu0 0
      %1367 = vmatprep.subr.bf16.mxu0 0
      %1368 = vmatpush2.bf16.msra.mxu0 0
      %1369 = vmatprep.mubr.bf16.mxu0 0
      %1370 = vmatmul.mubr.bf16.gmra.mxu0 %v1335
      %v1371 = vpop.f32.mrf.mxu0
      %v1372 = vadd.f32 %v1320, %v1371
      %v1373 = vpop.f32.mrf.mxu0
      %v1374 = vpop.f32.mrf.mxu0
      %v1375 = vadd.f32 %v1320, %v1374
      %v1376 = vpop.f32.mrf.mxu0
      %1377 = vdwg.mxu0
      %v1378 = vadd.f32 %v669, %v1372
      %v1379 = vadd.f32 %v670, %v1375
      %v1380 = vld [vmem:[%s10] sm:$0x1]
      %v1381 = vld [vmem:[%s11] sm:$0x1]
      %v1382 = vsel %vm673, %v1378, 0.0
      %1383 = vadd.xlane.f32.xlu0 %v1382
      %v1384 = vpop.xlane.xlu0 %1383
      %v1385 = vsel %vm673, %v1379, 0.0
      %1386 = vadd.xlane.f32.xlu0 %v1385
      %v1387 = vpop.xlane.xlu0 %1386
      %v1388 = vmul.f32 %v1384, %v680
      %v1389 = vmul.f32 %v1387, %v680
      %v1390 = vsub.f32 %v1378, %v1388
      %v1391 = vsub.f32 %v1379, %v1389
      %v1392 = vmul.f32 %v1390, %v1390
      %v1393 = vmul.f32 %v1391, %v1391
      %v1394 = vsel %vm673, %v1392, 0.0
      %1395 = vadd.xlane.f32.xlu0 %v1394
      %v1396 = vpop.xlane.xlu0 %1395
      %v1397 = vsel %vm673, %v1393, 0.0
      %1398 = vadd.xlane.f32.xlu0 %v1397
      %v1399 = vpop.xlane.xlu0 %1398
      %v1400 = vmul.f32 %v1396, %v680
      %v1401 = vmul.f32 %v1399, %v680
      %v1402 = vadd.f32 %v1400, 1e-05
      %v1403 = vadd.f32 %v1401, 1e-05
      %v1404 = vrsqrt.pop %v1402
      %v1405 = vrsqrt.pop %v1403
      %v1406 = vmul.f32 %v1390, %v1404
      %v1407 = vmul.f32 %v1391, %v1405
      %v1409 = vlaneseq
      %v1410 = vshrl.u32 %v1409, 7
      %v1411 = vsub.s32 0, %v1410
      %v1412 = vrot.slane %v1380, %v1411
      %v1414 = vmul.f32 %v1406, %v1412
      %v1415 = vmul.f32 %v1407, %v1412
      %v1417 = vlaneseq
      %v1418 = vshrl.u32 %v1417, 7
      %v1419 = vsub.s32 0, %v1418
      %v1420 = vrot.slane %v1381, %v1419
      %v1422 = vadd.f32 %v1414, %v1420
      %v1423 = vadd.f32 %v1415, %v1420
      %v1424 = vld [vmem:[%s12] sm:$0xf]
      %v1425 = vld [vmem:[%s12 + $0x4] sm:$0xf]
      %v1426 = vld [vmem:[%s12 + $0x8] sm:$0xf]
      %v1427 = vld [vmem:[%s12 + $0xc] sm:$0xf]
      %v1428 = vpack.c.bf16 %v1423, %v1422
      %v1429 = vld [vmem:[%s13] sm:$0x1]
      %v1431 = vlaneseq
      %v1432 = vshrl.u32 %v1431, 7
      %v1433 = vsub.s32 0, %v1432
      %v1434 = vrot.slane %v1429, %v1433
      %v1440 = vunpack.c.l.b16 %v1424
      %v1441 = vunpack.c.l.b16 %v1425
      %v1442 = vunpack.c.l.b16 %v1426
      %v1443 = vunpack.c.l.b16 %v1427
      %v1444 = vpack.c.b16 %v1441, %v1440
      %v1445 = vpack.c.b16 %v1443, %v1442
      %v1449 = vsel %vm673, %v1428, 0
      %1451 = vmatprep.subr.bf16.mxu0 0
      %1452 = vmatpush1.bf16.msra.mxu0 0
      %1453 = vmatprep.subr.bf16.mxu0 0
      %1454 = vmatpush1.bf16.msra.mxu0 0
      %1455 = vmatprep.subr.bf16.mxu0 0
      %1456 = vmatpush1.bf16.msra.mxu0 0
      %1457 = vmatprep.subr.bf16.mxu0 0
      %1458 = vmatpush1.bf16.msra.mxu0 0
      %1459 = vmatprep.subr.bf16.mxu0 0
      %1460 = vmatpush1.bf16.msra.mxu0 0
      %1461 = vmatprep.subr.bf16.mxu0 0
      %1462 = vmatpush1.bf16.msra.mxu0 0
      %1463 = vmatprep.subr.bf16.mxu0 0
      %1464 = vmatpush1.bf16.msra.mxu0 %v1445
      %1465 = vmatprep.subr.bf16.mxu0 0
      %1466 = vmatpush1.bf16.msra.mxu0 %v1444
      %1467 = vmatprep.subr.bf16.mxu0 0
      %1468 = vmatpush2.bf16.msra.mxu0 0
      %1469 = vmatprep.subr.bf16.mxu0 0
      %1470 = vmatpush2.bf16.msra.mxu0 0
      %1471 = vmatprep.subr.bf16.mxu0 0
      %1472 = vmatpush2.bf16.msra.mxu0 0
      %1473 = vmatprep.subr.bf16.mxu0 0
      %1474 = vmatpush2.bf16.msra.mxu0 0
      %1475 = vmatprep.subr.bf16.mxu0 0
      %1476 = vmatpush2.bf16.msra.mxu0 0
      %1477 = vmatprep.subr.bf16.mxu0 0
      %1478 = vmatpush2.bf16.msra.mxu0 0
      %1479 = vmatprep.subr.bf16.mxu0 0
      %1480 = vmatpush2.bf16.msra.mxu0 0
      %1481 = vmatprep.subr.bf16.mxu0 0
      %1482 = vmatpush2.bf16.msra.mxu0 0
      %1483 = vmatprep.mubr.bf16.mxu0 0
      %1484 = vmatmul.mubr.bf16.gmra.mxu0 %v1449
      %v1485 = vpop.f32.mrf.mxu0
      %v1486 = vadd.f32 %v1434, %v1485
      %v1487 = vpop.f32.mrf.mxu0
      %v1488 = vpop.f32.mrf.mxu0
      %v1489 = vadd.f32 %v1434, %v1488
      %v1490 = vpop.f32.mrf.mxu0
      %1491 = vdwg.mxu0
      %v1492 = vmul.f32 %v1486, %v1486
      %v1493 = vmul.f32 %v1489, %v1489
      %v1494 = vmul.f32 %v1486, %v1492
      %v1495 = vmul.f32 %v1489, %v1493
      %v1496 = vmul.f32 %v1494, 0.044715
      %v1497 = vmul.f32 %v1495, 0.044715
      %v1498 = vadd.f32 %v1486, %v1496
      %v1499 = vadd.f32 %v1489, %v1497
      %v1500 = vmul.f32 %v1498, 0.7978846
      %v1501 = vmul.f32 %v1499, 0.7978846
      %v1502 = vtanh.pop %v1500
      %v1503 = vtanh.pop %v1501
      %v1504 = vadd.f32 %v1502, 1.0
      %v1505 = vadd.f32 %v1503, 1.0
      %v1506 = vmul.f32 %v1504, 0.5
      %v1507 = vmul.f32 %v1505, 0.5
      %v1508 = vmul.f32 %v1486, %v1506
      %v1509 = vmul.f32 %v1489, %v1507
      %v1510 = vld [vmem:[%s14] sm:$0xf]
      %v1511 = vld [vmem:[%s14 + $0x4] sm:$0xf]
      %v1512 = vld [vmem:[%s14 + $0x8] sm:$0xf]
      %v1513 = vld [vmem:[%s14 + $0xc] sm:$0xf]
      %v1514 = vld [vmem:[%s14 + $0x10] sm:$0xf]
      %v1515 = vld [vmem:[%s14 + $0x14] sm:$0xf]
      %v1516 = vld [vmem:[%s14 + $0x18] sm:$0xf]
      %v1517 = vld [vmem:[%s14 + $0x1c] sm:$0xf]
      %v1518 = vpack.c.bf16 %v1509, %v1508
      %v1519 = vld [vmem:[%s15] sm:$0x1]
      %v1521 = vlaneseq
      %v1522 = vshrl.u32 %v1521, 7
      %v1523 = vsub.s32 0, %v1522
      %v1524 = vrot.slane %v1519, %v1523
      %v1534 = vunpack.c.l.b16 %v1510
      %v1535 = vunpack.c.l.b16 %v1511
      %v1536 = vunpack.c.l.b16 %v1512
      %v1537 = vunpack.c.l.b16 %v1513
      %v1538 = vunpack.c.l.b16 %v1514
      %v1539 = vunpack.c.l.b16 %v1515
      %v1540 = vunpack.c.l.b16 %v1516
      %v1541 = vunpack.c.l.b16 %v1517
      %v1542 = vpack.c.b16 %v1535, %v1534
      %v1543 = vpack.c.b16 %v1537, %v1536
      %v1544 = vpack.c.b16 %v1539, %v1538
      %v1545 = vpack.c.b16 %v1541, %v1540
      %v1551 = vsel %vm622, %v1518, 0
      %1553 = vmatprep.subr.bf16.mxu0 0
      %1554 = vmatpush1.bf16.msra.mxu0 0
      %1555 = vmatprep.subr.bf16.mxu0 0
      %1556 = vmatpush1.bf16.msra.mxu0 0
      %1557 = vmatprep.subr.bf16.mxu0 0
      %1558 = vmatpush1.bf16.msra.mxu0 0
      %1559 = vmatprep.subr.bf16.mxu0 0
      %1560 = vmatpush1.bf16.msra.mxu0 0
      %1561 = vmatprep.subr.bf16.mxu0 0
      %1562 = vmatpush1.bf16.msra.mxu0 %v1545
      %1563 = vmatprep.subr.bf16.mxu0 0
      %1564 = vmatpush1.bf16.msra.mxu0 %v1544
      %1565 = vmatprep.subr.bf16.mxu0 0
      %1566 = vmatpush1.bf16.msra.mxu0 %v1543
      %1567 = vmatprep.subr.bf16.mxu0 0
      %1568 = vmatpush1.bf16.msra.mxu0 %v1542
      %1569 = vmatprep.subr.bf16.mxu0 0
      %1570 = vmatpush2.bf16.msra.mxu0 0
      %1571 = vmatprep.subr.bf16.mxu0 0
      %1572 = vmatpush2.bf16.msra.mxu0 0
      %1573 = vmatprep.subr.bf16.mxu0 0
      %1574 = vmatpush2.bf16.msra.mxu0 0
      %1575 = vmatprep.subr.bf16.mxu0 0
      %1576 = vmatpush2.bf16.msra.mxu0 0
      %1577 = vmatprep.subr.bf16.mxu0 0
      %1578 = vmatpush2.bf16.msra.mxu0 0
      %1579 = vmatprep.subr.bf16.mxu0 0
      %1580 = vmatpush2.bf16.msra.mxu0 0
      %1581 = vmatprep.subr.bf16.mxu0 0
      %1582 = vmatpush2.bf16.msra.mxu0 0
      %1583 = vmatprep.subr.bf16.mxu0 0
      %1584 = vmatpush2.bf16.msra.mxu0 0
      %1585 = vmatprep.mubr.bf16.mxu0 0
      %1586 = vmatmul.mubr.bf16.gmra.mxu0 %v1551
      %v1587 = vpop.f32.mrf.mxu0
      %v1588 = vadd.f32 %v1524, %v1587
      %v1589 = vpop.f32.mrf.mxu0
      %v1590 = vpop.f32.mrf.mxu0
      %v1591 = vadd.f32 %v1524, %v1590
      %v1592 = vpop.f32.mrf.mxu0
      %1593 = vdwg.mxu0
      %v1594 = vadd.f32 %v1378, %v1588
      %v1595 = vadd.f32 %v1379, %v1591
      %s1596 = scalar_lea.vmem %s4, 1
      %v1597 = vld [vmem:[%s1596] sm:$0x1]
      %s1598 = scalar_lea.vmem %s5, 1
      %v1599 = vld [vmem:[%s1598] sm:$0x1]
      %v1600 = vsel %vm673, %v1594, 0.0
      %1601 = vadd.xlane.f32.xlu0 %v1600
      %v1602 = vpop.xlane.xlu0 %1601
      %v1603 = vsel %vm673, %v1595, 0.0
      %1604 = vadd.xlane.f32.xlu0 %v1603
      %v1605 = vpop.xlane.xlu0 %1604
      %v1606 = vmul.f32 %v1602, %v680
      %v1607 = vmul.f32 %v1605, %v680
      %v1608 = vsub.f32 %v1594, %v1606
      %v1609 = vsub.f32 %v1595, %v1607
      %v1610 = vmul.f32 %v1608, %v1608
      %v1611 = vmul.f32 %v1609, %v1609
      %v1612 = vsel %vm673, %v1610, 0.0
      %1613 = vadd.xlane.f32.xlu0 %v1612
      %v1614 = vpop.xlane.xlu0 %1613
      %v1615 = vsel %vm673, %v1611, 0.0
      %1616 = vadd.xlane.f32.xlu0 %v1615
      %v1617 = vpop.xlane.xlu0 %1616
      %v1618 = vmul.f32 %v1614, %v680
      %v1619 = vmul.f32 %v1617, %v680
      %v1620 = vadd.f32 %v1618, 1e-05
      %v1621 = vadd.f32 %v1619, 1e-05
      %v1622 = vrsqrt.pop %v1620
      %v1623 = vrsqrt.pop %v1621
      %v1624 = vmul.f32 %v1608, %v1622
      %v1625 = vmul.f32 %v1609, %v1623
      %v1627 = vlaneseq
      %v1628 = vshrl.u32 %v1627, 7
      %v1629 = vsub.s32 0, %v1628
      %v1630 = vrot.slane %v1597, %v1629
      %v1632 = vmul.f32 %v1624, %v1630
      %v1633 = vmul.f32 %v1625, %v1630
      %v1635 = vlaneseq
      %v1636 = vshrl.u32 %v1635, 7
      %v1637 = vsub.s32 0, %v1636
      %v1638 = vrot.slane %v1599, %v1637
      %v1640 = vadd.f32 %v1632, %v1638
      %v1641 = vadd.f32 %v1633, %v1638
      %s1642 = scalar_lea.vmem %s6, 16
      %v1643 = vld [vmem:[%s1642] sm:$0xf]
      %v1644 = vld [vmem:[%s1642 + $0x4] sm:$0xf]
      %v1645 = vld [vmem:[%s1642 + $0x8] sm:$0xf]
      %v1646 = vld [vmem:[%s1642 + $0xc] sm:$0xf]
      %v1647 = vpack.c.bf16 %v1641, %v1640
      %s1648 = scalar_lea.vmem %s7, 1
      %v1649 = vld [vmem:[%s1648] sm:$0x1]
      %v1651 = vlaneseq
      %v1652 = vshrl.u32 %v1651, 7
      %v1653 = vsub.s32 0, %v1652
      %v1654 = vrot.slane %v1649, %v1653
      %v1660 = vunpack.c.l.b16 %v1643
      %v1661 = vunpack.c.l.b16 %v1644
      %v1662 = vunpack.c.l.b16 %v1645
      %v1663 = vunpack.c.l.b16 %v1646
      %v1664 = vpack.c.b16 %v1661, %v1660
      %v1665 = vpack.c.b16 %v1663, %v1662
      %v1669 = vsel %vm673, %v1647, 0
      %1671 = vmatprep.subr.bf16.mxu0 0
      %1672 = vmatpush1.bf16.msra.mxu0 0
      %1673 = vmatprep.subr.bf16.mxu0 0
      %1674 = vmatpush1.bf16.msra.mxu0 0
      %1675 = vmatprep.subr.bf16.mxu0 0
      %1676 = vmatpush1.bf16.msra.mxu0 0
      %1677 = vmatprep.subr.bf16.mxu0 0
      %1678 = vmatpush1.bf16.msra.mxu0 0
      %1679 = vmatprep.subr.bf16.mxu0 0
      %1680 = vmatpush1.bf16.msra.mxu0 0
      %1681 = vmatprep.subr.bf16.mxu0 0
      %1682 = vmatpush1.bf16.msra.mxu0 0
      %1683 = vmatprep.subr.bf16.mxu0 0
      %1684 = vmatpush1.bf16.msra.mxu0 %v1665
      %1685 = vmatprep.subr.bf16.mxu0 0
      %1686 = vmatpush1.bf16.msra.mxu0 %v1664
      %1687 = vmatprep.subr.bf16.mxu0 0
      %1688 = vmatpush2.bf16.msra.mxu0 0
      %1689 = vmatprep.subr.bf16.mxu0 0
      %1690 = vmatpush2.bf16.msra.mxu0 0
      %1691 = vmatprep.subr.bf16.mxu0 0
      %1692 = vmatpush2.bf16.msra.mxu0 0
      %1693 = vmatprep.subr.bf16.mxu0 0
      %1694 = vmatpush2.bf16.msra.mxu0 0
      %1695 = vmatprep.subr.bf16.mxu0 0
      %1696 = vmatpush2.bf16.msra.mxu0 0
      %1697 = vmatprep.subr.bf16.mxu0 0
      %1698 = vmatpush2.bf16.msra.mxu0 0
      %1699 = vmatprep.subr.bf16.mxu0 0
      %1700 = vmatpush2.bf16.msra.mxu0 0
      %1701 = vmatprep.subr.bf16.mxu0 0
      %1702 = vmatpush2.bf16.msra.mxu0 0
      %1703 = vmatprep.mubr.bf16.mxu0 0
      %1704 = vmatmul.mubr.bf16.gmra.mxu0 %v1669
      %v1705 = vpop.f32.mrf.mxu0
      %v1706 = vadd.f32 %v1654, %v1705
      %v1707 = vpop.f32.mrf.mxu0
      %v1708 = vpop.f32.mrf.mxu0
      %v1709 = vadd.f32 %v1654, %v1708
      %v1710 = vpop.f32.mrf.mxu0
      %1711 = vdwg.mxu0
      %v1712 = vpack.c.bf16 %v1709, %v1706
      %1714 = vrot.lane.b32.xlu0 %v1712, 96
      %v1715 = vpop.permute.xlu0 %1714
      %v1717 = vsel %vm789, %v1712, 0
      %v1720 = vsel %vm789, %v1715, 0
      %1722 = vmatprep.subr.bf16.mxu0 0
      %1723 = vmatpush1.bf16.xpose.msra.mxu0 0
      %1724 = vmatprep.subr.bf16.mxu0 0
      %1725 = vmatpush1.bf16.xpose.msra.mxu0 0
      %1726 = vmatprep.subr.bf16.mxu0 0
      %1727 = vmatpush1.bf16.xpose.msra.mxu0 0
      %1728 = vmatprep.subr.bf16.mxu0 0
      %1729 = vmatpush1.bf16.xpose.msra.mxu0 0
      %1730 = vmatprep.subr.bf16.mxu0 0
      %1731 = vmatpush1.bf16.xpose.msra.mxu0 0
      %1732 = vmatprep.subr.bf16.mxu0 0
      %1733 = vmatpush1.bf16.xpose.msra.mxu0 0
      %1734 = vmatprep.subr.bf16.mxu0 0
      %1735 = vmatpush1.bf16.xpose.msra.mxu0 0
      %1736 = vmatprep.subr.bf16.mxu0 0
      %1737 = vmatpush1.bf16.xpose.msra.mxu0 %v1720
      %1738 = vmatprep.subr.bf16.mxu0 0
      %1739 = vmatpush2.bf16.xpose.msra.mxu0 0
      %1740 = vmatprep.subr.bf16.mxu0 0
      %1741 = vmatpush2.bf16.xpose.msra.mxu0 0
      %1742 = vmatprep.subr.bf16.mxu0 0
      %1743 = vmatpush2.bf16.xpose.msra.mxu0 0
      %1744 = vmatprep.subr.bf16.mxu0 0
      %1745 = vmatpush2.bf16.xpose.msra.mxu0 0
      %1746 = vmatprep.subr.bf16.mxu0 0
      %1747 = vmatpush2.bf16.xpose.msra.mxu0 0
      %1748 = vmatprep.subr.bf16.mxu0 0
      %1749 = vmatpush2.bf16.xpose.msra.mxu0 0
      %1750 = vmatprep.subr.bf16.mxu0 0
      %1751 = vmatpush2.bf16.xpose.msra.mxu0 0
      %1752 = vmatprep.subr.bf16.mxu0 0
      %1753 = vmatpush2.bf16.xpose.msra.mxu0 0
      %1754 = vmatprep.mubr.bf16.mxu0 0
      %1755 = vmatmul.mubr.bf16.gmra.mxu0 %v1717
      %v1756 = vpop.f32.mrf.mxu0
      %v1757 = vadd.f32 0.0, %v1756
      %v1758 = vpop.f32.mrf.mxu0
      %v1759 = vpop.f32.mrf.mxu0
      %v1760 = vadd.f32 0.0, %v1759
      %v1761 = vpop.f32.mrf.mxu0
      %1762 = vdwg.mxu0
      %v1763 = vmul.f32 %v1757, 0.35355338
      %v1764 = vmul.f32 %v1760, 0.35355338
      %v1765 = vsel %vm839, %v1763, -inf
      %1766 = vmax.xlane.f32.xlu0 %v1765
      %v1767 = vpop.xlane.xlu0 %1766
      %v1768 = vsel %vm839, %v1764, -inf
      %1769 = vmax.xlane.f32.xlu0 %v1768
      %v1770 = vpop.xlane.xlu0 %1769
      %v1771 = vsub.f32 %v1763, %v1767
      %v1772 = vsub.f32 %v1764, %v1770
      %v1773 = vmul.f32 %v1771, 1.442695
      %v1774 = vpow.pop %v1773
      %v1775 = vmul.f32 %v1772, 1.442695
      %v1776 = vpow.pop %v1775
      %v1777 = vsel %vm839, %v1774, 0.0
      %1778 = vadd.xlane.f32.xlu0 %v1777
      %v1779 = vpop.xlane.xlu0 %1778
      %v1780 = vsel %vm839, %v1776, 0.0
      %1781 = vadd.xlane.f32.xlu0 %v1780
      %v1782 = vpop.xlane.xlu0 %1781
      %v1783 = vrcp.pop %v1779
      %v1784 = vrcp.pop %v1782
      %v1785 = vmul.f32 %v1774, %v1783
      %v1786 = vmul.f32 %v1776, %v1784
      %v1787 = vpack.c.bf16 %v1786, %v1785
      %1788 = vrot.lane.b32.xlu0 %v1712, 64
      %v1789 = vpop.permute.xlu0 %1788
      %v1792 = vsel %vm839, %v1787, 0
      %1794 = vmatprep.subr.bf16.mxu0 0
      %1795 = vmatpush1.bf16.msra.mxu0 0
      %1796 = vmatprep.subr.bf16.mxu0 0
      %1797 = vmatpush1.bf16.msra.mxu0 0
      %1798 = vmatprep.subr.bf16.mxu0 0
      %1799 = vmatpush1.bf16.msra.mxu0 0
      %1800 = vmatprep.subr.bf16.mxu0 0
      %1801 = vmatpush1.bf16.msra.mxu0 0
      %1802 = vmatprep.subr.bf16.mxu0 0
      %1803 = vmatpush1.bf16.msra.mxu0 0
      %1804 = vmatprep.subr.bf16.mxu0 0
      %1805 = vmatpush1.bf16.msra.mxu0 0
      %1806 = vmatprep.subr.bf16.mxu0 0
      %1807 = vmatpush1.bf16.msra.mxu0 0
      %1808 = vmatprep.subr.bf16.mxu0 0
      %1809 = vmatpush1.bf16.msra.mxu0 %v1789
      %1810 = vmatprep.subr.bf16.mxu0 0
      %1811 = vmatpush2.bf16.msra.mxu0 0
      %1812 = vmatprep.subr.bf16.mxu0 0
      %1813 = vmatpush2.bf16.msra.mxu0 0
      %1814 = vmatprep.subr.bf16.mxu0 0
      %1815 = vmatpush2.bf16.msra.mxu0 0
      %1816 = vmatprep.subr.bf16.mxu0 0
      %1817 = vmatpush2.bf16.msra.mxu0 0
      %1818 = vmatprep.subr.bf16.mxu0 0
      %1819 = vmatpush2.bf16.msra.mxu0 0
      %1820 = vmatprep.subr.bf16.mxu0 0
      %1821 = vmatpush2.bf16.msra.mxu0 0
      %1822 = vmatprep.subr.bf16.mxu0 0
      %1823 = vmatpush2.bf16.msra.mxu0 0
      %1824 = vmatprep.subr.bf16.mxu0 0
      %1825 = vmatpush2.bf16.msra.mxu0 0
      %1826 = vmatprep.mubr.bf16.mxu0 0
      %1827 = vmatmul.mubr.bf16.gmra.mxu0 %v1792
      %v1828 = vpop.f32.mrf.mxu0
      %v1829 = vadd.f32 0.0, %v1828
      %v1830 = vpop.f32.mrf.mxu0
      %v1831 = vpop.f32.mrf.mxu0
      %v1832 = vadd.f32 0.0, %v1831
      %v1833 = vpop.f32.mrf.mxu0
      %1834 = vdwg.mxu0
      %1835 = vrot.lane.b32.xlu0 %v1712, 120
      %v1836 = vpop.permute.xlu0 %1835
      %1837 = vrot.lane.b32.xlu0 %v1712, 88
      %v1838 = vpop.permute.xlu0 %1837
      %v1840 = vsel %vm789, %v1836, 0
      %v1843 = vsel %vm789, %v1838, 0
      %1845 = vmatprep.subr.bf16.mxu0 0
      %1846 = vmatpush1.bf16.xpose.msra.mxu0 0
      %1847 = vmatprep.subr.bf16.mxu0 0
      %1848 = vmatpush1.bf16.xpose.msra.mxu0 0
      %1849 = vmatprep.subr.bf16.mxu0 0
      %1850 = vmatpush1.bf16.xpose.msra.mxu0 0
      %1851 = vmatprep.subr.bf16.mxu0 0
      %1852 = vmatpush1.bf16.xpose.msra.mxu0 0
      %1853 = vmatprep.subr.bf16.mxu0 0
      %1854 = vmatpush1.bf16.xpose.msra.mxu0 0
      %1855 = vmatprep.subr.bf16.mxu0 0
      %1856 = vmatpush1.bf16.xpose.msra.mxu0 0
      %1857 = vmatprep.subr.bf16.mxu0 0
      %1858 = vmatpush1.bf16.xpose.msra.mxu0 0
      %1859 = vmatprep.subr.bf16.mxu0 0
      %1860 = vmatpush1.bf16.xpose.msra.mxu0 %v1843
      %1861 = vmatprep.subr.bf16.mxu0 0
      %1862 = vmatpush2.bf16.xpose.msra.mxu0 0
      %1863 = vmatprep.subr.bf16.mxu0 0
      %1864 = vmatpush2.bf16.xpose.msra.mxu0 0
      %1865 = vmatprep.subr.bf16.mxu0 0
      %1866 = vmatpush2.bf16.xpose.msra.mxu0 0
      %1867 = vmatprep.subr.bf16.mxu0 0
      %1868 = vmatpush2.bf16.xpose.msra.mxu0 0
      %1869 = vmatprep.subr.bf16.mxu0 0
      %1870 = vmatpush2.bf16.xpose.msra.mxu0 0
      %1871 = vmatprep.subr.bf16.mxu0 0
      %1872 = vmatpush2.bf16.xpose.msra.mxu0 0
      %1873 = vmatprep.subr.bf16.mxu0 0
      %1874 = vmatpush2.bf16.xpose.msra.mxu0 0
      %1875 = vmatprep.subr.bf16.mxu0 0
      %1876 = vmatpush2.bf16.xpose.msra.mxu0 0
      %1877 = vmatprep.mubr.bf16.mxu0 0
      %1878 = vmatmul.mubr.bf16.gmra.mxu0 %v1840
      %v1879 = vpop.f32.mrf.mxu0
      %v1880 = vadd.f32 0.0, %v1879
      %v1881 = vpop.f32.mrf.mxu0
      %v1882 = vpop.f32.mrf.mxu0
      %v1883 = vadd.f32 0.0, %v1882
      %v1884 = vpop.f32.mrf.mxu0
      %1885 = vdwg.mxu0
      %v1886 = vmul.f32 %v1880, 0.35355338
      %v1887 = vmul.f32 %v1883, 0.35355338
      %v1888 = vsel %vm839, %v1886, -inf
      %1889 = vmax.xlane.f32.xlu0 %v1888
      %v1890 = vpop.xlane.xlu0 %1889
      %v1891 = vsel %vm839, %v1887, -inf
      %1892 = vmax.xlane.f32.xlu0 %v1891
      %v1893 = vpop.xlane.xlu0 %1892
      %v1894 = vsub.f32 %v1886, %v1890
      %v1895 = vsub.f32 %v1887, %v1893
      %v1896 = vmul.f32 %v1894, 1.442695
      %v1897 = vpow.pop %v1896
      %v1898 = vmul.f32 %v1895, 1.442695
      %v1899 = vpow.pop %v1898
      %v1900 = vsel %vm839, %v1897, 0.0
      %1901 = vadd.xlane.f32.xlu0 %v1900
      %v1902 = vpop.xlane.xlu0 %1901
      %v1903 = vsel %vm839, %v1899, 0.0
      %1904 = vadd.xlane.f32.xlu0 %v1903
      %v1905 = vpop.xlane.xlu0 %1904
      %v1906 = vrcp.pop %v1902
      %v1907 = vrcp.pop %v1905
      %v1908 = vmul.f32 %v1897, %v1906
      %v1909 = vmul.f32 %v1899, %v1907
      %v1910 = vpack.c.bf16 %v1909, %v1908
      %1911 = vrot.lane.b32.xlu0 %v1712, 56
      %v1912 = vpop.permute.xlu0 %1911
      %v1915 = vsel %vm839, %v1910, 0
      %1917 = vmatprep.subr.bf16.mxu0 0
      %1918 = vmatpush1.bf16.msra.mxu0 0
      %1919 = vmatprep.subr.bf16.mxu0 0
      %1920 = vmatpush1.bf16.msra.mxu0 0
      %1921 = vmatprep.subr.bf16.mxu0 0
      %1922 = vmatpush1.bf16.msra.mxu0 0
      %1923 = vmatprep.subr.bf16.mxu0 0
      %1924 = vmatpush1.bf16.msra.mxu0 0
      %1925 = vmatprep.subr.bf16.mxu0 0
      %1926 = vmatpush1.bf16.msra.mxu0 0
      %1927 = vmatprep.subr.bf16.mxu0 0
      %1928 = vmatpush1.bf16.msra.mxu0 0
      %1929 = vmatprep.subr.bf16.mxu0 0
      %1930 = vmatpush1.bf16.msra.mxu0 0
      %1931 = vmatprep.subr.bf16.mxu0 0
      %1932 = vmatpush1.bf16.msra.mxu0 %v1912
      %1933 = vmatprep.subr.bf16.mxu0 0
      %1934 = vmatpush2.bf16.msra.mxu0 0
      %1935 = vmatprep.subr.bf16.mxu0 0
      %1936 = vmatpush2.bf16.msra.mxu0 0
      %1937 = vmatprep.subr.bf16.mxu0 0
      %1938 = vmatpush2.bf16.msra.mxu0 0
      %1939 = vmatprep.subr.bf16.mxu0 0
      %1940 = vmatpush2.bf16.msra.mxu0 0
      %1941 = vmatprep.subr.bf16.mxu0 0
      %1942 = vmatpush2.bf16.msra.mxu0 0
      %1943 = vmatprep.subr.bf16.mxu0 0
      %1944 = vmatpush2.bf16.msra.mxu0 0
      %1945 = vmatprep.subr.bf16.mxu0 0
      %1946 = vmatpush2.bf16.msra.mxu0 0
      %1947 = vmatprep.subr.bf16.mxu0 0
      %1948 = vmatpush2.bf16.msra.mxu0 0
      %1949 = vmatprep.mubr.bf16.mxu0 0
      %1950 = vmatmul.mubr.bf16.gmra.mxu0 %v1915
      %v1951 = vpop.f32.mrf.mxu0
      %v1952 = vadd.f32 0.0, %v1951
      %v1953 = vpop.f32.mrf.mxu0
      %v1954 = vpop.f32.mrf.mxu0
      %v1955 = vadd.f32 0.0, %v1954
      %v1956 = vpop.f32.mrf.mxu0
      %1957 = vdwg.mxu0
      %1958 = vrot.lane.b32.xlu0 %v1712, 112
      %v1959 = vpop.permute.xlu0 %1958
      %1960 = vrot.lane.b32.xlu0 %v1712, 80
      %v1961 = vpop.permute.xlu0 %1960
      %v1963 = vsel %vm789, %v1959, 0
      %v1966 = vsel %vm789, %v1961, 0
      %1968 = vmatprep.subr.bf16.mxu0 0
      %1969 = vmatpush1.bf16.xpose.msra.mxu0 0
      %1970 = vmatprep.subr.bf16.mxu0 0
      %1971 = vmatpush1.bf16.xpose.msra.mxu0 0
      %1972 = vmatprep.subr.bf16.mxu0 0
      %1973 = vmatpush1.bf16.xpose.msra.mxu0 0
      %1974 = vmatprep.subr.bf16.mxu0 0
      %1975 = vmatpush1.bf16.xpose.msra.mxu0 0
      %1976 = vmatprep.subr.bf16.mxu0 0
      %1977 = vmatpush1.bf16.xpose.msra.mxu0 0
      %1978 = vmatprep.subr.bf16.mxu0 0
      %1979 = vmatpush1.bf16.xpose.msra.mxu0 0
      %1980 = vmatprep.subr.bf16.mxu0 0
      %1981 = vmatpush1.bf16.xpose.msra.mxu0 0
      %1982 = vmatprep.subr.bf16.mxu0 0
      %1983 = vmatpush1.bf16.xpose.msra.mxu0 %v1966
      %1984 = vmatprep.subr.bf16.mxu0 0
      %1985 = vmatpush2.bf16.xpose.msra.mxu0 0
      %1986 = vmatprep.subr.bf16.mxu0 0
      %1987 = vmatpush2.bf16.xpose.msra.mxu0 0
      %1988 = vmatprep.subr.bf16.mxu0 0
      %1989 = vmatpush2.bf16.xpose.msra.mxu0 0
      %1990 = vmatprep.subr.bf16.mxu0 0
      %1991 = vmatpush2.bf16.xpose.msra.mxu0 0
      %1992 = vmatprep.subr.bf16.mxu0 0
      %1993 = vmatpush2.bf16.xpose.msra.mxu0 0
      %1994 = vmatprep.subr.bf16.mxu0 0
      %1995 = vmatpush2.bf16.xpose.msra.mxu0 0
      %1996 = vmatprep.subr.bf16.mxu0 0
      %1997 = vmatpush2.bf16.xpose.msra.mxu0 0
      %1998 = vmatprep.subr.bf16.mxu0 0
      %1999 = vmatpush2.bf16.xpose.msra.mxu0 0
      %2000 = vmatprep.mubr.bf16.mxu0 0
      %2001 = vmatmul.mubr.bf16.gmra.mxu0 %v1963
      %v2002 = vpop.f32.mrf.mxu0
      %v2003 = vadd.f32 0.0, %v2002
      %v2004 = vpop.f32.mrf.mxu0
      %v2005 = vpop.f32.mrf.mxu0
      %v2006 = vadd.f32 0.0, %v2005
      %v2007 = vpop.f32.mrf.mxu0
      %2008 = vdwg.mxu0
      %v2009 = vmul.f32 %v2003, 0.35355338
      %v2010 = vmul.f32 %v2006, 0.35355338
      %v2011 = vsel %vm839, %v2009, -inf
      %2012 = vmax.xlane.f32.xlu0 %v2011
      %v2013 = vpop.xlane.xlu0 %2012
      %v2014 = vsel %vm839, %v2010, -inf
      %2015 = vmax.xlane.f32.xlu0 %v2014
      %v2016 = vpop.xlane.xlu0 %2015
      %v2017 = vsub.f32 %v2009, %v2013
      %v2018 = vsub.f32 %v2010, %v2016
      %v2019 = vmul.f32 %v2017, 1.442695
      %v2020 = vpow.pop %v2019
      %v2021 = vmul.f32 %v2018, 1.442695
      %v2022 = vpow.pop %v2021
      %v2023 = vsel %vm839, %v2020, 0.0
      %2024 = vadd.xlane.f32.xlu0 %v2023
      %v2025 = vpop.xlane.xlu0 %2024
      %v2026 = vsel %vm839, %v2022, 0.0
      %2027 = vadd.xlane.f32.xlu0 %v2026
      %v2028 = vpop.xlane.xlu0 %2027
      %v2029 = vrcp.pop %v2025
      %v2030 = vrcp.pop %v2028
      %v2031 = vmul.f32 %v2020, %v2029
      %v2032 = vmul.f32 %v2022, %v2030
      %v2033 = vpack.c.bf16 %v2032, %v2031
      %2034 = vrot.lane.b32.xlu0 %v1712, 48
      %v2035 = vpop.permute.xlu0 %2034
      %v2038 = vsel %vm839, %v2033, 0
      %2040 = vmatprep.subr.bf16.mxu0 0
      %2041 = vmatpush1.bf16.msra.mxu0 0
      %2042 = vmatprep.subr.bf16.mxu0 0
      %2043 = vmatpush1.bf16.msra.mxu0 0
      %2044 = vmatprep.subr.bf16.mxu0 0
      %2045 = vmatpush1.bf16.msra.mxu0 0
      %2046 = vmatprep.subr.bf16.mxu0 0
      %2047 = vmatpush1.bf16.msra.mxu0 0
      %2048 = vmatprep.subr.bf16.mxu0 0
      %2049 = vmatpush1.bf16.msra.mxu0 0
      %2050 = vmatprep.subr.bf16.mxu0 0
      %2051 = vmatpush1.bf16.msra.mxu0 0
      %2052 = vmatprep.subr.bf16.mxu0 0
      %2053 = vmatpush1.bf16.msra.mxu0 0
      %2054 = vmatprep.subr.bf16.mxu0 0
      %2055 = vmatpush1.bf16.msra.mxu0 %v2035
      %2056 = vmatprep.subr.bf16.mxu0 0
      %2057 = vmatpush2.bf16.msra.mxu0 0
      %2058 = vmatprep.subr.bf16.mxu0 0
      %2059 = vmatpush2.bf16.msra.mxu0 0
      %2060 = vmatprep.subr.bf16.mxu0 0
      %2061 = vmatpush2.bf16.msra.mxu0 0
      %2062 = vmatprep.subr.bf16.mxu0 0
      %2063 = vmatpush2.bf16.msra.mxu0 0
      %2064 = vmatprep.subr.bf16.mxu0 0
      %2065 = vmatpush2.bf16.msra.mxu0 0
      %2066 = vmatprep.subr.bf16.mxu0 0
      %2067 = vmatpush2.bf16.msra.mxu0 0
      %2068 = vmatprep.subr.bf16.mxu0 0
      %2069 = vmatpush2.bf16.msra.mxu0 0
      %2070 = vmatprep.subr.bf16.mxu0 0
      %2071 = vmatpush2.bf16.msra.mxu0 0
      %2072 = vmatprep.mubr.bf16.mxu0 0
      %2073 = vmatmul.mubr.bf16.gmra.mxu0 %v2038
      %v2074 = vpop.f32.mrf.mxu0
      %v2075 = vadd.f32 0.0, %v2074
      %v2076 = vpop.f32.mrf.mxu0
      %v2077 = vpop.f32.mrf.mxu0
      %v2078 = vadd.f32 0.0, %v2077
      %v2079 = vpop.f32.mrf.mxu0
      %2080 = vdwg.mxu0
      %2081 = vrot.lane.b32.xlu0 %v1712, 104
      %v2082 = vpop.permute.xlu0 %2081
      %2083 = vrot.lane.b32.xlu0 %v1712, 72
      %v2084 = vpop.permute.xlu0 %2083
      %v2086 = vsel %vm789, %v2082, 0
      %v2089 = vsel %vm789, %v2084, 0
      %2091 = vmatprep.subr.bf16.mxu0 0
      %2092 = vmatpush1.bf16.xpose.msra.mxu0 0
      %2093 = vmatprep.subr.bf16.mxu0 0
      %2094 = vmatpush1.bf16.xpose.msra.mxu0 0
      %2095 = vmatprep.subr.bf16.mxu0 0
      %2096 = vmatpush1.bf16.xpose.msra.mxu0 0
      %2097 = vmatprep.subr.bf16.mxu0 0
      %2098 = vmatpush1.bf16.xpose.msra.mxu0 0
      %2099 = vmatprep.subr.bf16.mxu0 0
      %2100 = vmatpush1.bf16.xpose.msra.mxu0 0
      %2101 = vmatprep.subr.bf16.mxu0 0
      %2102 = vmatpush1.bf16.xpose.msra.mxu0 0
      %2103 = vmatprep.subr.bf16.mxu0 0
      %2104 = vmatpush1.bf16.xpose.msra.mxu0 0
      %2105 = vmatprep.subr.bf16.mxu0 0
      %2106 = vmatpush1.bf16.xpose.msra.mxu0 %v2089
      %2107 = vmatprep.subr.bf16.mxu0 0
      %2108 = vmatpush2.bf16.xpose.msra.mxu0 0
      %2109 = vmatprep.subr.bf16.mxu0 0
      %2110 = vmatpush2.bf16.xpose.msra.mxu0 0
      %2111 = vmatprep.subr.bf16.mxu0 0
      %2112 = vmatpush2.bf16.xpose.msra.mxu0 0
      %2113 = vmatprep.subr.bf16.mxu0 0
      %2114 = vmatpush2.bf16.xpose.msra.mxu0 0
      %2115 = vmatprep.subr.bf16.mxu0 0
      %2116 = vmatpush2.bf16.xpose.msra.mxu0 0
      %2117 = vmatprep.subr.bf16.mxu0 0
      %2118 = vmatpush2.bf16.xpose.msra.mxu0 0
      %2119 = vmatprep.subr.bf16.mxu0 0
      %2120 = vmatpush2.bf16.xpose.msra.mxu0 0
      %2121 = vmatprep.subr.bf16.mxu0 0
      %2122 = vmatpush2.bf16.xpose.msra.mxu0 0
      %2123 = vmatprep.mubr.bf16.mxu0 0
      %2124 = vmatmul.mubr.bf16.gmra.mxu0 %v2086
      %v2125 = vpop.f32.mrf.mxu0
      %v2126 = vadd.f32 0.0, %v2125
      %v2127 = vpop.f32.mrf.mxu0
      %v2128 = vpop.f32.mrf.mxu0
      %v2129 = vadd.f32 0.0, %v2128
      %v2130 = vpop.f32.mrf.mxu0
      %2131 = vdwg.mxu0
      %v2132 = vmul.f32 %v2126, 0.35355338
      %v2133 = vmul.f32 %v2129, 0.35355338
      %v2134 = vsel %vm839, %v2132, -inf
      %2135 = vmax.xlane.f32.xlu0 %v2134
      %v2136 = vpop.xlane.xlu0 %2135
      %v2137 = vsel %vm839, %v2133, -inf
      %2138 = vmax.xlane.f32.xlu0 %v2137
      %v2139 = vpop.xlane.xlu0 %2138
      %v2140 = vsub.f32 %v2132, %v2136
      %v2141 = vsub.f32 %v2133, %v2139
      %v2142 = vmul.f32 %v2140, 1.442695
      %v2143 = vpow.pop %v2142
      %v2144 = vmul.f32 %v2141, 1.442695
      %v2145 = vpow.pop %v2144
      %v2146 = vsel %vm839, %v2143, 0.0
      %2147 = vadd.xlane.f32.xlu0 %v2146
      %v2148 = vpop.xlane.xlu0 %2147
      %v2149 = vsel %vm839, %v2145, 0.0
      %2150 = vadd.xlane.f32.xlu0 %v2149
      %v2151 = vpop.xlane.xlu0 %2150
      %v2152 = vrcp.pop %v2148
      %v2153 = vrcp.pop %v2151
      %v2154 = vmul.f32 %v2143, %v2152
      %v2155 = vmul.f32 %v2145, %v2153
      %v2156 = vpack.c.bf16 %v2155, %v2154
      %2157 = vrot.lane.b32.xlu0 %v1712, 40
      %v2158 = vpop.permute.xlu0 %2157
      %v2161 = vsel %vm839, %v2156, 0
      %2163 = vmatprep.subr.bf16.mxu0 0
      %2164 = vmatpush1.bf16.msra.mxu0 0
      %2165 = vmatprep.subr.bf16.mxu0 0
      %2166 = vmatpush1.bf16.msra.mxu0 0
      %2167 = vmatprep.subr.bf16.mxu0 0
      %2168 = vmatpush1.bf16.msra.mxu0 0
      %2169 = vmatprep.subr.bf16.mxu0 0
      %2170 = vmatpush1.bf16.msra.mxu0 0
      %2171 = vmatprep.subr.bf16.mxu0 0
      %2172 = vmatpush1.bf16.msra.mxu0 0
      %2173 = vmatprep.subr.bf16.mxu0 0
      %2174 = vmatpush1.bf16.msra.mxu0 0
      %2175 = vmatprep.subr.bf16.mxu0 0
      %2176 = vmatpush1.bf16.msra.mxu0 0
      %2177 = vmatprep.subr.bf16.mxu0 0
      %2178 = vmatpush1.bf16.msra.mxu0 %v2158
      %2179 = vmatprep.subr.bf16.mxu0 0
      %2180 = vmatpush2.bf16.msra.mxu0 0
      %2181 = vmatprep.subr.bf16.mxu0 0
      %2182 = vmatpush2.bf16.msra.mxu0 0
      %2183 = vmatprep.subr.bf16.mxu0 0
      %2184 = vmatpush2.bf16.msra.mxu0 0
      %2185 = vmatprep.subr.bf16.mxu0 0
      %2186 = vmatpush2.bf16.msra.mxu0 0
      %2187 = vmatprep.subr.bf16.mxu0 0
      %2188 = vmatpush2.bf16.msra.mxu0 0
      %2189 = vmatprep.subr.bf16.mxu0 0
      %2190 = vmatpush2.bf16.msra.mxu0 0
      %2191 = vmatprep.subr.bf16.mxu0 0
      %2192 = vmatpush2.bf16.msra.mxu0 0
      %2193 = vmatprep.subr.bf16.mxu0 0
      %2194 = vmatpush2.bf16.msra.mxu0 0
      %2195 = vmatprep.mubr.bf16.mxu0 0
      %2196 = vmatmul.mubr.bf16.gmra.mxu0 %v2161
      %v2197 = vpop.f32.mrf.mxu0
      %v2198 = vadd.f32 0.0, %v2197
      %v2199 = vpop.f32.mrf.mxu0
      %v2200 = vpop.f32.mrf.mxu0
      %v2201 = vadd.f32 0.0, %v2200
      %v2202 = vpop.f32.mrf.mxu0
      %2203 = vdwg.mxu0
      %2206 = vrot.lane.b32.xlu0 %v1952, 8
      %v2207 = vpop.permute.xlu0 %2206
      %2208 = vrot.lane.b32.xlu0 %v1955, 8
      %v2209 = vpop.permute.xlu0 %2208
      %2214 = vrot.lane.b32.xlu0 %v2075, 16
      %v2215 = vpop.permute.xlu0 %2214
      %2216 = vrot.lane.b32.xlu0 %v2078, 16
      %v2217 = vpop.permute.xlu0 %2216
      %2222 = vrot.lane.b32.xlu0 %v2198, 24
      %v2223 = vpop.permute.xlu0 %2222
      %2224 = vrot.lane.b32.xlu0 %v2201, 24
      %v2225 = vpop.permute.xlu0 %2224
      %v2228 = vsel %vm789, %v1829, %v2207
      %v2229 = vsel %vm789, %v1832, %v2209
      %v2230 = vsel %vm839, %v2228, %v2215
      %v2231 = vsel %vm839, %v2229, %v2217
      %v2232 = vsel %vm1307, %v2230, %v2223
      %v2233 = vsel %vm1307, %v2231, %v2225
      %s2234 = scalar_lea.vmem %s8, 16
      %v2235 = vld [vmem:[%s2234] sm:$0xf]
      %v2236 = vld [vmem:[%s2234 + $0x4] sm:$0xf]
      %v2237 = vld [vmem:[%s2234 + $0x8] sm:$0xf]
      %v2238 = vld [vmem:[%s2234 + $0xc] sm:$0xf]
      %v2239 = vpack.c.bf16 %v2233, %v2232
      %s2240 = scalar_lea.vmem %s9, 1
      %v2241 = vld [vmem:[%s2240] sm:$0x1]
      %v2243 = vlaneseq
      %v2244 = vshrl.u32 %v2243, 7
      %v2245 = vsub.s32 0, %v2244
      %v2246 = vrot.slane %v2241, %v2245
      %v2252 = vunpack.c.l.b16 %v2235
      %v2253 = vunpack.c.l.b16 %v2236
      %v2254 = vunpack.c.l.b16 %v2237
      %v2255 = vunpack.c.l.b16 %v2238
      %v2256 = vpack.c.b16 %v2253, %v2252
      %v2257 = vpack.c.b16 %v2255, %v2254
      %v2261 = vsel %vm673, %v2239, 0
      %2263 = vmatprep.subr.bf16.mxu0 0
      %2264 = vmatpush1.bf16.msra.mxu0 0
      %2265 = vmatprep.subr.bf16.mxu0 0
      %2266 = vmatpush1.bf16.msra.mxu0 0
      %2267 = vmatprep.subr.bf16.mxu0 0
      %2268 = vmatpush1.bf16.msra.mxu0 0
      %2269 = vmatprep.subr.bf16.mxu0 0
      %2270 = vmatpush1.bf16.msra.mxu0 0
      %2271 = vmatprep.subr.bf16.mxu0 0
      %2272 = vmatpush1.bf16.msra.mxu0 0
      %2273 = vmatprep.subr.bf16.mxu0 0
      %2274 = vmatpush1.bf16.msra.mxu0 0
      %2275 = vmatprep.subr.bf16.mxu0 0
      %2276 = vmatpush1.bf16.msra.mxu0 %v2257
      %2277 = vmatprep.subr.bf16.mxu0 0
      %2278 = vmatpush1.bf16.msra.mxu0 %v2256
      %2279 = vmatprep.subr.bf16.mxu0 0
      %2280 = vmatpush2.bf16.msra.mxu0 0
      %2281 = vmatprep.subr.bf16.mxu0 0
      %2282 = vmatpush2.bf16.msra.mxu0 0
      %2283 = vmatprep.subr.bf16.mxu0 0
      %2284 = vmatpush2.bf16.msra.mxu0 0
      %2285 = vmatprep.subr.bf16.mxu0 0
      %2286 = vmatpush2.bf16.msra.mxu0 0
      %2287 = vmatprep.subr.bf16.mxu0 0
      %2288 = vmatpush2.bf16.msra.mxu0 0
      %2289 = vmatprep.subr.bf16.mxu0 0
      %2290 = vmatpush2.bf16.msra.mxu0 0
      %2291 = vmatprep.subr.bf16.mxu0 0
      %2292 = vmatpush2.bf16.msra.mxu0 0
      %2293 = vmatprep.subr.bf16.mxu0 0
      %2294 = vmatpush2.bf16.msra.mxu0 0
      %2295 = vmatprep.mubr.bf16.mxu0 0
      %2296 = vmatmul.mubr.bf16.gmra.mxu0 %v2261
      %v2297 = vpop.f32.mrf.mxu0
      %v2298 = vadd.f32 %v2246, %v2297
      %v2299 = vpop.f32.mrf.mxu0
      %v2300 = vpop.f32.mrf.mxu0
      %v2301 = vadd.f32 %v2246, %v2300
      %v2302 = vpop.f32.mrf.mxu0
      %2303 = vdwg.mxu0
      %v2304 = vadd.f32 %v1594, %v2298
      %v2305 = vadd.f32 %v1595, %v2301
      %s2306 = scalar_lea.vmem %s10, 1
      %v2307 = vld [vmem:[%s2306] sm:$0x1]
      %s2308 = scalar_lea.vmem %s11, 1
      %v2309 = vld [vmem:[%s2308] sm:$0x1]
      %v2310 = vsel %vm673, %v2304, 0.0
      %2311 = vadd.xlane.f32.xlu0 %v2310
      %v2312 = vpop.xlane.xlu0 %2311
      %v2313 = vsel %vm673, %v2305, 0.0
      %2314 = vadd.xlane.f32.xlu0 %v2313
      %v2315 = vpop.xlane.xlu0 %2314
      %v2316 = vmul.f32 %v2312, %v680
      %v2317 = vmul.f32 %v2315, %v680
      %v2318 = vsub.f32 %v2304, %v2316
      %v2319 = vsub.f32 %v2305, %v2317
      %v2320 = vmul.f32 %v2318, %v2318
      %v2321 = vmul.f32 %v2319, %v2319
      %v2322 = vsel %vm673, %v2320, 0.0
      %2323 = vadd.xlane.f32.xlu0 %v2322
      %v2324 = vpop.xlane.xlu0 %2323
      %v2325 = vsel %vm673, %v2321, 0.0
      %2326 = vadd.xlane.f32.xlu0 %v2325
      %v2327 = vpop.xlane.xlu0 %2326
      %v2328 = vmul.f32 %v2324, %v680
      %v2329 = vmul.f32 %v2327, %v680
      %v2330 = vadd.f32 %v2328, 1e-05
      %v2331 = vadd.f32 %v2329, 1e-05
      %v2332 = vrsqrt.pop %v2330
      %v2333 = vrsqrt.pop %v2331
      %v2334 = vmul.f32 %v2318, %v2332
      %v2335 = vmul.f32 %v2319, %v2333
      %v2337 = vlaneseq
      %v2338 = vshrl.u32 %v2337, 7
      %v2339 = vsub.s32 0, %v2338
      %v2340 = vrot.slane %v2307, %v2339
      %v2342 = vmul.f32 %v2334, %v2340
      %v2343 = vmul.f32 %v2335, %v2340
      %v2345 = vlaneseq
      %v2346 = vshrl.u32 %v2345, 7
      %v2347 = vsub.s32 0, %v2346
      %v2348 = vrot.slane %v2309, %v2347
      %v2350 = vadd.f32 %v2342, %v2348
      %v2351 = vadd.f32 %v2343, %v2348
      %s2352 = scalar_lea.vmem %s12, 16
      %v2353 = vld [vmem:[%s2352] sm:$0xf]
      %v2354 = vld [vmem:[%s2352 + $0x4] sm:$0xf]
      %v2355 = vld [vmem:[%s2352 + $0x8] sm:$0xf]
      %v2356 = vld [vmem:[%s2352 + $0xc] sm:$0xf]
      %v2357 = vpack.c.bf16 %v2351, %v2350
      %s2358 = scalar_lea.vmem %s13, 1
      %v2359 = vld [vmem:[%s2358] sm:$0x1]
      %v2361 = vlaneseq
      %v2362 = vshrl.u32 %v2361, 7
      %v2363 = vsub.s32 0, %v2362
      %v2364 = vrot.slane %v2359, %v2363
      %v2370 = vunpack.c.l.b16 %v2353
      %v2371 = vunpack.c.l.b16 %v2354
      %v2372 = vunpack.c.l.b16 %v2355
      %v2373 = vunpack.c.l.b16 %v2356
      %v2374 = vpack.c.b16 %v2371, %v2370
      %v2375 = vpack.c.b16 %v2373, %v2372
      %v2379 = vsel %vm673, %v2357, 0
      %2381 = vmatprep.subr.bf16.mxu0 0
      %2382 = vmatpush1.bf16.msra.mxu0 0
      %2383 = vmatprep.subr.bf16.mxu0 0
      %2384 = vmatpush1.bf16.msra.mxu0 0
      %2385 = vmatprep.subr.bf16.mxu0 0
      %2386 = vmatpush1.bf16.msra.mxu0 0
      %2387 = vmatprep.subr.bf16.mxu0 0
      %2388 = vmatpush1.bf16.msra.mxu0 0
      %2389 = vmatprep.subr.bf16.mxu0 0
      %2390 = vmatpush1.bf16.msra.mxu0 0
      %2391 = vmatprep.subr.bf16.mxu0 0
      %2392 = vmatpush1.bf16.msra.mxu0 0
      %2393 = vmatprep.subr.bf16.mxu0 0
      %2394 = vmatpush1.bf16.msra.mxu0 %v2375
      %2395 = vmatprep.subr.bf16.mxu0 0
      %2396 = vmatpush1.bf16.msra.mxu0 %v2374
      %2397 = vmatprep.subr.bf16.mxu0 0
      %2398 = vmatpush2.bf16.msra.mxu0 0
      %2399 = vmatprep.subr.bf16.mxu0 0
      %2400 = vmatpush2.bf16.msra.mxu0 0
      %2401 = vmatprep.subr.bf16.mxu0 0
      %2402 = vmatpush2.bf16.msra.mxu0 0
      %2403 = vmatprep.subr.bf16.mxu0 0
      %2404 = vmatpush2.bf16.msra.mxu0 0
      %2405 = vmatprep.subr.bf16.mxu0 0
      %2406 = vmatpush2.bf16.msra.mxu0 0
      %2407 = vmatprep.subr.bf16.mxu0 0
      %2408 = vmatpush2.bf16.msra.mxu0 0
      %2409 = vmatprep.subr.bf16.mxu0 0
      %2410 = vmatpush2.bf16.msra.mxu0 0
      %2411 = vmatprep.subr.bf16.mxu0 0
      %2412 = vmatpush2.bf16.msra.mxu0 0
      %2413 = vmatprep.mubr.bf16.mxu0 0
      %2414 = vmatmul.mubr.bf16.gmra.mxu0 %v2379
      %v2415 = vpop.f32.mrf.mxu0
      %v2416 = vadd.f32 %v2364, %v2415
      %v2417 = vpop.f32.mrf.mxu0
      %v2418 = vpop.f32.mrf.mxu0
      %v2419 = vadd.f32 %v2364, %v2418
      %v2420 = vpop.f32.mrf.mxu0
      %2421 = vdwg.mxu0
      %v2422 = vmul.f32 %v2416, %v2416
      %v2423 = vmul.f32 %v2419, %v2419
      %v2424 = vmul.f32 %v2416, %v2422
      %v2425 = vmul.f32 %v2419, %v2423
      %v2426 = vmul.f32 %v2424, 0.044715
      %v2427 = vmul.f32 %v2425, 0.044715
      %v2428 = vadd.f32 %v2416, %v2426
      %v2429 = vadd.f32 %v2419, %v2427
      %v2430 = vmul.f32 %v2428, 0.7978846
      %v2431 = vmul.f32 %v2429, 0.7978846
      %v2432 = vtanh.pop %v2430
      %v2433 = vtanh.pop %v2431
      %v2434 = vadd.f32 %v2432, 1.0
      %v2435 = vadd.f32 %v2433, 1.0
      %v2436 = vmul.f32 %v2434, 0.5
      %v2437 = vmul.f32 %v2435, 0.5
      %v2438 = vmul.f32 %v2416, %v2436
      %v2439 = vmul.f32 %v2419, %v2437
      %s2440 = scalar_lea.vmem %s14, 32
      %v2441 = vld [vmem:[%s2440] sm:$0xf]
      %v2442 = vld [vmem:[%s2440 + $0x4] sm:$0xf]
      %v2443 = vld [vmem:[%s2440 + $0x8] sm:$0xf]
      %v2444 = vld [vmem:[%s2440 + $0xc] sm:$0xf]
      %v2445 = vld [vmem:[%s2440 + $0x10] sm:$0xf]
      %v2446 = vld [vmem:[%s2440 + $0x14] sm:$0xf]
      %v2447 = vld [vmem:[%s2440 + $0x18] sm:$0xf]
      %v2448 = vld [vmem:[%s2440 + $0x1c] sm:$0xf]
      %v2449 = vpack.c.bf16 %v2439, %v2438
      %s2450 = scalar_lea.vmem %s15, 1
      %v2451 = vld [vmem:[%s2450] sm:$0x1]
      %v2453 = vlaneseq
      %v2454 = vshrl.u32 %v2453, 7
      %v2455 = vsub.s32 0, %v2454
      %v2456 = vrot.slane %v2451, %v2455
      %v2466 = vunpack.c.l.b16 %v2441
      %v2467 = vunpack.c.l.b16 %v2442
      %v2468 = vunpack.c.l.b16 %v2443
      %v2469 = vunpack.c.l.b16 %v2444
      %v2470 = vunpack.c.l.b16 %v2445
      %v2471 = vunpack.c.l.b16 %v2446
      %v2472 = vunpack.c.l.b16 %v2447
      %v2473 = vunpack.c.l.b16 %v2448
      %v2474 = vpack.c.b16 %v2467, %v2466
      %v2475 = vpack.c.b16 %v2469, %v2468
      %v2476 = vpack.c.b16 %v2471, %v2470
      %v2477 = vpack.c.b16 %v2473, %v2472
      %v2483 = vsel %vm622, %v2449, 0
      %2485 = vmatprep.subr.bf16.mxu0 0
      %2486 = vmatpush1.bf16.msra.mxu0 0
      %2487 = vmatprep.subr.bf16.mxu0 0
      %2488 = vmatpush1.bf16.msra.mxu0 0
      %2489 = vmatprep.subr.bf16.mxu0 0
      %2490 = vmatpush1.bf16.msra.mxu0 0
      %2491 = vmatprep.subr.bf16.mxu0 0
      %2492 = vmatpush1.bf16.msra.mxu0 0
      %2493 = vmatprep.subr.bf16.mxu0 0
      %2494 = vmatpush1.bf16.msra.mxu0 %v2477
      %2495 = vmatprep.subr.bf16.mxu0 0
      %2496 = vmatpush1.bf16.msra.mxu0 %v2476
      %2497 = vmatprep.subr.bf16.mxu0 0
      %2498 = vmatpush1.bf16.msra.mxu0 %v2475
      %2499 = vmatprep.subr.bf16.mxu0 0
      %2500 = vmatpush1.bf16.msra.mxu0 %v2474
      %2501 = vmatprep.subr.bf16.mxu0 0
      %2502 = vmatpush2.bf16.msra.mxu0 0
      %2503 = vmatprep.subr.bf16.mxu0 0
      %2504 = vmatpush2.bf16.msra.mxu0 0
      %2505 = vmatprep.subr.bf16.mxu0 0
      %2506 = vmatpush2.bf16.msra.mxu0 0
      %2507 = vmatprep.subr.bf16.mxu0 0
      %2508 = vmatpush2.bf16.msra.mxu0 0
      %2509 = vmatprep.subr.bf16.mxu0 0
      %2510 = vmatpush2.bf16.msra.mxu0 0
      %2511 = vmatprep.subr.bf16.mxu0 0
      %2512 = vmatpush2.bf16.msra.mxu0 0
      %2513 = vmatprep.subr.bf16.mxu0 0
      %2514 = vmatpush2.bf16.msra.mxu0 0
      %2515 = vmatprep.subr.bf16.mxu0 0
      %2516 = vmatpush2.bf16.msra.mxu0 0
      %2517 = vmatprep.mubr.bf16.mxu0 0
      %2518 = vmatmul.mubr.bf16.gmra.mxu0 %v2483
      %v2519 = vpop.f32.mrf.mxu0
      %v2520 = vadd.f32 %v2456, %v2519
      %v2521 = vpop.f32.mrf.mxu0
      %v2522 = vpop.f32.mrf.mxu0
      %v2523 = vadd.f32 %v2456, %v2522
      %v2524 = vpop.f32.mrf.mxu0
      %2525 = vdwg.mxu0
      %v2526 = vadd.f32 %v2304, %v2520
      %v2527 = vadd.f32 %v2305, %v2523
      %v2528 = vld [vmem:[%s16] sm:$0xf]
      %v2529 = vld [vmem:[%s16 + $0x4] sm:$0xf]
      %v2530 = vld [vmem:[%s16 + $0x8] sm:$0xf]
      %v2531 = vld [vmem:[%s16 + $0xc] sm:$0xf]
      %v2532 = vpack.c.bf16 %v2527, %v2526
      %v2533 = vld [vmem:[%s17] sm:$0x1]
      %v2535 = vlaneseq
      %v2536 = vshrl.u32 %v2535, 7
      %v2537 = vsub.s32 0, %v2536
      %v2538 = vrot.slane %v2533, %v2537
      %v2544 = vunpack.c.l.b16 %v2528
      %v2545 = vunpack.c.l.b16 %v2529
      %v2546 = vunpack.c.l.b16 %v2530
      %v2547 = vunpack.c.l.b16 %v2531
      %v2548 = vpack.c.b16 %v2545, %v2544
      %v2549 = vpack.c.b16 %v2547, %v2546
      %v2553 = vsel %vm673, %v2532, 0
      %2555 = vmatprep.subr.bf16.mxu0 0
      %2556 = vmatpush1.bf16.msra.mxu0 0
      %2557 = vmatprep.subr.bf16.mxu0 0
      %2558 = vmatpush1.bf16.msra.mxu0 0
      %2559 = vmatprep.subr.bf16.mxu0 0
      %2560 = vmatpush1.bf16.msra.mxu0 0
      %2561 = vmatprep.subr.bf16.mxu0 0
      %2562 = vmatpush1.bf16.msra.mxu0 0
      %2563 = vmatprep.subr.bf16.mxu0 0
      %2564 = vmatpush1.bf16.msra.mxu0 0
      %2565 = vmatprep.subr.bf16.mxu0 0
      %2566 = vmatpush1.bf16.msra.mxu0 0
      %2567 = vmatprep.subr.bf16.mxu0 0
      %2568 = vmatpush1.bf16.msra.mxu0 %v2549
      %2569 = vmatprep.subr.bf16.mxu0 0
      %2570 = vmatpush1.bf16.msra.mxu0 %v2548
      %2571 = vmatprep.subr.bf16.mxu0 0
      %2572 = vmatpush2.bf16.msra.mxu0 0
      %2573 = vmatprep.subr.bf16.mxu0 0
      %2574 = vmatpush2.bf16.msra.mxu0 0
      %2575 = vmatprep.subr.bf16.mxu0 0
      %2576 = vmatpush2.bf16.msra.mxu0 0
      %2577 = vmatprep.subr.bf16.mxu0 0
      %2578 = vmatpush2.bf16.msra.mxu0 0
      %2579 = vmatprep.subr.bf16.mxu0 0
      %2580 = vmatpush2.bf16.msra.mxu0 0
      %2581 = vmatprep.subr.bf16.mxu0 0
      %2582 = vmatpush2.bf16.msra.mxu0 0
      %2583 = vmatprep.subr.bf16.mxu0 0
      %2584 = vmatpush2.bf16.msra.mxu0 0
      %2585 = vmatprep.subr.bf16.mxu0 0
      %2586 = vmatpush2.bf16.msra.mxu0 0
      %2587 = vmatprep.mubr.bf16.mxu0 0
      %2588 = vmatmul.mubr.bf16.gmra.mxu0 %v2553
      %v2589 = vpop.f32.mrf.mxu0
      %v2590 = vadd.f32 %v2538, %v2589
      %v2591 = vpop.f32.mrf.mxu0
      %v2592 = vpop.f32.mrf.mxu0
      %v2593 = vadd.f32 %v2538, %v2592
      %v2594 = vpop.f32.mrf.mxu0
      %2595 = vdwg.mxu0
      %2596 = vst.msk [vmem:[%s577] sm:$0xff] %vm622, %v2590
      %2597 = vst.msk [vmem:[%s577 + $0x8] sm:$0xff] %vm622, %v2593
      %s2598 = smul.u32 2, %s29
      %p2599 = scmp.lt.s32.totalorder %s2598, 3
      %s2600 = scalar_select %p2599, %s2598, 3
      %s2601 = smul.addr %s2600, 8
      %s2602 = scalar_lea.vmem %s18, %s2601
      // Predicated region
      $region93: #{dit_forward.1} parent=91 // pred_check
        %p2603 = pneg %p430
      $region94: #{dit_forward.1} parent=91 // pred_check_branch
        %2605 = sbr.rel (%p2603) target = $region96
      $region95: #{dit_forward.1} parent=91 // pred_region
        %s2606 = smul.u32 2, %s29
      $region96: #{dit_forward.1} parent=91 // pred_fallthru
        _
    $region92: #{dit_forward.1} parent=5 // pred_fallthru
      _
    %p2607 = scmp.le.s32.totalorder 2, %s24
    // Predicated region
    $region97: #{dit_forward.1} parent=5 // pred_check
      %p2608 = pneg %p2607
    $region98: #{dit_forward.1} parent=5 // pred_check_branch
      %2610 = sbr.rel (%p2608) target = $region100
    $region99: #{dit_forward.1} parent=5 // pred_region
      %s2611 = ssub.s32 %s24, 2
      // Predicated region
      $region101: #{dit_forward.1} parent=99 // pred_check
        %p2612 = pneg %p436
      $region102: #{dit_forward.1} parent=99 // pred_check_branch
        %2614 = sbr.rel (%p2612) target = $region104
      $region103: #{dit_forward.1} parent=99 // pred_region
        %s2615 = smul.u32 2, %s30
        %p2616 = scmp.lt.s32.totalorder %s2615, 3
        %s2617 = scalar_select %p2616, %s2615, 3
        %s2618 = smul.addr %s2617, 8
        %s2619 = scalar_lea.vmem %s18, %s2618
      $region104: #{dit_forward.1} parent=99 // pred_fallthru
        _
    $region100: #{dit_forward.1} parent=5 // pred_fallthru
      _
  $region6: #{dit_forward.1} parent=0 // loop_footer
    %s28 = sadd.s32 1, %s24
  $region7: #{dit_forward.1} parent=0 // loop_footer_branch
    %23 = sbr.rel target = $region3
  $region8: #{dit_forward.1} parent=0 // loop_exit
    _

</llo_original>
